<compile_context>
chip_gen: v7x
topology: tpu7x:2x2x1
jax: 0.10.0
libtpu: 0.0.40
codegen_flags: <defaults>
</compile_context>

<pallas_src>
import functools

import jax
import jax.numpy as jnp
from jax.experimental import pallas as pl
from jax.experimental.pallas import tpu as pltpu

LANE = 128  # lane-dense padding for the logits / fc weight


# -----------------------------------------------------------------------------
# Fused Pallas kernel: conv3x3(same) -> bias -> ReLU -> global pool -> linear
# -----------------------------------------------------------------------------
def classifier_kernel(x_ref, wc_ref, bc_ref, wf_ref, bf_ref, o_ref):
    # x_ref : (B, H+2, W+2, C_in) f32   zero-padded NHWC input
    # wc_ref: (9, C_in, C_out)    bf16  conv weight, tap-major (di*3 + dj)
    # bc_ref: (1, C_out)          f32   conv bias
    # wf_ref: (C_out, LANE)       bf16  fc weight^T, 1/(H*W) folded in, zero-padded
    # bf_ref: (1, LANE)           f32   fc bias, zero-padded
    # o_ref : (B, LANE)           f32   padded logits
    B, Hp, Wp, Cin = x_ref.shape
    H, W = Hp - 2, Wp - 2
    Cout = bc_ref.shape[1]
    n = B * H * W

    # Conv as 9 accumulated (B*H*W, C_in) x (C_in, C_out) MXU dots: in-kernel
    # im2col via static windows of the padded input, never materializing the
    # patch tensor in HBM or VMEM.
    acc = jnp.zeros((n, Cout), dtype=jnp.float32)
    for t in range(9):
        di, dj = t // 3, t % 3
        tap = x_ref[:, di:di + H, dj:dj + W, :].reshape(n, Cin)
        acc = acc + jnp.dot(tap.astype(jnp.bfloat16), wc_ref[t],
                            preferred_element_type=jnp.float32)

    act = jnp.maximum(acc + bc_ref[...], 0.0)              # bias + ReLU (f32)
    feat = jnp.sum(act.reshape(B, H * W, Cout), axis=1)    # global pool (sum);
                                                           # 1/(H*W) lives in wf
    logits = jnp.dot(feat.astype(jnp.bfloat16), wf_ref[...],
                     preferred_element_type=jnp.float32) + bf_ref[...]
    o_ref[...] = logits                                    # lane-dense (B, 128) store


def _vmem_spec():
    return pl.BlockSpec(memory_space=pltpu.MemorySpace.VMEM)


# -----------------------------------------------------------------------------
# Parameter preprocessing (run ONCE at init, not on the forward path)
# -----------------------------------------------------------------------------
def prepare_params(params, H, W):
    conv_w, conv_b = params["conv_w"], params["conv_b"]
    fc_w, fc_b = params["fc_w"], params["fc_b"]
    C_out, C_in, K, _ = conv_w.shape
    num_classes = fc_w.shape[0]
    assert K == 3 and num_classes <= LANE

    # (C_out, C_in, kH, kW) -> (kH*kW, C_in, C_out), tap-major, bf16 for the MXU.
    wc = jnp.transpose(conv_w, (2, 3, 1, 0)).reshape(K * K, C_in, C_out)
    wc = wc.astype(jnp.bfloat16)
    bc = conv_b.reshape(1, C_out).astype(jnp.float32)

    # fc weight^T with the global-average-pool scale folded in, zero-padded to a
    # lane-dense (C_out, 128) slab; fc bias padded to (1, 128).
    wf = fc_w.T.astype(jnp.float32) / float(H * W)
    wf = jnp.pad(wf, ((0, 0), (0, LANE - num_classes))).astype(jnp.bfloat16)
    bf = jnp.pad(fc_b.astype(jnp.float32), (0, LANE - num_classes)).reshape(1, LANE)
    return {"wc": wc, "bc": bc, "wf": wf, "bf": bf}


# -----------------------------------------------------------------------------
# Forward pass (single pallas_call)
# -----------------------------------------------------------------------------
@functools.partial(jax.jit, static_argnums=(2,))
def classifier_forward(x_nchw, prep, num_classes):
    B, C_in, H, W = x_nchw.shape
    x_nhwc = jnp.transpose(x_nchw, (0, 2, 3, 1)).astype(jnp.float32)
    x_pad = jnp.pad(x_nhwc, ((0, 0), (1, 1), (1, 1), (0, 0)))   # "same" padding

    logits_padded = pl.pallas_call(
        classifier_kernel,
        out_shape=jax.ShapeDtypeStruct((B, LANE), jnp.float32),
        in_specs=[_vmem_spec()] * 5,
        out_specs=_vmem_spec(),
    )(x_pad, prep["wc"], prep["bc"], prep["wf"], prep["bf"])
    return logits_padded[:, :num_classes]


# -----------------------------------------------------------------------------
# Pure-JAX reference (independent math path: lax conv with PyTorch semantics)
# -----------------------------------------------------------------------------
def classifier_reference(x_nchw, params):
    y = jax.lax.conv_general_dilated(
        x_nchw.astype(jnp.float32), params["conv_w"].astype(jnp.float32),
        window_strides=(1, 1), padding=((1, 1), (1, 1)),
        dimension_numbers=("NCHW", "OIHW", "NCHW"))
    y = jnp.maximum(y + params["conv_b"][None, :, None, None], 0.0)
    feat = jnp.mean(y, axis=(2, 3))
    return feat @ params["fc_w"].T + params["fc_b"][None, :]


# -----------------------------------------------------------------------------
# Main
# -----------------------------------------------------------------------------
if __name__ == "__main__":
    key = jax.random.PRNGKey(0)
    kx, kw1, kb1, kw2, kb2 = jax.random.split(key, 5)

    B, C_in, H, W = 2, 4, 16, 16
    C_out, num_classes, K = 32, 10, 3

    x = jax.random.normal(kx, (B, C_in, H, W), dtype=jnp.float32)
    params = {
        "conv_w": 0.1 * jax.random.normal(kw1, (C_out, C_in, K, K), jnp.float32),
        "conv_b": 0.1 * jax.random.normal(kb1, (C_out,), jnp.float32),
        "fc_w": 0.1 * jax.random.normal(kw2, (num_classes, C_out), jnp.float32),
        "fc_b": 0.1 * jax.random.normal(kb2, (num_classes,), jnp.float32),
    }

    prep = prepare_params(params, H, W)          # one-time, init-side work
    logits = classifier_forward(x, prep, num_classes)
    logits = jax.block_until_ready(logits)

    ref = classifier_reference(x, params)
    assert logits.shape == (B, num_classes)
    # bf16 matmul inputs with f32 accumulation -> looser tolerance than pure f32.
    assert jnp.allclose(logits, ref, atol=2e-2, rtol=2e-2), (
        float(jnp.max(jnp.abs(logits - ref))))

    print("KERNEL_OK")
</pallas_src>

<mosaic_0001>
module attributes {stable_mosaic.version = 11 : i64} {
  func.func @classifier_kernel(%arg0: memref<2x18x18x4xf32, #tpu.memory_space<vmem>>, %arg1: memref<9x4x32xbf16, #tpu.memory_space<vmem>>, %arg2: memref<1x32xf32, #tpu.memory_space<vmem>>, %arg3: memref<32x128xbf16, #tpu.memory_space<vmem>>, %arg4: memref<1x128xf32, #tpu.memory_space<vmem>>, %arg5: memref<2x128xf32, #tpu.memory_space<vmem>>) attributes {dimension_semantics = [], scalar_prefetch = 0 : i64, scratch_operands = 0 : i64, tpu.core_type = #tpu.core_type<tc>} {
    %cst = arith.constant 0.000000e+00 : f32
    %0 = vector.broadcast %cst : f32 to vector<512x32xf32>
    %c0 = arith.constant 0 : index
    %c0_0 = arith.constant 0 : index
    %c0_1 = arith.constant 0 : index
    %c0_2 = arith.constant 0 : index
    %1 = vector.load %arg0[%c0, %c0_0, %c0_1, %c0_2] : memref<2x18x18x4xf32, #tpu.memory_space<vmem>>, vector<2x16x16x4xf32>
    %2 = vector.shape_cast %1 : vector<2x16x16x4xf32> to vector<512x4xf32>
    %3 = arith.truncf %2 : vector<512x4xf32> to vector<512x4xbf16>
    %c0_3 = arith.constant 0 : index
    %c0_4 = arith.constant 0 : index
    %c0_5 = arith.constant 0 : index
    %4 = vector.load %arg1[%c0_3, %c0_4, %c0_5] : memref<9x4x32xbf16, #tpu.memory_space<vmem>>, vector<1x4x32xbf16>
    %5 = vector.shape_cast %4 : vector<1x4x32xbf16> to vector<4x32xbf16>
    %cst_6 = arith.constant dense<0.000000e+00> : vector<512x32xf32>
    %6 = tpu.matmul %3, %5, %cst_6 {dimension_numbers = #tpu.dot_dimension_numbers<[1], [0], [0], [1], [0, 0, 1, 1], [], []>} : vector<512x4xbf16>, vector<4x32xbf16>, vector<512x32xf32> -> vector<512x32xf32>
    %7 = arith.addf %0, %6 : vector<512x32xf32>
    %c0_7 = arith.constant 0 : index
    %c0_8 = arith.constant 0 : index
    %c1 = arith.constant 1 : index
    %c0_9 = arith.constant 0 : index
    %8 = vector.load %arg0[%c0_7, %c0_8, %c1, %c0_9] : memref<2x18x18x4xf32, #tpu.memory_space<vmem>>, vector<2x16x16x4xf32>
    %9 = vector.shape_cast %8 : vector<2x16x16x4xf32> to vector<512x4xf32>
    %10 = arith.truncf %9 : vector<512x4xf32> to vector<512x4xbf16>
    %c1_10 = arith.constant 1 : index
    %c0_11 = arith.constant 0 : index
    %c0_12 = arith.constant 0 : index
    %11 = vector.load %arg1[%c1_10, %c0_11, %c0_12] : memref<9x4x32xbf16, #tpu.memory_space<vmem>>, vector<1x4x32xbf16>
    %12 = vector.shape_cast %11 : vector<1x4x32xbf16> to vector<4x32xbf16>
    %cst_13 = arith.constant dense<0.000000e+00> : vector<512x32xf32>
    %13 = tpu.matmul %10, %12, %cst_13 {dimension_numbers = #tpu.dot_dimension_numbers<[1], [0], [0], [1], [0, 0, 1, 1], [], []>} : vector<512x4xbf16>, vector<4x32xbf16>, vector<512x32xf32> -> vector<512x32xf32>
    %14 = arith.addf %7, %13 : vector<512x32xf32>
    %c0_14 = arith.constant 0 : index
    %c0_15 = arith.constant 0 : index
    %c2 = arith.constant 2 : index
    %c0_16 = arith.constant 0 : index
    %15 = vector.load %arg0[%c0_14, %c0_15, %c2, %c0_16] : memref<2x18x18x4xf32, #tpu.memory_space<vmem>>, vector<2x16x16x4xf32>
    %16 = vector.shape_cast %15 : vector<2x16x16x4xf32> to vector<512x4xf32>
    %17 = arith.truncf %16 : vector<512x4xf32> to vector<512x4xbf16>
    %c2_17 = arith.constant 2 : index
    %c0_18 = arith.constant 0 : index
    %c0_19 = arith.constant 0 : index
    %18 = vector.load %arg1[%c2_17, %c0_18, %c0_19] : memref<9x4x32xbf16, #tpu.memory_space<vmem>>, vector<1x4x32xbf16>
    %19 = vector.shape_cast %18 : vector<1x4x32xbf16> to vector<4x32xbf16>
    %cst_20 = arith.constant dense<0.000000e+00> : vector<512x32xf32>
    %20 = tpu.matmul %17, %19, %cst_20 {dimension_numbers = #tpu.dot_dimension_numbers<[1], [0], [0], [1], [0, 0, 1, 1], [], []>} : vector<512x4xbf16>, vector<4x32xbf16>, vector<512x32xf32> -> vector<512x32xf32>
    %21 = arith.addf %14, %20 : vector<512x32xf32>
    %c0_21 = arith.constant 0 : index
    %c1_22 = arith.constant 1 : index
    %c0_23 = arith.constant 0 : index
    %c0_24 = arith.constant 0 : index
    %22 = vector.load %arg0[%c0_21, %c1_22, %c0_23, %c0_24] : memref<2x18x18x4xf32, #tpu.memory_space<vmem>>, vector<2x16x16x4xf32>
    %23 = vector.shape_cast %22 : vector<2x16x16x4xf32> to vector<512x4xf32>
    %24 = arith.truncf %23 : vector<512x4xf32> to vector<512x4xbf16>
    %c3 = arith.constant 3 : index
    %c0_25 = arith.constant 0 : index
    %c0_26 = arith.constant 0 : index
    %25 = vector.load %arg1[%c3, %c0_25, %c0_26] : memref<9x4x32xbf16, #tpu.memory_space<vmem>>, vector<1x4x32xbf16>
    %26 = vector.shape_cast %25 : vector<1x4x32xbf16> to vector<4x32xbf16>
    %cst_27 = arith.constant dense<0.000000e+00> : vector<512x32xf32>
    %27 = tpu.matmul %24, %26, %cst_27 {dimension_numbers = #tpu.dot_dimension_numbers<[1], [0], [0], [1], [0, 0, 1, 1], [], []>} : vector<512x4xbf16>, vector<4x32xbf16>, vector<512x32xf32> -> vector<512x32xf32>
    %28 = arith.addf %21, %27 : vector<512x32xf32>
    %c0_28 = arith.constant 0 : index
    %c1_29 = arith.constant 1 : index
    %c1_30 = arith.constant 1 : index
    %c0_31 = arith.constant 0 : index
    %29 = vector.load %arg0[%c0_28, %c1_29, %c1_30, %c0_31] : memref<2x18x18x4xf32, #tpu.memory_space<vmem>>, vector<2x16x16x4xf32>
    %30 = vector.shape_cast %29 : vector<2x16x16x4xf32> to vector<512x4xf32>
    %31 = arith.truncf %30 : vector<512x4xf32> to vector<512x4xbf16>
    %c4 = arith.constant 4 : index
    %c0_32 = arith.constant 0 : index
    %c0_33 = arith.constant 0 : index
    %32 = vector.load %arg1[%c4, %c0_32, %c0_33] : memref<9x4x32xbf16, #tpu.memory_space<vmem>>, vector<1x4x32xbf16>
    %33 = vector.shape_cast %32 : vector<1x4x32xbf16> to vector<4x32xbf16>
    %cst_34 = arith.constant dense<0.000000e+00> : vector<512x32xf32>
    %34 = tpu.matmul %31, %33, %cst_34 {dimension_numbers = #tpu.dot_dimension_numbers<[1], [0], [0], [1], [0, 0, 1, 1], [], []>} : vector<512x4xbf16>, vector<4x32xbf16>, vector<512x32xf32> -> vector<512x32xf32>
    %35 = arith.addf %28, %34 : vector<512x32xf32>
    %c0_35 = arith.constant 0 : index
    %c1_36 = arith.constant 1 : index
    %c2_37 = arith.constant 2 : index
    %c0_38 = arith.constant 0 : index
    %36 = vector.load %arg0[%c0_35, %c1_36, %c2_37, %c0_38] : memref<2x18x18x4xf32, #tpu.memory_space<vmem>>, vector<2x16x16x4xf32>
    %37 = vector.shape_cast %36 : vector<2x16x16x4xf32> to vector<512x4xf32>
    %38 = arith.truncf %37 : vector<512x4xf32> to vector<512x4xbf16>
    %c5 = arith.constant 5 : index
    %c0_39 = arith.constant 0 : index
    %c0_40 = arith.constant 0 : index
    %39 = vector.load %arg1[%c5, %c0_39, %c0_40] : memref<9x4x32xbf16, #tpu.memory_space<vmem>>, vector<1x4x32xbf16>
    %40 = vector.shape_cast %39 : vector<1x4x32xbf16> to vector<4x32xbf16>
    %cst_41 = arith.constant dense<0.000000e+00> : vector<512x32xf32>
    %41 = tpu.matmul %38, %40, %cst_41 {dimension_numbers = #tpu.dot_dimension_numbers<[1], [0], [0], [1], [0, 0, 1, 1], [], []>} : vector<512x4xbf16>, vector<4x32xbf16>, vector<512x32xf32> -> vector<512x32xf32>
    %42 = arith.addf %35, %41 : vector<512x32xf32>
    %c0_42 = arith.constant 0 : index
    %c2_43 = arith.constant 2 : index
    %c0_44 = arith.constant 0 : index
    %c0_45 = arith.constant 0 : index
    %43 = vector.load %arg0[%c0_42, %c2_43, %c0_44, %c0_45] : memref<2x18x18x4xf32, #tpu.memory_space<vmem>>, vector<2x16x16x4xf32>
    %44 = vector.shape_cast %43 : vector<2x16x16x4xf32> to vector<512x4xf32>
    %45 = arith.truncf %44 : vector<512x4xf32> to vector<512x4xbf16>
    %c6 = arith.constant 6 : index
    %c0_46 = arith.constant 0 : index
    %c0_47 = arith.constant 0 : index
    %46 = vector.load %arg1[%c6, %c0_46, %c0_47] : memref<9x4x32xbf16, #tpu.memory_space<vmem>>, vector<1x4x32xbf16>
    %47 = vector.shape_cast %46 : vector<1x4x32xbf16> to vector<4x32xbf16>
    %cst_48 = arith.constant dense<0.000000e+00> : vector<512x32xf32>
    %48 = tpu.matmul %45, %47, %cst_48 {dimension_numbers = #tpu.dot_dimension_numbers<[1], [0], [0], [1], [0, 0, 1, 1], [], []>} : vector<512x4xbf16>, vector<4x32xbf16>, vector<512x32xf32> -> vector<512x32xf32>
    %49 = arith.addf %42, %48 : vector<512x32xf32>
    %c0_49 = arith.constant 0 : index
    %c2_50 = arith.constant 2 : index
    %c1_51 = arith.constant 1 : index
    %c0_52 = arith.constant 0 : index
    %50 = vector.load %arg0[%c0_49, %c2_50, %c1_51, %c0_52] : memref<2x18x18x4xf32, #tpu.memory_space<vmem>>, vector<2x16x16x4xf32>
    %51 = vector.shape_cast %50 : vector<2x16x16x4xf32> to vector<512x4xf32>
    %52 = arith.truncf %51 : vector<512x4xf32> to vector<512x4xbf16>
    %c7 = arith.constant 7 : index
    %c0_53 = arith.constant 0 : index
    %c0_54 = arith.constant 0 : index
    %53 = vector.load %arg1[%c7, %c0_53, %c0_54] : memref<9x4x32xbf16, #tpu.memory_space<vmem>>, vector<1x4x32xbf16>
    %54 = vector.shape_cast %53 : vector<1x4x32xbf16> to vector<4x32xbf16>
    %cst_55 = arith.constant dense<0.000000e+00> : vector<512x32xf32>
    %55 = tpu.matmul %52, %54, %cst_55 {dimension_numbers = #tpu.dot_dimension_numbers<[1], [0], [0], [1], [0, 0, 1, 1], [], []>} : vector<512x4xbf16>, vector<4x32xbf16>, vector<512x32xf32> -> vector<512x32xf32>
    %56 = arith.addf %49, %55 : vector<512x32xf32>
    %c0_56 = arith.constant 0 : index
    %c2_57 = arith.constant 2 : index
    %c2_58 = arith.constant 2 : index
    %c0_59 = arith.constant 0 : index
    %57 = vector.load %arg0[%c0_56, %c2_57, %c2_58, %c0_59] : memref<2x18x18x4xf32, #tpu.memory_space<vmem>>, vector<2x16x16x4xf32>
    %58 = vector.shape_cast %57 : vector<2x16x16x4xf32> to vector<512x4xf32>
    %59 = arith.truncf %58 : vector<512x4xf32> to vector<512x4xbf16>
    %c8 = arith.constant 8 : index
    %c0_60 = arith.constant 0 : index
    %c0_61 = arith.constant 0 : index
    %60 = vector.load %arg1[%c8, %c0_60, %c0_61] : memref<9x4x32xbf16, #tpu.memory_space<vmem>>, vector<1x4x32xbf16>
    %61 = vector.shape_cast %60 : vector<1x4x32xbf16> to vector<4x32xbf16>
    %cst_62 = arith.constant dense<0.000000e+00> : vector<512x32xf32>
    %62 = tpu.matmul %59, %61, %cst_62 {dimension_numbers = #tpu.dot_dimension_numbers<[1], [0], [0], [1], [0, 0, 1, 1], [], []>} : vector<512x4xbf16>, vector<4x32xbf16>, vector<512x32xf32> -> vector<512x32xf32>
    %63 = arith.addf %56, %62 : vector<512x32xf32>
    %c0_63 = arith.constant 0 : index
    %c0_64 = arith.constant 0 : index
    %64 = vector.load %arg2[%c0_63, %c0_64] : memref<1x32xf32, #tpu.memory_space<vmem>>, vector<1x32xf32>
    %65 = vector.broadcast %64 : vector<1x32xf32> to vector<512x32xf32>
    %66 = arith.addf %63, %65 : vector<512x32xf32>
    %cst_65 = arith.constant 0.000000e+00 : f32
    %67 = vector.broadcast %cst_65 : f32 to vector<512x32xf32>
    %68 = arith.maximumf %66, %67 : vector<512x32xf32>
    %69 = vector.shape_cast %68 : vector<512x32xf32> to vector<2x256x32xf32>
    %cst_66 = arith.constant dense<0.000000e+00> : vector<2x32xf32>
    %70 = vector.multi_reduction <add>, %69, %cst_66 [1] : vector<2x256x32xf32> to vector<2x32xf32>
    %71 = arith.truncf %70 : vector<2x32xf32> to vector<2x32xbf16>
    %c0_67 = arith.constant 0 : index
    %c0_68 = arith.constant 0 : index
    %72 = vector.load %arg3[%c0_67, %c0_68] : memref<32x128xbf16, #tpu.memory_space<vmem>>, vector<32x128xbf16>
    %cst_69 = arith.constant dense<0.000000e+00> : vector<2x128xf32>
    %73 = tpu.matmul %71, %72, %cst_69 {dimension_numbers = #tpu.dot_dimension_numbers<[1], [0], [0], [1], [0, 0, 1, 1], [], []>} : vector<2x32xbf16>, vector<32x128xbf16>, vector<2x128xf32> -> vector<2x128xf32>
    %c0_70 = arith.constant 0 : index
    %c0_71 = arith.constant 0 : index
    %74 = vector.load %arg4[%c0_70, %c0_71] : memref<1x128xf32, #tpu.memory_space<vmem>>, vector<1x128xf32>
    %75 = vector.broadcast %74 : vector<1x128xf32> to vector<2x128xf32>
    %76 = arith.addf %73, %75 : vector<2x128xf32>
    %c0_72 = arith.constant 0 : index
    %c0_73 = arith.constant 0 : index
    %77 = vector.load %arg5[%c0_72, %c0_73] : memref<2x128xf32, #tpu.memory_space<vmem>>, vector<2x128xf32>
    tpu.vector_store %arg5[%c0_72, %c0_73], %76 {strides = array<i32>} : memref<2x128xf32, #tpu.memory_space<vmem>>, vector<2x128xf32>,
    return
  }
}

</mosaic_0001>

<llo_original>
// kernel: classifier_forward.1
$region0: #{classifier_forward.1}
  #allocation0 [shape = 'u32[]', space=smem, size = 0x4, offset = 0x4, fixed_abs, tag = 'smem constant byte address 0x4 - core index']
  #allocation1 [shape = 'u32[144,128]{1,0:T(1,128)}', space=vmem, size = 0x12000, scoped, tag = 'internal scratch']
  %s0 = inlined_call_operand.vmem [shape: f32[2,18,18,4], index: 0, kind: input, shape index: {}]
  %s1 = inlined_call_operand.vmem [shape: bf16[9,4,32], index: 1, kind: input, shape index: {}]
  %s2 = inlined_call_operand.vmem [shape: f32[1,32], index: 2, kind: input, shape index: {}]
  %s3 = inlined_call_operand.vmem [shape: bf16[32,128], index: 3, kind: input, shape index: {}]
  %s4 = inlined_call_operand.vmem [shape: f32[1,128], index: 4, kind: input, shape index: {}]
  %s5 = inlined_call_operand.hbm [shape: f32[2,128], index: 5, kind: output, shape index: {}]
  %s6 = sld [smem:[#allocation0]]
  $region30: #{classifier_forward.1} parent=0
    _
  %s8 = ssub.s32 1, %s6
  %s9 = scalar_select 0, %s8, %s6
  $region1: #{classifier_forward.1} parent=0
    #allocation2 [shape = 'u8[1024]{0}', space=vmem, size = 0x400, scoped, tag = 'output window, operand 0, single buffered']
    #allocation3 [shape = 's32[1]{0}', space=sflag, size = 0x4, scoped, tag = 'scoped memory for classifier_forward.1']
    %10 = vsyncpa [#allocation3], 0
    // Predicated region
    $region2: #{classifier_forward.1} parent=1 // pred_check
      _
    $region3: #{classifier_forward.1} parent=1 // pred_check_branch
      %12 = sbr.rel (0) target = $region5
    $region4: #{classifier_forward.1} parent=1 // pred_region
      _
    $region5: #{classifier_forward.1} parent=1 // pred_fallthru
      _
    // Predicated region
    $region6: #{classifier_forward.1} parent=1 // pred_check
      _
    $region7: #{classifier_forward.1} parent=1 // pred_check_branch
      %14 = sbr.rel (0) target = $region9
    $region8: #{classifier_forward.1} parent=1 // pred_region
      _
    $region9: #{classifier_forward.1} parent=1 // pred_fallthru
      _
    // Predicated region
    $region10: #{classifier_forward.1} parent=1 // pred_check
      _
    $region11: #{classifier_forward.1} parent=1 // pred_check_branch
      %16 = sbr.rel (0) target = $region13
    $region12: #{classifier_forward.1} parent=1 // pred_region
      _
    $region13: #{classifier_forward.1} parent=1 // pred_fallthru
      _
    // Predicated region
    $region14: #{classifier_forward.1} parent=1 // pred_check
      _
    $region15: #{classifier_forward.1} parent=1 // pred_check_branch
      %18 = sbr.rel (0) target = $region17
    $region16: #{classifier_forward.1} parent=1 // pred_region
      _
    $region17: #{classifier_forward.1} parent=1 // pred_fallthru
      _
    // Predicated region
    $region18: #{classifier_forward.1} parent=1 // pred_check
      _
    $region19: #{classifier_forward.1} parent=1 // pred_check_branch
      %20 = sbr.rel (0) target = $region21
    $region20: #{classifier_forward.1} parent=1 // pred_region
      _
    $region21: #{classifier_forward.1} parent=1 // pred_fallthru
      _
    %v22 = vld [vmem:[%s0] sm:$0xff]
    %v23 = vld [vmem:[%s0 + $0x8] sm:$0xff]
    %v24 = vld [vmem:[%s0 + $0x18] sm:$0xff]
    %v25 = vld [vmem:[%s0 + $0x20] sm:$0xff]
    %v26 = vld [vmem:[%s0 + $0x30] sm:$0xff]
    %v27 = vld [vmem:[%s0 + $0x38] sm:$0xff]
    %v28 = vld [vmem:[%s0 + $0x48] sm:$0xff]
    %v29 = vld [vmem:[%s0 + $0x50] sm:$0xff]
    %v30 = vld [vmem:[%s0 + $0x60] sm:$0xff]
    %v31 = vld [vmem:[%s0 + $0x68] sm:$0xff]
    %v32 = vld [vmem:[%s0 + $0x78] sm:$0xff]
    %v33 = vld [vmem:[%s0 + $0x80] sm:$0xff]
    %v34 = vld [vmem:[%s0 + $0x90] sm:$0xff]
    %v35 = vld [vmem:[%s0 + $0x98] sm:$0xff]
    %v36 = vld [vmem:[%s0 + $0xa8] sm:$0xff]
    %v37 = vld [vmem:[%s0 + $0xb0] sm:$0xff]
    %v38 = vld [vmem:[%s0 + $0xc0] sm:$0xff]
    %v39 = vld [vmem:[%s0 + $0xc8] sm:$0xff]
    %v40 = vld [vmem:[%s0 + $0xd8] sm:$0xff]
    %v41 = vld [vmem:[%s0 + $0xe0] sm:$0xff]
    %v42 = vld [vmem:[%s0 + $0xf0] sm:$0xff]
    %v43 = vld [vmem:[%s0 + $0xf8] sm:$0xff]
    %v44 = vld [vmem:[%s0 + $0x108] sm:$0xff]
    %v45 = vld [vmem:[%s0 + $0x110] sm:$0xff]
    %v46 = vld [vmem:[%s0 + $0x120] sm:$0xff]
    %v47 = vld [vmem:[%s0 + $0x128] sm:$0xff]
    %v48 = vld [vmem:[%s0 + $0x138] sm:$0xff]
    %v49 = vld [vmem:[%s0 + $0x140] sm:$0xff]
    %v50 = vld [vmem:[%s0 + $0x150] sm:$0xff]
    %v51 = vld [vmem:[%s0 + $0x158] sm:$0xff]
    %v52 = vld [vmem:[%s0 + $0x168] sm:$0xff]
    %v53 = vld [vmem:[%s0 + $0x170] sm:$0xff]
    %v54 = vld [vmem:[%s0 + $0x1b0] sm:$0xff]
    %v55 = vld [vmem:[%s0 + $0x1b8] sm:$0xff]
    %v56 = vld [vmem:[%s0 + $0x1c8] sm:$0xff]
    %v57 = vld [vmem:[%s0 + $0x1d0] sm:$0xff]
    %v58 = vld [vmem:[%s0 + $0x1e0] sm:$0xff]
    %v59 = vld [vmem:[%s0 + $0x1e8] sm:$0xff]
    %v60 = vld [vmem:[%s0 + $0x1f8] sm:$0xff]
    %v61 = vld [vmem:[%s0 + $0x200] sm:$0xff]
    %v62 = vld [vmem:[%s0 + $0x210] sm:$0xff]
    %v63 = vld [vmem:[%s0 + $0x218] sm:$0xff]
    %v64 = vld [vmem:[%s0 + $0x228] sm:$0xff]
    %v65 = vld [vmem:[%s0 + $0x230] sm:$0xff]
    %v66 = vld [vmem:[%s0 + $0x240] sm:$0xff]
    %v67 = vld [vmem:[%s0 + $0x248] sm:$0xff]
    %v68 = vld [vmem:[%s0 + $0x258] sm:$0xff]
    %v69 = vld [vmem:[%s0 + $0x260] sm:$0xff]
    %v70 = vld [vmem:[%s0 + $0x270] sm:$0xff]
    %v71 = vld [vmem:[%s0 + $0x278] sm:$0xff]
    %v72 = vld [vmem:[%s0 + $0x288] sm:$0xff]
    %v73 = vld [vmem:[%s0 + $0x290] sm:$0xff]
    %v74 = vld [vmem:[%s0 + $0x2a0] sm:$0xff]
    %v75 = vld [vmem:[%s0 + $0x2a8] sm:$0xff]
    %v76 = vld [vmem:[%s0 + $0x2b8] sm:$0xff]
    %v77 = vld [vmem:[%s0 + $0x2c0] sm:$0xff]
    %v78 = vld [vmem:[%s0 + $0x2d0] sm:$0xff]
    %v79 = vld [vmem:[%s0 + $0x2d8] sm:$0xff]
    %v80 = vld [vmem:[%s0 + $0x2e8] sm:$0xff]
    %v81 = vld [vmem:[%s0 + $0x2f0] sm:$0xff]
    %v82 = vld [vmem:[%s0 + $0x300] sm:$0xff]
    %v83 = vld [vmem:[%s0 + $0x308] sm:$0xff]
    %v84 = vld [vmem:[%s0 + $0x318] sm:$0xff]
    %v85 = vld [vmem:[%s0 + $0x320] sm:$0xff]
    %v86 = vpack.c.bf16 %v23, %v22
    %v87 = vpack.c.bf16 %v25, %v24
    %v88 = vpack.c.bf16 %v27, %v26
    %v89 = vpack.c.bf16 %v29, %v28
    %v90 = vpack.c.bf16 %v31, %v30
    %v91 = vpack.c.bf16 %v33, %v32
    %v92 = vpack.c.bf16 %v35, %v34
    %v93 = vpack.c.bf16 %v37, %v36
    %v94 = vpack.c.bf16 %v39, %v38
    %v95 = vpack.c.bf16 %v41, %v40
    %v96 = vpack.c.bf16 %v43, %v42
    %v97 = vpack.c.bf16 %v45, %v44
    %v98 = vpack.c.bf16 %v47, %v46
    %v99 = vpack.c.bf16 %v49, %v48
    %v100 = vpack.c.bf16 %v51, %v50
    %v101 = vpack.c.bf16 %v53, %v52
    %v102 = vpack.c.bf16 %v55, %v54
    %v103 = vpack.c.bf16 %v57, %v56
    %v104 = vpack.c.bf16 %v59, %v58
    %v105 = vpack.c.bf16 %v61, %v60
    %v106 = vpack.c.bf16 %v63, %v62
    %v107 = vpack.c.bf16 %v65, %v64
    %v108 = vpack.c.bf16 %v67, %v66
    %v109 = vpack.c.bf16 %v69, %v68
    %v110 = vpack.c.bf16 %v71, %v70
    %v111 = vpack.c.bf16 %v73, %v72
    %v112 = vpack.c.bf16 %v75, %v74
    %v113 = vpack.c.bf16 %v77, %v76
    %v114 = vpack.c.bf16 %v79, %v78
    %v115 = vpack.c.bf16 %v81, %v80
    %v116 = vpack.c.bf16 %v83, %v82
    %v117 = vpack.c.bf16 %v85, %v84
    %v118 = vld [vmem:[%s1] sm:$0x3]
    %v119 = vld [vmem:[%s0 + $0x1] sm:$0xff]
    %v120 = vld [vmem:[%s0 + $0x9] sm:$0xff]
    %v121 = vld [vmem:[%s0 + $0x19] sm:$0xff]
    %v122 = vld [vmem:[%s0 + $0x21] sm:$0xff]
    %v123 = vld [vmem:[%s0 + $0x31] sm:$0xff]
    %v124 = vld [vmem:[%s0 + $0x39] sm:$0xff]
    %v125 = vld [vmem:[%s0 + $0x49] sm:$0xff]
    %v126 = vld [vmem:[%s0 + $0x51] sm:$0xff]
    %v127 = vld [vmem:[%s0 + $0x61] sm:$0xff]
    %v128 = vld [vmem:[%s0 + $0x69] sm:$0xff]
    %v129 = vld [vmem:[%s0 + $0x79] sm:$0xff]
    %v130 = vld [vmem:[%s0 + $0x81] sm:$0xff]
    %v131 = vld [vmem:[%s0 + $0x91] sm:$0xff]
    %v132 = vld [vmem:[%s0 + $0x99] sm:$0xff]
    %v133 = vld [vmem:[%s0 + $0xa9] sm:$0xff]
    %v134 = vld [vmem:[%s0 + $0xb1] sm:$0xff]
    %v135 = vld [vmem:[%s0 + $0xc1] sm:$0xff]
    %v136 = vld [vmem:[%s0 + $0xc9] sm:$0xff]
    %v137 = vld [vmem:[%s0 + $0xd9] sm:$0xff]
    %v138 = vld [vmem:[%s0 + $0xe1] sm:$0xff]
    %v139 = vld [vmem:[%s0 + $0xf1] sm:$0xff]
    %v140 = vld [vmem:[%s0 + $0xf9] sm:$0xff]
    %v141 = vld [vmem:[%s0 + $0x109] sm:$0xff]
    %v142 = vld [vmem:[%s0 + $0x111] sm:$0xff]
    %v143 = vld [vmem:[%s0 + $0x121] sm:$0xff]
    %v144 = vld [vmem:[%s0 + $0x129] sm:$0xff]
    %v145 = vld [vmem:[%s0 + $0x139] sm:$0xff]
    %v146 = vld [vmem:[%s0 + $0x141] sm:$0xff]
    %v147 = vld [vmem:[%s0 + $0x151] sm:$0xff]
    %v148 = vld [vmem:[%s0 + $0x159] sm:$0xff]
    %v149 = vld [vmem:[%s0 + $0x169] sm:$0xff]
    %v150 = vld [vmem:[%s0 + $0x171] sm:$0xff]
    %v151 = vld [vmem:[%s0 + $0x1b1] sm:$0xff]
    %v152 = vld [vmem:[%s0 + $0x1b9] sm:$0xff]
    %v153 = vld [vmem:[%s0 + $0x1c9] sm:$0xff]
    %v154 = vld [vmem:[%s0 + $0x1d1] sm:$0xff]
    %v155 = vld [vmem:[%s0 + $0x1e1] sm:$0xff]
    %v156 = vld [vmem:[%s0 + $0x1e9] sm:$0xff]
    %v157 = vld [vmem:[%s0 + $0x1f9] sm:$0xff]
    %v158 = vld [vmem:[%s0 + $0x201] sm:$0xff]
    %v159 = vld [vmem:[%s0 + $0x211] sm:$0xff]
    %v160 = vld [vmem:[%s0 + $0x219] sm:$0xff]
    %v161 = vld [vmem:[%s0 + $0x229] sm:$0xff]
    %v162 = vld [vmem:[%s0 + $0x231] sm:$0xff]
    %v163 = vld [vmem:[%s0 + $0x241] sm:$0xff]
    %v164 = vld [vmem:[%s0 + $0x249] sm:$0xff]
    %v165 = vld [vmem:[%s0 + $0x259] sm:$0xff]
    %v166 = vld [vmem:[%s0 + $0x261] sm:$0xff]
    %v167 = vld [vmem:[%s0 + $0x271] sm:$0xff]
    %v168 = vld [vmem:[%s0 + $0x279] sm:$0xff]
    %v169 = vld [vmem:[%s0 + $0x289] sm:$0xff]
    %v170 = vld [vmem:[%s0 + $0x291] sm:$0xff]
    %v171 = vld [vmem:[%s0 + $0x2a1] sm:$0xff]
    %v172 = vld [vmem:[%s0 + $0x2a9] sm:$0xff]
    %v173 = vld [vmem:[%s0 + $0x2b9] sm:$0xff]
    %v174 = vld [vmem:[%s0 + $0x2c1] sm:$0xff]
    %v175 = vld [vmem:[%s0 + $0x2d1] sm:$0xff]
    %v176 = vld [vmem:[%s0 + $0x2d9] sm:$0xff]
    %v177 = vld [vmem:[%s0 + $0x2e9] sm:$0xff]
    %v178 = vld [vmem:[%s0 + $0x2f1] sm:$0xff]
    %v179 = vld [vmem:[%s0 + $0x301] sm:$0xff]
    %v180 = vld [vmem:[%s0 + $0x309] sm:$0xff]
    %v181 = vld [vmem:[%s0 + $0x319] sm:$0xff]
    %v182 = vld [vmem:[%s0 + $0x321] sm:$0xff]
    %v183 = vpack.c.bf16 %v120, %v119
    %v184 = vpack.c.bf16 %v122, %v121
    %v185 = vpack.c.bf16 %v124, %v123
    %v186 = vpack.c.bf16 %v126, %v125
    %v187 = vpack.c.bf16 %v128, %v127
    %v188 = vpack.c.bf16 %v130, %v129
    %v189 = vpack.c.bf16 %v132, %v131
    %v190 = vpack.c.bf16 %v134, %v133
    %v191 = vpack.c.bf16 %v136, %v135
    %v192 = vpack.c.bf16 %v138, %v137
    %v193 = vpack.c.bf16 %v140, %v139
    %v194 = vpack.c.bf16 %v142, %v141
    %v195 = vpack.c.bf16 %v144, %v143
    %v196 = vpack.c.bf16 %v146, %v145
    %v197 = vpack.c.bf16 %v148, %v147
    %v198 = vpack.c.bf16 %v150, %v149
    %v199 = vpack.c.bf16 %v152, %v151
    %v200 = vpack.c.bf16 %v154, %v153
    %v201 = vpack.c.bf16 %v156, %v155
    %v202 = vpack.c.bf16 %v158, %v157
    %v203 = vpack.c.bf16 %v160, %v159
    %v204 = vpack.c.bf16 %v162, %v161
    %v205 = vpack.c.bf16 %v164, %v163
    %v206 = vpack.c.bf16 %v166, %v165
    %v207 = vpack.c.bf16 %v168, %v167
    %v208 = vpack.c.bf16 %v170, %v169
    %v209 = vpack.c.bf16 %v172, %v171
    %v210 = vpack.c.bf16 %v174, %v173
    %v211 = vpack.c.bf16 %v176, %v175
    %v212 = vpack.c.bf16 %v178, %v177
    %v213 = vpack.c.bf16 %v180, %v179
    %v214 = vpack.c.bf16 %v182, %v181
    %s215 = scalar_lea.vmem %s1, 2
    %v216 = vld [vmem:[%s215] sm:$0x3]
    %vm217 = vcmask 31744
    %v219 = vsel %vm217, %v183, 0
    %v222 = vsel %vm217, %v184, 0
    %v225 = vsel %vm217, %v185, 0
    %v228 = vsel %vm217, %v186, 0
    %v231 = vsel %vm217, %v187, 0
    %v234 = vsel %vm217, %v188, 0
    %v237 = vsel %vm217, %v189, 0
    %v240 = vsel %vm217, %v190, 0
    %v243 = vsel %vm217, %v191, 0
    %v246 = vsel %vm217, %v192, 0
    %v249 = vsel %vm217, %v193, 0
    %v252 = vsel %vm217, %v194, 0
    %v255 = vsel %vm217, %v195, 0
    %v258 = vsel %vm217, %v196, 0
    %v261 = vsel %vm217, %v197, 0
    %v264 = vsel %vm217, %v198, 0
    %v267 = vsel %vm217, %v199, 0
    %v270 = vsel %vm217, %v200, 0
    %v273 = vsel %vm217, %v201, 0
    %v276 = vsel %vm217, %v202, 0
    %v279 = vsel %vm217, %v203, 0
    %v282 = vsel %vm217, %v204, 0
    %v285 = vsel %vm217, %v205, 0
    %v288 = vsel %vm217, %v206, 0
    %v291 = vsel %vm217, %v207, 0
    %v294 = vsel %vm217, %v208, 0
    %v297 = vsel %vm217, %v209, 0
    %v300 = vsel %vm217, %v210, 0
    %v303 = vsel %vm217, %v211, 0
    %v306 = vsel %vm217, %v212, 0
    %v309 = vsel %vm217, %v213, 0
    %v312 = vsel %vm217, %v214, 0
    %vm314 = vcmask 1041408
    %v316 = vsel %vm314, %v216, 0
    %318 = vmatprep.subr.bf16.mxu0 0
    %319 = vmatpush1.bf16.msra.mxu0 %v316
    %320 = vmatprep.subr.bf16.mxu0 0
    %321 = vmatpush1.bf16.msra.mxu0 0
    %322 = vmatprep.subr.bf16.mxu0 0
    %323 = vmatpush1.bf16.msra.mxu0 0
    %324 = vmatprep.subr.bf16.mxu0 0
    %325 = vmatpush1.bf16.msra.mxu0 0
    %326 = vmatprep.subr.bf16.mxu0 0
    %327 = vmatpush1.bf16.msra.mxu0 0
    %328 = vmatprep.subr.bf16.mxu0 0
    %329 = vmatpush1.bf16.msra.mxu0 0
    %330 = vmatprep.subr.bf16.mxu0 0
    %331 = vmatpush1.bf16.msra.mxu0 0
    %332 = vmatprep.subr.bf16.mxu0 0
    %333 = vmatpush1.bf16.msra.mxu0 0
    %334 = vmatprep.subr.bf16.mxu0 0
    %335 = vmatpush1.bf16.msra.mxu0 0
    %336 = vmatprep.subr.bf16.mxu0 0
    %337 = vmatpush1.bf16.msra.mxu0 0
    %338 = vmatprep.subr.bf16.mxu0 0
    %339 = vmatpush1.bf16.msra.mxu0 0
    %340 = vmatprep.subr.bf16.mxu0 0
    %341 = vmatpush1.bf16.msra.mxu0 0
    %342 = vmatprep.subr.bf16.mxu0 0
    %343 = vmatpush1.bf16.msra.mxu0 0
    %344 = vmatprep.subr.bf16.mxu0 0
    %345 = vmatpush1.bf16.msra.mxu0 0
    %346 = vmatprep.subr.bf16.mxu0 0
    %347 = vmatpush1.bf16.msra.mxu0 0
    %348 = vmatprep.subr.bf16.mxu0 0
    %349 = vmatpush1.bf16.msra.mxu0 0
    %350 = vmatprep.mubr.bf16.mxu0 0
    %351 = vmatmul.mubr.bf16.gmra.mrb[0].mxu0 %v219
    %v352 = vpop.f32.mrb[0].mxu0
    %v353 = vadd.f32 0.0, %v352
    %v354 = vpop.f32.mrb[0].mxu0
    %v355 = vpop.f32.mrb[0].mxu0
    %v356 = vadd.f32 0.0, %v355
    %v357 = vpop.f32.mrb[0].mxu0
    %358 = vmatprep.mubr.bf16.mxu0 0
    %359 = vmatmul.mubr.bf16.gmra.mrb[0].mxu0 %v222
    %v360 = vpop.f32.mrb[0].mxu0
    %v361 = vadd.f32 0.0, %v360
    %v362 = vpop.f32.mrb[0].mxu0
    %v363 = vpop.f32.mrb[0].mxu0
    %v364 = vadd.f32 0.0, %v363
    %v365 = vpop.f32.mrb[0].mxu0
    %366 = vmatprep.mubr.bf16.mxu0 0
    %367 = vmatmul.mubr.bf16.gmra.mrb[0].mxu0 %v225
    %v368 = vpop.f32.mrb[0].mxu0
    %v369 = vadd.f32 0.0, %v368
    %v370 = vpop.f32.mrb[0].mxu0
    %v371 = vpop.f32.mrb[0].mxu0
    %v372 = vadd.f32 0.0, %v371
    %v373 = vpop.f32.mrb[0].mxu0
    %374 = vmatprep.mubr.bf16.mxu0 0
    %375 = vmatmul.mubr.bf16.gmra.mrb[0].mxu0 %v228
    %v376 = vpop.f32.mrb[0].mxu0
    %v377 = vadd.f32 0.0, %v376
    %v378 = vpop.f32.mrb[0].mxu0
    %v379 = vpop.f32.mrb[0].mxu0
    %v380 = vadd.f32 0.0, %v379
    %v381 = vpop.f32.mrb[0].mxu0
    %382 = vmatprep.mubr.bf16.mxu0 0
    %383 = vmatmul.mubr.bf16.gmra.mrb[0].mxu0 %v231
    %v384 = vpop.f32.mrb[0].mxu0
    %v385 = vadd.f32 0.0, %v384
    %v386 = vpop.f32.mrb[0].mxu0
    %v387 = vpop.f32.mrb[0].mxu0
    %v388 = vadd.f32 0.0, %v387
    %v389 = vpop.f32.mrb[0].mxu0
    %390 = vmatprep.mubr.bf16.mxu0 0
    %391 = vmatmul.mubr.bf16.gmra.mrb[0].mxu0 %v234
    %v392 = vpop.f32.mrb[0].mxu0
    %v393 = vadd.f32 0.0, %v392
    %v394 = vpop.f32.mrb[0].mxu0
    %v395 = vpop.f32.mrb[0].mxu0
    %v396 = vadd.f32 0.0, %v395
    %v397 = vpop.f32.mrb[0].mxu0
    %398 = vmatprep.mubr.bf16.mxu0 0
    %399 = vmatmul.mubr.bf16.gmra.mrb[0].mxu0 %v237
    %v400 = vpop.f32.mrb[0].mxu0
    %v401 = vadd.f32 0.0, %v400
    %v402 = vpop.f32.mrb[0].mxu0
    %v403 = vpop.f32.mrb[0].mxu0
    %v404 = vadd.f32 0.0, %v403
    %v405 = vpop.f32.mrb[0].mxu0
    %406 = vmatprep.mubr.bf16.mxu0 0
    %407 = vmatmul.mubr.bf16.gmra.mrb[0].mxu0 %v240
    %v408 = vpop.f32.mrb[0].mxu0
    %v409 = vadd.f32 0.0, %v408
    %v410 = vpop.f32.mrb[0].mxu0
    %v411 = vpop.f32.mrb[0].mxu0
    %v412 = vadd.f32 0.0, %v411
    %v413 = vpop.f32.mrb[0].mxu0
    %414 = vmatprep.mubr.bf16.mxu0 0
    %415 = vmatmul.mubr.bf16.gmra.mrb[0].mxu0 %v243
    %v416 = vpop.f32.mrb[0].mxu0
    %v417 = vadd.f32 0.0, %v416
    %v418 = vpop.f32.mrb[0].mxu0
    %v419 = vpop.f32.mrb[0].mxu0
    %v420 = vadd.f32 0.0, %v419
    %v421 = vpop.f32.mrb[0].mxu0
    %422 = vmatprep.mubr.bf16.mxu0 0
    %423 = vmatmul.mubr.bf16.gmra.mrb[0].mxu0 %v246
    %v424 = vpop.f32.mrb[0].mxu0
    %v425 = vadd.f32 0.0, %v424
    %v426 = vpop.f32.mrb[0].mxu0
    %v427 = vpop.f32.mrb[0].mxu0
    %v428 = vadd.f32 0.0, %v427
    %v429 = vpop.f32.mrb[0].mxu0
    %430 = vmatprep.mubr.bf16.mxu0 0
    %431 = vmatmul.mubr.bf16.gmra.mrb[0].mxu0 %v249
    %v432 = vpop.f32.mrb[0].mxu0
    %v433 = vadd.f32 0.0, %v432
    %v434 = vpop.f32.mrb[0].mxu0
    %v435 = vpop.f32.mrb[0].mxu0
    %v436 = vadd.f32 0.0, %v435
    %v437 = vpop.f32.mrb[0].mxu0
    %438 = vmatprep.mubr.bf16.mxu0 0
    %439 = vmatmul.mubr.bf16.gmra.mrb[0].mxu0 %v252
    %v440 = vpop.f32.mrb[0].mxu0
    %v441 = vadd.f32 0.0, %v440
    %v442 = vpop.f32.mrb[0].mxu0
    %v443 = vpop.f32.mrb[0].mxu0
    %v444 = vadd.f32 0.0, %v443
    %v445 = vpop.f32.mrb[0].mxu0
    %446 = vmatprep.mubr.bf16.mxu0 0
    %447 = vmatmul.mubr.bf16.gmra.mrb[0].mxu0 %v255
    %v448 = vpop.f32.mrb[0].mxu0
    %v449 = vadd.f32 0.0, %v448
    %v450 = vpop.f32.mrb[0].mxu0
    %v451 = vpop.f32.mrb[0].mxu0
    %v452 = vadd.f32 0.0, %v451
    %v453 = vpop.f32.mrb[0].mxu0
    %454 = vmatprep.mubr.bf16.mxu0 0
    %455 = vmatmul.mubr.bf16.gmra.mrb[0].mxu0 %v258
    %v456 = vpop.f32.mrb[0].mxu0
    %v457 = vadd.f32 0.0, %v456
    %v458 = vpop.f32.mrb[0].mxu0
    %v459 = vpop.f32.mrb[0].mxu0
    %v460 = vadd.f32 0.0, %v459
    %v461 = vpop.f32.mrb[0].mxu0
    %462 = vmatprep.mubr.bf16.mxu0 0
    %463 = vmatmul.mubr.bf16.gmra.mrb[0].mxu0 %v261
    %v464 = vpop.f32.mrb[0].mxu0
    %v465 = vadd.f32 0.0, %v464
    %v466 = vpop.f32.mrb[0].mxu0
    %v467 = vpop.f32.mrb[0].mxu0
    %v468 = vadd.f32 0.0, %v467
    %v469 = vpop.f32.mrb[0].mxu0
    %470 = vmatprep.mubr.bf16.mxu0 0
    %471 = vmatmul.mubr.bf16.gmra.mrb[0].mxu0 %v264
    %v472 = vpop.f32.mrb[0].mxu0
    %v473 = vadd.f32 0.0, %v472
    %v474 = vpop.f32.mrb[0].mxu0
    %v475 = vpop.f32.mrb[0].mxu0
    %v476 = vadd.f32 0.0, %v475
    %v477 = vpop.f32.mrb[0].mxu0
    %478 = vmatprep.mubr.bf16.mxu0 0
    %479 = vmatmul.mubr.bf16.gmra.mrb[0].mxu0 %v267
    %v480 = vpop.f32.mrb[0].mxu0
    %v481 = vadd.f32 0.0, %v480
    %v482 = vpop.f32.mrb[0].mxu0
    %v483 = vpop.f32.mrb[0].mxu0
    %v484 = vadd.f32 0.0, %v483
    %v485 = vpop.f32.mrb[0].mxu0
    %486 = vmatprep.mubr.bf16.mxu0 0
    %487 = vmatmul.mubr.bf16.gmra.mrb[0].mxu0 %v270
    %v488 = vpop.f32.mrb[0].mxu0
    %v489 = vadd.f32 0.0, %v488
    %v490 = vpop.f32.mrb[0].mxu0
    %v491 = vpop.f32.mrb[0].mxu0
    %v492 = vadd.f32 0.0, %v491
    %v493 = vpop.f32.mrb[0].mxu0
    %494 = vmatprep.mubr.bf16.mxu0 0
    %495 = vmatmul.mubr.bf16.gmra.mrb[0].mxu0 %v273
    %v496 = vpop.f32.mrb[0].mxu0
    %v497 = vadd.f32 0.0, %v496
    %v498 = vpop.f32.mrb[0].mxu0
    %v499 = vpop.f32.mrb[0].mxu0
    %v500 = vadd.f32 0.0, %v499
    %v501 = vpop.f32.mrb[0].mxu0
    %502 = vmatprep.mubr.bf16.mxu0 0
    %503 = vmatmul.mubr.bf16.gmra.mrb[0].mxu0 %v276
    %v504 = vpop.f32.mrb[0].mxu0
    %v505 = vadd.f32 0.0, %v504
    %v506 = vpop.f32.mrb[0].mxu0
    %v507 = vpop.f32.mrb[0].mxu0
    %v508 = vadd.f32 0.0, %v507
    %v509 = vpop.f32.mrb[0].mxu0
    %510 = vmatprep.mubr.bf16.mxu0 0
    %511 = vmatmul.mubr.bf16.gmra.mrb[0].mxu0 %v279
    %v512 = vpop.f32.mrb[0].mxu0
    %v513 = vadd.f32 0.0, %v512
    %v514 = vpop.f32.mrb[0].mxu0
    %v515 = vpop.f32.mrb[0].mxu0
    %v516 = vadd.f32 0.0, %v515
    %v517 = vpop.f32.mrb[0].mxu0
    %518 = vmatprep.mubr.bf16.mxu0 0
    %519 = vmatmul.mubr.bf16.gmra.mrb[0].mxu0 %v282
    %v520 = vpop.f32.mrb[0].mxu0
    %v521 = vadd.f32 0.0, %v520
    %v522 = vpop.f32.mrb[0].mxu0
    %v523 = vpop.f32.mrb[0].mxu0
    %v524 = vadd.f32 0.0, %v523
    %v525 = vpop.f32.mrb[0].mxu0
    %526 = vmatprep.mubr.bf16.mxu0 0
    %527 = vmatmul.mubr.bf16.gmra.mrb[0].mxu0 %v285
    %v528 = vpop.f32.mrb[0].mxu0
    %v529 = vadd.f32 0.0, %v528
    %v530 = vpop.f32.mrb[0].mxu0
    %v531 = vpop.f32.mrb[0].mxu0
    %v532 = vadd.f32 0.0, %v531
    %v533 = vpop.f32.mrb[0].mxu0
    %534 = vmatprep.mubr.bf16.mxu0 0
    %535 = vmatmul.mubr.bf16.gmra.mrb[0].mxu0 %v288
    %v536 = vpop.f32.mrb[0].mxu0
    %v537 = vadd.f32 0.0, %v536
    %v538 = vpop.f32.mrb[0].mxu0
    %v539 = vpop.f32.mrb[0].mxu0
    %v540 = vadd.f32 0.0, %v539
    %v541 = vpop.f32.mrb[0].mxu0
    %542 = vmatprep.mubr.bf16.mxu0 0
    %543 = vmatmul.mubr.bf16.gmra.mrb[0].mxu0 %v291
    %v544 = vpop.f32.mrb[0].mxu0
    %v545 = vadd.f32 0.0, %v544
    %v546 = vpop.f32.mrb[0].mxu0
    %v547 = vpop.f32.mrb[0].mxu0
    %v548 = vadd.f32 0.0, %v547
    %v549 = vpop.f32.mrb[0].mxu0
    %550 = vmatprep.mubr.bf16.mxu0 0
    %551 = vmatmul.mubr.bf16.gmra.mrb[0].mxu0 %v294
    %v552 = vpop.f32.mrb[0].mxu0
    %v553 = vadd.f32 0.0, %v552
    %v554 = vpop.f32.mrb[0].mxu0
    %v555 = vpop.f32.mrb[0].mxu0
    %v556 = vadd.f32 0.0, %v555
    %v557 = vpop.f32.mrb[0].mxu0
    %558 = vmatprep.mubr.bf16.mxu0 0
    %559 = vmatmul.mubr.bf16.gmra.mrb[0].mxu0 %v297
    %v560 = vpop.f32.mrb[0].mxu0
    %v561 = vadd.f32 0.0, %v560
    %v562 = vpop.f32.mrb[0].mxu0
    %v563 = vpop.f32.mrb[0].mxu0
    %v564 = vadd.f32 0.0, %v563
    %v565 = vpop.f32.mrb[0].mxu0
    %566 = vmatprep.mubr.bf16.mxu0 0
    %567 = vmatmul.mubr.bf16.gmra.mrb[0].mxu0 %v300
    %v568 = vpop.f32.mrb[0].mxu0
    %v569 = vadd.f32 0.0, %v568
    %v570 = vpop.f32.mrb[0].mxu0
    %v571 = vpop.f32.mrb[0].mxu0
    %v572 = vadd.f32 0.0, %v571
    %v573 = vpop.f32.mrb[0].mxu0
    %574 = vmatprep.mubr.bf16.mxu0 0
    %575 = vmatmul.mubr.bf16.gmra.mrb[0].mxu0 %v303
    %v576 = vpop.f32.mrb[0].mxu0
    %v577 = vadd.f32 0.0, %v576
    %v578 = vpop.f32.mrb[0].mxu0
    %v579 = vpop.f32.mrb[0].mxu0
    %v580 = vadd.f32 0.0, %v579
    %v581 = vpop.f32.mrb[0].mxu0
    %582 = vmatprep.mubr.bf16.mxu0 0
    %583 = vmatmul.mubr.bf16.gmra.mrb[0].mxu0 %v306
    %v584 = vpop.f32.mrb[0].mxu0
    %v585 = vadd.f32 0.0, %v584
    %v586 = vpop.f32.mrb[0].mxu0
    %v587 = vpop.f32.mrb[0].mxu0
    %v588 = vadd.f32 0.0, %v587
    %v589 = vpop.f32.mrb[0].mxu0
    %590 = vmatprep.mubr.bf16.mxu0 0
    %591 = vmatmul.mubr.bf16.gmra.mrb[0].mxu0 %v309
    %v592 = vpop.f32.mrb[0].mxu0
    %v593 = vadd.f32 0.0, %v592
    %v594 = vpop.f32.mrb[0].mxu0
    %v595 = vpop.f32.mrb[0].mxu0
    %v596 = vadd.f32 0.0, %v595
    %v597 = vpop.f32.mrb[0].mxu0
    %598 = vmatprep.mubr.bf16.mxu0 0
    %599 = vmatmul.mubr.bf16.gmra.mrb[0].mxu0 %v312
    %v600 = vpop.f32.mrb[0].mxu0
    %v601 = vadd.f32 0.0, %v600
    %v602 = vpop.f32.mrb[0].mxu0
    %v603 = vpop.f32.mrb[0].mxu0
    %v604 = vadd.f32 0.0, %v603
    %v605 = vpop.f32.mrb[0].mxu0
    %606 = vdwg.mxu0
    %v608 = vsel %vm217, %v86, 0
    %v611 = vsel %vm217, %v87, 0
    %v614 = vsel %vm217, %v88, 0
    %v617 = vsel %vm217, %v89, 0
    %v620 = vsel %vm217, %v90, 0
    %v623 = vsel %vm217, %v91, 0
    %v626 = vsel %vm217, %v92, 0
    %v629 = vsel %vm217, %v93, 0
    %v632 = vsel %vm217, %v94, 0
    %v635 = vsel %vm217, %v95, 0
    %v638 = vsel %vm217, %v96, 0
    %v641 = vsel %vm217, %v97, 0
    %v644 = vsel %vm217, %v98, 0
    %v647 = vsel %vm217, %v99, 0
    %v650 = vsel %vm217, %v100, 0
    %v653 = vsel %vm217, %v101, 0
    %v656 = vsel %vm217, %v102, 0
    %v659 = vsel %vm217, %v103, 0
    %v662 = vsel %vm217, %v104, 0
    %v665 = vsel %vm217, %v105, 0
    %v668 = vsel %vm217, %v106, 0
    %v671 = vsel %vm217, %v107, 0
    %v674 = vsel %vm217, %v108, 0
    %v677 = vsel %vm217, %v109, 0
    %v680 = vsel %vm217, %v110, 0
    %v683 = vsel %vm217, %v111, 0
    %v686 = vsel %vm217, %v112, 0
    %v689 = vsel %vm217, %v113, 0
    %v692 = vsel %vm217, %v114, 0
    %v695 = vsel %vm217, %v115, 0
    %v698 = vsel %vm217, %v116, 0
    %v701 = vsel %vm217, %v117, 0
    %v704 = vsel %vm314, %v118, 0
    %706 = vmatprep.subr.bf16.mxu0 0
    %707 = vmatpush1.bf16.msra.mxu0 %v704
    %708 = vmatprep.subr.bf16.mxu0 0
    %709 = vmatpush1.bf16.msra.mxu0 0
    %710 = vmatprep.subr.bf16.mxu0 0
    %711 = vmatpush1.bf16.msra.mxu0 0
    %712 = vmatprep.subr.bf16.mxu0 0
    %713 = vmatpush1.bf16.msra.mxu0 0
    %714 = vmatprep.subr.bf16.mxu0 0
    %715 = vmatpush1.bf16.msra.mxu0 0
    %716 = vmatprep.subr.bf16.mxu0 0
    %717 = vmatpush1.bf16.msra.mxu0 0
    %718 = vmatprep.subr.bf16.mxu0 0
    %719 = vmatpush1.bf16.msra.mxu0 0
    %720 = vmatprep.subr.bf16.mxu0 0
    %721 = vmatpush1.bf16.msra.mxu0 0
    %722 = vmatprep.subr.bf16.mxu0 0
    %723 = vmatpush1.bf16.msra.mxu0 0
    %724 = vmatprep.subr.bf16.mxu0 0
    %725 = vmatpush1.bf16.msra.mxu0 0
    %726 = vmatprep.subr.bf16.mxu0 0
    %727 = vmatpush1.bf16.msra.mxu0 0
    %728 = vmatprep.subr.bf16.mxu0 0
    %729 = vmatpush1.bf16.msra.mxu0 0
    %730 = vmatprep.subr.bf16.mxu0 0
    %731 = vmatpush1.bf16.msra.mxu0 0
    %732 = vmatprep.subr.bf16.mxu0 0
    %733 = vmatpush1.bf16.msra.mxu0 0
    %734 = vmatprep.subr.bf16.mxu0 0
    %735 = vmatpush1.bf16.msra.mxu0 0
    %736 = vmatprep.subr.bf16.mxu0 0
    %737 = vmatpush1.bf16.msra.mxu0 0
    %738 = vmatprep.mubr.bf16.mxu0 0
    %739 = vmatmul.mubr.bf16.gmra.mrb[0].mxu0 %v608
    %v740 = vpop.f32.mrb[0].mxu0
    %v741 = vadd.f32 %v353, %v740
    %v742 = vpop.f32.mrb[0].mxu0
    %v743 = vpop.f32.mrb[0].mxu0
    %v744 = vadd.f32 %v356, %v743
    %v745 = vpop.f32.mrb[0].mxu0
    %746 = vmatprep.mubr.bf16.mxu0 0
    %747 = vmatmul.mubr.bf16.gmra.mrb[0].mxu0 %v611
    %v748 = vpop.f32.mrb[0].mxu0
    %v749 = vadd.f32 %v361, %v748
    %v750 = vpop.f32.mrb[0].mxu0
    %v751 = vpop.f32.mrb[0].mxu0
    %v752 = vadd.f32 %v364, %v751
    %v753 = vpop.f32.mrb[0].mxu0
    %754 = vmatprep.mubr.bf16.mxu0 0
    %755 = vmatmul.mubr.bf16.gmra.mrb[0].mxu0 %v614
    %v756 = vpop.f32.mrb[0].mxu0
    %v757 = vadd.f32 %v369, %v756
    %v758 = vpop.f32.mrb[0].mxu0
    %v759 = vpop.f32.mrb[0].mxu0
    %v760 = vadd.f32 %v372, %v759
    %v761 = vpop.f32.mrb[0].mxu0
    %762 = vmatprep.mubr.bf16.mxu0 0
    %763 = vmatmul.mubr.bf16.gmra.mrb[0].mxu0 %v617
    %v764 = vpop.f32.mrb[0].mxu0
    %v765 = vadd.f32 %v377, %v764
    %v766 = vpop.f32.mrb[0].mxu0
    %v767 = vpop.f32.mrb[0].mxu0
    %v768 = vadd.f32 %v380, %v767
    %v769 = vpop.f32.mrb[0].mxu0
    %770 = vmatprep.mubr.bf16.mxu0 0
    %771 = vmatmul.mubr.bf16.gmra.mrb[0].mxu0 %v620
    %v772 = vpop.f32.mrb[0].mxu0
    %v773 = vadd.f32 %v385, %v772
    %v774 = vpop.f32.mrb[0].mxu0
    %v775 = vpop.f32.mrb[0].mxu0
    %v776 = vadd.f32 %v388, %v775
    %v777 = vpop.f32.mrb[0].mxu0
    %778 = vmatprep.mubr.bf16.mxu0 0
    %779 = vmatmul.mubr.bf16.gmra.mrb[0].mxu0 %v623
    %v780 = vpop.f32.mrb[0].mxu0
    %v781 = vadd.f32 %v393, %v780
    %v782 = vpop.f32.mrb[0].mxu0
    %v783 = vpop.f32.mrb[0].mxu0
    %v784 = vadd.f32 %v396, %v783
    %v785 = vpop.f32.mrb[0].mxu0
    %786 = vmatprep.mubr.bf16.mxu0 0
    %787 = vmatmul.mubr.bf16.gmra.mrb[0].mxu0 %v626
    %v788 = vpop.f32.mrb[0].mxu0
    %v789 = vadd.f32 %v401, %v788
    %v790 = vpop.f32.mrb[0].mxu0
    %v791 = vpop.f32.mrb[0].mxu0
    %v792 = vadd.f32 %v404, %v791
    %v793 = vpop.f32.mrb[0].mxu0
    %794 = vmatprep.mubr.bf16.mxu0 0
    %795 = vmatmul.mubr.bf16.gmra.mrb[0].mxu0 %v629
    %v796 = vpop.f32.mrb[0].mxu0
    %v797 = vadd.f32 %v409, %v796
    %v798 = vpop.f32.mrb[0].mxu0
    %v799 = vpop.f32.mrb[0].mxu0
    %v800 = vadd.f32 %v412, %v799
    %v801 = vpop.f32.mrb[0].mxu0
    %802 = vmatprep.mubr.bf16.mxu0 0
    %803 = vmatmul.mubr.bf16.gmra.mrb[0].mxu0 %v632
    %v804 = vpop.f32.mrb[0].mxu0
    %v805 = vadd.f32 %v417, %v804
    %v806 = vpop.f32.mrb[0].mxu0
    %v807 = vpop.f32.mrb[0].mxu0
    %v808 = vadd.f32 %v420, %v807
    %v809 = vpop.f32.mrb[0].mxu0
    %810 = vmatprep.mubr.bf16.mxu0 0
    %811 = vmatmul.mubr.bf16.gmra.mrb[0].mxu0 %v635
    %v812 = vpop.f32.mrb[0].mxu0
    %v813 = vadd.f32 %v425, %v812
    %v814 = vpop.f32.mrb[0].mxu0
    %v815 = vpop.f32.mrb[0].mxu0
    %v816 = vadd.f32 %v428, %v815
    %v817 = vpop.f32.mrb[0].mxu0
    %818 = vmatprep.mubr.bf16.mxu0 0
    %819 = vmatmul.mubr.bf16.gmra.mrb[0].mxu0 %v638
    %v820 = vpop.f32.mrb[0].mxu0
    %v821 = vadd.f32 %v433, %v820
    %v822 = vpop.f32.mrb[0].mxu0
    %v823 = vpop.f32.mrb[0].mxu0
    %v824 = vadd.f32 %v436, %v823
    %v825 = vpop.f32.mrb[0].mxu0
    %826 = vmatprep.mubr.bf16.mxu0 0
    %827 = vmatmul.mubr.bf16.gmra.mrb[0].mxu0 %v641
    %v828 = vpop.f32.mrb[0].mxu0
    %v829 = vadd.f32 %v441, %v828
    %v830 = vpop.f32.mrb[0].mxu0
    %v831 = vpop.f32.mrb[0].mxu0
    %v832 = vadd.f32 %v444, %v831
    %v833 = vpop.f32.mrb[0].mxu0
    %834 = vmatprep.mubr.bf16.mxu0 0
    %835 = vmatmul.mubr.bf16.gmra.mrb[0].mxu0 %v644
    %v836 = vpop.f32.mrb[0].mxu0
    %v837 = vadd.f32 %v449, %v836
    %v838 = vpop.f32.mrb[0].mxu0
    %v839 = vpop.f32.mrb[0].mxu0
    %v840 = vadd.f32 %v452, %v839
    %v841 = vpop.f32.mrb[0].mxu0
    %842 = vmatprep.mubr.bf16.mxu0 0
    %843 = vmatmul.mubr.bf16.gmra.mrb[0].mxu0 %v647
    %v844 = vpop.f32.mrb[0].mxu0
    %v845 = vadd.f32 %v457, %v844
    %v846 = vpop.f32.mrb[0].mxu0
    %v847 = vpop.f32.mrb[0].mxu0
    %v848 = vadd.f32 %v460, %v847
    %v849 = vpop.f32.mrb[0].mxu0
    %850 = vmatprep.mubr.bf16.mxu0 0
    %851 = vmatmul.mubr.bf16.gmra.mrb[0].mxu0 %v650
    %v852 = vpop.f32.mrb[0].mxu0
    %v853 = vadd.f32 %v465, %v852
    %v854 = vpop.f32.mrb[0].mxu0
    %v855 = vpop.f32.mrb[0].mxu0
    %v856 = vadd.f32 %v468, %v855
    %v857 = vpop.f32.mrb[0].mxu0
    %858 = vmatprep.mubr.bf16.mxu0 0
    %859 = vmatmul.mubr.bf16.gmra.mrb[0].mxu0 %v653
    %v860 = vpop.f32.mrb[0].mxu0
    %v861 = vadd.f32 %v473, %v860
    %v862 = vpop.f32.mrb[0].mxu0
    %v863 = vpop.f32.mrb[0].mxu0
    %v864 = vadd.f32 %v476, %v863
    %v865 = vpop.f32.mrb[0].mxu0
    %866 = vmatprep.mubr.bf16.mxu0 0
    %867 = vmatmul.mubr.bf16.gmra.mrb[0].mxu0 %v656
    %v868 = vpop.f32.mrb[0].mxu0
    %v869 = vadd.f32 %v481, %v868
    %v870 = vpop.f32.mrb[0].mxu0
    %v871 = vpop.f32.mrb[0].mxu0
    %v872 = vadd.f32 %v484, %v871
    %v873 = vpop.f32.mrb[0].mxu0
    %874 = vmatprep.mubr.bf16.mxu0 0
    %875 = vmatmul.mubr.bf16.gmra.mrb[0].mxu0 %v659
    %v876 = vpop.f32.mrb[0].mxu0
    %v877 = vadd.f32 %v489, %v876
    %v878 = vpop.f32.mrb[0].mxu0
    %v879 = vpop.f32.mrb[0].mxu0
    %v880 = vadd.f32 %v492, %v879
    %v881 = vpop.f32.mrb[0].mxu0
    %882 = vmatprep.mubr.bf16.mxu0 0
    %883 = vmatmul.mubr.bf16.gmra.mrb[0].mxu0 %v662
    %v884 = vpop.f32.mrb[0].mxu0
    %v885 = vadd.f32 %v497, %v884
    %v886 = vpop.f32.mrb[0].mxu0
    %v887 = vpop.f32.mrb[0].mxu0
    %v888 = vadd.f32 %v500, %v887
    %v889 = vpop.f32.mrb[0].mxu0
    %890 = vmatprep.mubr.bf16.mxu0 0
    %891 = vmatmul.mubr.bf16.gmra.mrb[0].mxu0 %v665
    %v892 = vpop.f32.mrb[0].mxu0
    %v893 = vadd.f32 %v505, %v892
    %v894 = vpop.f32.mrb[0].mxu0
    %v895 = vpop.f32.mrb[0].mxu0
    %v896 = vadd.f32 %v508, %v895
    %v897 = vpop.f32.mrb[0].mxu0
    %898 = vmatprep.mubr.bf16.mxu0 0
    %899 = vmatmul.mubr.bf16.gmra.mrb[0].mxu0 %v668
    %v900 = vpop.f32.mrb[0].mxu0
    %v901 = vadd.f32 %v513, %v900
    %v902 = vpop.f32.mrb[0].mxu0
    %v903 = vpop.f32.mrb[0].mxu0
    %v904 = vadd.f32 %v516, %v903
    %v905 = vpop.f32.mrb[0].mxu0
    %906 = vmatprep.mubr.bf16.mxu0 0
    %907 = vmatmul.mubr.bf16.gmra.mrb[0].mxu0 %v671
    %v908 = vpop.f32.mrb[0].mxu0
    %v909 = vadd.f32 %v521, %v908
    %v910 = vpop.f32.mrb[0].mxu0
    %v911 = vpop.f32.mrb[0].mxu0
    %v912 = vadd.f32 %v524, %v911
    %v913 = vpop.f32.mrb[0].mxu0
    %914 = vmatprep.mubr.bf16.mxu0 0
    %915 = vmatmul.mubr.bf16.gmra.mrb[0].mxu0 %v674
    %v916 = vpop.f32.mrb[0].mxu0
    %v917 = vadd.f32 %v529, %v916
    %v918 = vpop.f32.mrb[0].mxu0
    %v919 = vpop.f32.mrb[0].mxu0
    %v920 = vadd.f32 %v532, %v919
    %v921 = vpop.f32.mrb[0].mxu0
    %922 = vmatprep.mubr.bf16.mxu0 0
    %923 = vmatmul.mubr.bf16.gmra.mrb[0].mxu0 %v677
    %v924 = vpop.f32.mrb[0].mxu0
    %v925 = vadd.f32 %v537, %v924
    %v926 = vpop.f32.mrb[0].mxu0
    %v927 = vpop.f32.mrb[0].mxu0
    %v928 = vadd.f32 %v540, %v927
    %v929 = vpop.f32.mrb[0].mxu0
    %930 = vmatprep.mubr.bf16.mxu0 0
    %931 = vmatmul.mubr.bf16.gmra.mrb[0].mxu0 %v680
    %v932 = vpop.f32.mrb[0].mxu0
    %v933 = vadd.f32 %v545, %v932
    %v934 = vpop.f32.mrb[0].mxu0
    %v935 = vpop.f32.mrb[0].mxu0
    %v936 = vadd.f32 %v548, %v935
    %v937 = vpop.f32.mrb[0].mxu0
    %938 = vmatprep.mubr.bf16.mxu0 0
    %939 = vmatmul.mubr.bf16.gmra.mrb[0].mxu0 %v683
    %v940 = vpop.f32.mrb[0].mxu0
    %v941 = vadd.f32 %v553, %v940
    %v942 = vpop.f32.mrb[0].mxu0
    %v943 = vpop.f32.mrb[0].mxu0
    %v944 = vadd.f32 %v556, %v943
    %v945 = vpop.f32.mrb[0].mxu0
    %946 = vmatprep.mubr.bf16.mxu0 0
    %947 = vmatmul.mubr.bf16.gmra.mrb[0].mxu0 %v686
    %v948 = vpop.f32.mrb[0].mxu0
    %v949 = vadd.f32 %v561, %v948
    %v950 = vpop.f32.mrb[0].mxu0
    %v951 = vpop.f32.mrb[0].mxu0
    %v952 = vadd.f32 %v564, %v951
    %v953 = vpop.f32.mrb[0].mxu0
    %954 = vmatprep.mubr.bf16.mxu0 0
    %955 = vmatmul.mubr.bf16.gmra.mrb[0].mxu0 %v689
    %v956 = vpop.f32.mrb[0].mxu0
    %v957 = vadd.f32 %v569, %v956
    %v958 = vpop.f32.mrb[0].mxu0
    %v959 = vpop.f32.mrb[0].mxu0
    %v960 = vadd.f32 %v572, %v959
    %v961 = vpop.f32.mrb[0].mxu0
    %962 = vmatprep.mubr.bf16.mxu0 0
    %963 = vmatmul.mubr.bf16.gmra.mrb[0].mxu0 %v692
    %v964 = vpop.f32.mrb[0].mxu0
    %v965 = vadd.f32 %v577, %v964
    %v966 = vpop.f32.mrb[0].mxu0
    %v967 = vpop.f32.mrb[0].mxu0
    %v968 = vadd.f32 %v580, %v967
    %v969 = vpop.f32.mrb[0].mxu0
    %970 = vmatprep.mubr.bf16.mxu0 0
    %971 = vmatmul.mubr.bf16.gmra.mrb[0].mxu0 %v695
    %v972 = vpop.f32.mrb[0].mxu0
    %v973 = vadd.f32 %v585, %v972
    %v974 = vpop.f32.mrb[0].mxu0
    %v975 = vpop.f32.mrb[0].mxu0
    %v976 = vadd.f32 %v588, %v975
    %v977 = vpop.f32.mrb[0].mxu0
    %978 = vmatprep.mubr.bf16.mxu0 0
    %979 = vmatmul.mubr.bf16.gmra.mrb[0].mxu0 %v698
    %v980 = vpop.f32.mrb[0].mxu0
    %v981 = vadd.f32 %v593, %v980
    %v982 = vpop.f32.mrb[0].mxu0
    %v983 = vpop.f32.mrb[0].mxu0
    %v984 = vadd.f32 %v596, %v983
    %v985 = vpop.f32.mrb[0].mxu0
    %986 = vmatprep.mubr.bf16.mxu0 0
    %987 = vmatmul.mubr.bf16.gmra.mrb[0].mxu0 %v701
    %v988 = vpop.f32.mrb[0].mxu0
    %v989 = vadd.f32 %v601, %v988
    %v990 = vpop.f32.mrb[0].mxu0
    %v991 = vpop.f32.mrb[0].mxu0
    %v992 = vadd.f32 %v604, %v991
    %v993 = vpop.f32.mrb[0].mxu0
    %994 = vdwg.mxu0
    %v995 = vld [vmem:[%s0 + $0x2] sm:$0xff]
    %v996 = vld [vmem:[%s0 + $0xa] sm:$0xff]
    %v997 = vld [vmem:[%s0 + $0x1a] sm:$0xff]
    %v998 = vld [vmem:[%s0 + $0x22] sm:$0xff]
    %v999 = vld [vmem:[%s0 + $0x32] sm:$0xff]
    %v1000 = vld [vmem:[%s0 + $0x3a] sm:$0xff]
    %v1001 = vld [vmem:[%s0 + $0x4a] sm:$0xff]
    %v1002 = vld [vmem:[%s0 + $0x52] sm:$0xff]
    %v1003 = vld [vmem:[%s0 + $0x62] sm:$0xff]
    %v1004 = vld [vmem:[%s0 + $0x6a] sm:$0xff]
    %v1005 = vld [vmem:[%s0 + $0x7a] sm:$0xff]
    %v1006 = vld [vmem:[%s0 + $0x82] sm:$0xff]
    %v1007 = vld [vmem:[%s0 + $0x92] sm:$0xff]
    %v1008 = vld [vmem:[%s0 + $0x9a] sm:$0xff]
    %v1009 = vld [vmem:[%s0 + $0xaa] sm:$0xff]
    %v1010 = vld [vmem:[%s0 + $0xb2] sm:$0xff]
    %v1011 = vld [vmem:[%s0 + $0xc2] sm:$0xff]
    %v1012 = vld [vmem:[%s0 + $0xca] sm:$0xff]
    %v1013 = vld [vmem:[%s0 + $0xda] sm:$0xff]
    %v1014 = vld [vmem:[%s0 + $0xe2] sm:$0xff]
    %v1015 = vld [vmem:[%s0 + $0xf2] sm:$0xff]
    %v1016 = vld [vmem:[%s0 + $0xfa] sm:$0xff]
    %v1017 = vld [vmem:[%s0 + $0x10a] sm:$0xff]
    %v1018 = vld [vmem:[%s0 + $0x112] sm:$0xff]
    %v1019 = vld [vmem:[%s0 + $0x122] sm:$0xff]
    %v1020 = vld [vmem:[%s0 + $0x12a] sm:$0xff]
    %v1021 = vld [vmem:[%s0 + $0x13a] sm:$0xff]
    %v1022 = vld [vmem:[%s0 + $0x142] sm:$0xff]
    %v1023 = vld [vmem:[%s0 + $0x152] sm:$0xff]
    %v1024 = vld [vmem:[%s0 + $0x15a] sm:$0xff]
    %v1025 = vld [vmem:[%s0 + $0x16a] sm:$0xff]
    %v1026 = vld [vmem:[%s0 + $0x172] sm:$0xff]
    %v1027 = vld [vmem:[%s0 + $0x1b2] sm:$0xff]
    %v1028 = vld [vmem:[%s0 + $0x1ba] sm:$0xff]
    %v1029 = vld [vmem:[%s0 + $0x1ca] sm:$0xff]
    %v1030 = vld [vmem:[%s0 + $0x1d2] sm:$0xff]
    %v1031 = vld [vmem:[%s0 + $0x1e2] sm:$0xff]
    %v1032 = vld [vmem:[%s0 + $0x1ea] sm:$0xff]
    %v1033 = vld [vmem:[%s0 + $0x1fa] sm:$0xff]
    %v1034 = vld [vmem:[%s0 + $0x202] sm:$0xff]
    %v1035 = vld [vmem:[%s0 + $0x212] sm:$0xff]
    %v1036 = vld [vmem:[%s0 + $0x21a] sm:$0xff]
    %v1037 = vld [vmem:[%s0 + $0x22a] sm:$0xff]
    %v1038 = vld [vmem:[%s0 + $0x232] sm:$0xff]
    %v1039 = vld [vmem:[%s0 + $0x242] sm:$0xff]
    %v1040 = vld [vmem:[%s0 + $0x24a] sm:$0xff]
    %v1041 = vld [vmem:[%s0 + $0x25a] sm:$0xff]
    %v1042 = vld [vmem:[%s0 + $0x262] sm:$0xff]
    %v1043 = vld [vmem:[%s0 + $0x272] sm:$0xff]
    %v1044 = vld [vmem:[%s0 + $0x27a] sm:$0xff]
    %v1045 = vld [vmem:[%s0 + $0x28a] sm:$0xff]
    %v1046 = vld [vmem:[%s0 + $0x292] sm:$0xff]
    %v1047 = vld [vmem:[%s0 + $0x2a2] sm:$0xff]
    %v1048 = vld [vmem:[%s0 + $0x2aa] sm:$0xff]
    %v1049 = vld [vmem:[%s0 + $0x2ba] sm:$0xff]
    %v1050 = vld [vmem:[%s0 + $0x2c2] sm:$0xff]
    %v1051 = vld [vmem:[%s0 + $0x2d2] sm:$0xff]
    %v1052 = vld [vmem:[%s0 + $0x2da] sm:$0xff]
    %v1053 = vld [vmem:[%s0 + $0x2ea] sm:$0xff]
    %v1054 = vld [vmem:[%s0 + $0x2f2] sm:$0xff]
    %v1055 = vld [vmem:[%s0 + $0x302] sm:$0xff]
    %v1056 = vld [vmem:[%s0 + $0x30a] sm:$0xff]
    %v1057 = vld [vmem:[%s0 + $0x31a] sm:$0xff]
    %v1058 = vld [vmem:[%s0 + $0x322] sm:$0xff]
    %v1059 = vpack.c.bf16 %v996, %v995
    %v1060 = vpack.c.bf16 %v998, %v997
    %v1061 = vpack.c.bf16 %v1000, %v999
    %v1062 = vpack.c.bf16 %v1002, %v1001
    %v1063 = vpack.c.bf16 %v1004, %v1003
    %v1064 = vpack.c.bf16 %v1006, %v1005
    %v1065 = vpack.c.bf16 %v1008, %v1007
    %v1066 = vpack.c.bf16 %v1010, %v1009
    %v1067 = vpack.c.bf16 %v1012, %v1011
    %v1068 = vpack.c.bf16 %v1014, %v1013
    %v1069 = vpack.c.bf16 %v1016, %v1015
    %v1070 = vpack.c.bf16 %v1018, %v1017
    %v1071 = vpack.c.bf16 %v1020, %v1019
    %v1072 = vpack.c.bf16 %v1022, %v1021
    %v1073 = vpack.c.bf16 %v1024, %v1023
    %v1074 = vpack.c.bf16 %v1026, %v1025
    %v1075 = vpack.c.bf16 %v1028, %v1027
    %v1076 = vpack.c.bf16 %v1030, %v1029
    %v1077 = vpack.c.bf16 %v1032, %v1031
    %v1078 = vpack.c.bf16 %v1034, %v1033
    %v1079 = vpack.c.bf16 %v1036, %v1035
    %v1080 = vpack.c.bf16 %v1038, %v1037
    %v1081 = vpack.c.bf16 %v1040, %v1039
    %v1082 = vpack.c.bf16 %v1042, %v1041
    %v1083 = vpack.c.bf16 %v1044, %v1043
    %v1084 = vpack.c.bf16 %v1046, %v1045
    %v1085 = vpack.c.bf16 %v1048, %v1047
    %v1086 = vpack.c.bf16 %v1050, %v1049
    %v1087 = vpack.c.bf16 %v1052, %v1051
    %v1088 = vpack.c.bf16 %v1054, %v1053
    %v1089 = vpack.c.bf16 %v1056, %v1055
    %v1090 = vpack.c.bf16 %v1058, %v1057
    %s1091 = scalar_lea.vmem %s1, 4
    %v1092 = vld [vmem:[%s1091] sm:$0x3]
    %v1094 = vsel %vm217, %v1059, 0
    %v1097 = vsel %vm217, %v1060, 0
    %v1100 = vsel %vm217, %v1061, 0
    %v1103 = vsel %vm217, %v1062, 0
    %v1106 = vsel %vm217, %v1063, 0
    %v1109 = vsel %vm217, %v1064, 0
    %v1112 = vsel %vm217, %v1065, 0
    %v1115 = vsel %vm217, %v1066, 0
    %v1118 = vsel %vm217, %v1067, 0
    %v1121 = vsel %vm217, %v1068, 0
    %v1124 = vsel %vm217, %v1069, 0
    %v1127 = vsel %vm217, %v1070, 0
    %v1130 = vsel %vm217, %v1071, 0
    %v1133 = vsel %vm217, %v1072, 0
    %v1136 = vsel %vm217, %v1073, 0
    %v1139 = vsel %vm217, %v1074, 0
    %v1142 = vsel %vm217, %v1075, 0
    %v1145 = vsel %vm217, %v1076, 0
    %v1148 = vsel %vm217, %v1077, 0
    %v1151 = vsel %vm217, %v1078, 0
    %v1154 = vsel %vm217, %v1079, 0
    %v1157 = vsel %vm217, %v1080, 0
    %v1160 = vsel %vm217, %v1081, 0
    %v1163 = vsel %vm217, %v1082, 0
    %v1166 = vsel %vm217, %v1083, 0
    %v1169 = vsel %vm217, %v1084, 0
    %v1172 = vsel %vm217, %v1085, 0
    %v1175 = vsel %vm217, %v1086, 0
    %v1178 = vsel %vm217, %v1087, 0
    %v1181 = vsel %vm217, %v1088, 0
    %v1184 = vsel %vm217, %v1089, 0
    %v1187 = vsel %vm217, %v1090, 0
    %v1190 = vsel %vm314, %v1092, 0
    %1192 = vmatprep.subr.bf16.mxu0 0
    %1193 = vmatpush1.bf16.msra.mxu0 %v1190
    %1194 = vmatprep.subr.bf16.mxu0 0
    %1195 = vmatpush1.bf16.msra.mxu0 0
    %1196 = vmatprep.subr.bf16.mxu0 0
    %1197 = vmatpush1.bf16.msra.mxu0 0
    %1198 = vmatprep.subr.bf16.mxu0 0
    %1199 = vmatpush1.bf16.msra.mxu0 0
    %1200 = vmatprep.subr.bf16.mxu0 0
    %1201 = vmatpush1.bf16.msra.mxu0 0
    %1202 = vmatprep.subr.bf16.mxu0 0
    %1203 = vmatpush1.bf16.msra.mxu0 0
    %1204 = vmatprep.subr.bf16.mxu0 0
    %1205 = vmatpush1.bf16.msra.mxu0 0
    %1206 = vmatprep.subr.bf16.mxu0 0
    %1207 = vmatpush1.bf16.msra.mxu0 0
    %1208 = vmatprep.subr.bf16.mxu0 0
    %1209 = vmatpush1.bf16.msra.mxu0 0
    %1210 = vmatprep.subr.bf16.mxu0 0
    %1211 = vmatpush1.bf16.msra.mxu0 0
    %1212 = vmatprep.subr.bf16.mxu0 0
    %1213 = vmatpush1.bf16.msra.mxu0 0
    %1214 = vmatprep.subr.bf16.mxu0 0
    %1215 = vmatpush1.bf16.msra.mxu0 0
    %1216 = vmatprep.subr.bf16.mxu0 0
    %1217 = vmatpush1.bf16.msra.mxu0 0
    %1218 = vmatprep.subr.bf16.mxu0 0
    %1219 = vmatpush1.bf16.msra.mxu0 0
    %1220 = vmatprep.subr.bf16.mxu0 0
    %1221 = vmatpush1.bf16.msra.mxu0 0
    %1222 = vmatprep.subr.bf16.mxu0 0
    %1223 = vmatpush1.bf16.msra.mxu0 0
    %1224 = vmatprep.mubr.bf16.mxu0 0
    %1225 = vmatmul.mubr.bf16.gmra.mrb[0].mxu0 %v1094
    %v1226 = vpop.f32.mrb[0].mxu0
    %v1227 = vadd.f32 0.0, %v1226
    %v1228 = vpop.f32.mrb[0].mxu0
    %v1229 = vpop.f32.mrb[0].mxu0
    %v1230 = vadd.f32 0.0, %v1229
    %v1231 = vpop.f32.mrb[0].mxu0
    %1232 = vmatprep.mubr.bf16.mxu0 0
    %1233 = vmatmul.mubr.bf16.gmra.mrb[0].mxu0 %v1097
    %v1234 = vpop.f32.mrb[0].mxu0
    %v1235 = vadd.f32 0.0, %v1234
    %v1236 = vpop.f32.mrb[0].mxu0
    %v1237 = vpop.f32.mrb[0].mxu0
    %v1238 = vadd.f32 0.0, %v1237
    %v1239 = vpop.f32.mrb[0].mxu0
    %1240 = vmatprep.mubr.bf16.mxu0 0
    %1241 = vmatmul.mubr.bf16.gmra.mrb[0].mxu0 %v1100
    %v1242 = vpop.f32.mrb[0].mxu0
    %v1243 = vadd.f32 0.0, %v1242
    %v1244 = vpop.f32.mrb[0].mxu0
    %v1245 = vpop.f32.mrb[0].mxu0
    %v1246 = vadd.f32 0.0, %v1245
    %v1247 = vpop.f32.mrb[0].mxu0
    %1248 = vmatprep.mubr.bf16.mxu0 0
    %1249 = vmatmul.mubr.bf16.gmra.mrb[0].mxu0 %v1103
    %v1250 = vpop.f32.mrb[0].mxu0
    %v1251 = vadd.f32 0.0, %v1250
    %v1252 = vpop.f32.mrb[0].mxu0
    %v1253 = vpop.f32.mrb[0].mxu0
    %v1254 = vadd.f32 0.0, %v1253
    %v1255 = vpop.f32.mrb[0].mxu0
    %1256 = vmatprep.mubr.bf16.mxu0 0
    %1257 = vmatmul.mubr.bf16.gmra.mrb[0].mxu0 %v1106
    %v1258 = vpop.f32.mrb[0].mxu0
    %v1259 = vadd.f32 0.0, %v1258
    %v1260 = vpop.f32.mrb[0].mxu0
    %v1261 = vpop.f32.mrb[0].mxu0
    %v1262 = vadd.f32 0.0, %v1261
    %v1263 = vpop.f32.mrb[0].mxu0
    %1264 = vmatprep.mubr.bf16.mxu0 0
    %1265 = vmatmul.mubr.bf16.gmra.mrb[0].mxu0 %v1109
    %v1266 = vpop.f32.mrb[0].mxu0
    %v1267 = vadd.f32 0.0, %v1266
    %v1268 = vpop.f32.mrb[0].mxu0
    %v1269 = vpop.f32.mrb[0].mxu0
    %v1270 = vadd.f32 0.0, %v1269
    %v1271 = vpop.f32.mrb[0].mxu0
    %1272 = vmatprep.mubr.bf16.mxu0 0
    %1273 = vmatmul.mubr.bf16.gmra.mrb[0].mxu0 %v1112
    %v1274 = vpop.f32.mrb[0].mxu0
    %v1275 = vadd.f32 0.0, %v1274
    %v1276 = vpop.f32.mrb[0].mxu0
    %v1277 = vpop.f32.mrb[0].mxu0
    %v1278 = vadd.f32 0.0, %v1277
    %v1279 = vpop.f32.mrb[0].mxu0
    %1280 = vmatprep.mubr.bf16.mxu0 0
    %1281 = vmatmul.mubr.bf16.gmra.mrb[0].mxu0 %v1115
    %v1282 = vpop.f32.mrb[0].mxu0
    %v1283 = vadd.f32 0.0, %v1282
    %v1284 = vpop.f32.mrb[0].mxu0
    %v1285 = vpop.f32.mrb[0].mxu0
    %v1286 = vadd.f32 0.0, %v1285
    %v1287 = vpop.f32.mrb[0].mxu0
    %1288 = vmatprep.mubr.bf16.mxu0 0
    %1289 = vmatmul.mubr.bf16.gmra.mrb[0].mxu0 %v1118
    %v1290 = vpop.f32.mrb[0].mxu0
    %v1291 = vadd.f32 0.0, %v1290
    %v1292 = vpop.f32.mrb[0].mxu0
    %v1293 = vpop.f32.mrb[0].mxu0
    %v1294 = vadd.f32 0.0, %v1293
    %v1295 = vpop.f32.mrb[0].mxu0
    %1296 = vmatprep.mubr.bf16.mxu0 0
    %1297 = vmatmul.mubr.bf16.gmra.mrb[0].mxu0 %v1121
    %v1298 = vpop.f32.mrb[0].mxu0
    %v1299 = vadd.f32 0.0, %v1298
    %v1300 = vpop.f32.mrb[0].mxu0
    %v1301 = vpop.f32.mrb[0].mxu0
    %v1302 = vadd.f32 0.0, %v1301
    %v1303 = vpop.f32.mrb[0].mxu0
    %1304 = vmatprep.mubr.bf16.mxu0 0
    %1305 = vmatmul.mubr.bf16.gmra.mrb[0].mxu0 %v1124
    %v1306 = vpop.f32.mrb[0].mxu0
    %v1307 = vadd.f32 0.0, %v1306
    %v1308 = vpop.f32.mrb[0].mxu0
    %v1309 = vpop.f32.mrb[0].mxu0
    %v1310 = vadd.f32 0.0, %v1309
    %v1311 = vpop.f32.mrb[0].mxu0
    %1312 = vmatprep.mubr.bf16.mxu0 0
    %1313 = vmatmul.mubr.bf16.gmra.mrb[0].mxu0 %v1127
    %v1314 = vpop.f32.mrb[0].mxu0
    %v1315 = vadd.f32 0.0, %v1314
    %v1316 = vpop.f32.mrb[0].mxu0
    %v1317 = vpop.f32.mrb[0].mxu0
    %v1318 = vadd.f32 0.0, %v1317
    %v1319 = vpop.f32.mrb[0].mxu0
    %1320 = vmatprep.mubr.bf16.mxu0 0
    %1321 = vmatmul.mubr.bf16.gmra.mrb[0].mxu0 %v1130
    %v1322 = vpop.f32.mrb[0].mxu0
    %v1323 = vadd.f32 0.0, %v1322
    %v1324 = vpop.f32.mrb[0].mxu0
    %v1325 = vpop.f32.mrb[0].mxu0
    %v1326 = vadd.f32 0.0, %v1325
    %v1327 = vpop.f32.mrb[0].mxu0
    %1328 = vmatprep.mubr.bf16.mxu0 0
    %1329 = vmatmul.mubr.bf16.gmra.mrb[0].mxu0 %v1133
    %v1330 = vpop.f32.mrb[0].mxu0
    %v1331 = vadd.f32 0.0, %v1330
    %v1332 = vpop.f32.mrb[0].mxu0
    %v1333 = vpop.f32.mrb[0].mxu0
    %v1334 = vadd.f32 0.0, %v1333
    %v1335 = vpop.f32.mrb[0].mxu0
    %1336 = vmatprep.mubr.bf16.mxu0 0
    %1337 = vmatmul.mubr.bf16.gmra.mrb[0].mxu0 %v1136
    %v1338 = vpop.f32.mrb[0].mxu0
    %v1339 = vadd.f32 0.0, %v1338
    %v1340 = vpop.f32.mrb[0].mxu0
    %v1341 = vpop.f32.mrb[0].mxu0
    %v1342 = vadd.f32 0.0, %v1341
    %v1343 = vpop.f32.mrb[0].mxu0
    %1344 = vmatprep.mubr.bf16.mxu0 0
    %1345 = vmatmul.mubr.bf16.gmra.mrb[0].mxu0 %v1139
    %v1346 = vpop.f32.mrb[0].mxu0
    %v1347 = vadd.f32 0.0, %v1346
    %v1348 = vpop.f32.mrb[0].mxu0
    %v1349 = vpop.f32.mrb[0].mxu0
    %v1350 = vadd.f32 0.0, %v1349
    %v1351 = vpop.f32.mrb[0].mxu0
    %1352 = vmatprep.mubr.bf16.mxu0 0
    %1353 = vmatmul.mubr.bf16.gmra.mrb[0].mxu0 %v1142
    %v1354 = vpop.f32.mrb[0].mxu0
    %v1355 = vadd.f32 0.0, %v1354
    %v1356 = vpop.f32.mrb[0].mxu0
    %v1357 = vpop.f32.mrb[0].mxu0
    %v1358 = vadd.f32 0.0, %v1357
    %v1359 = vpop.f32.mrb[0].mxu0
    %1360 = vmatprep.mubr.bf16.mxu0 0
    %1361 = vmatmul.mubr.bf16.gmra.mrb[0].mxu0 %v1145
    %v1362 = vpop.f32.mrb[0].mxu0
    %v1363 = vadd.f32 0.0, %v1362
    %v1364 = vpop.f32.mrb[0].mxu0
    %v1365 = vpop.f32.mrb[0].mxu0
    %v1366 = vadd.f32 0.0, %v1365
    %v1367 = vpop.f32.mrb[0].mxu0
    %1368 = vmatprep.mubr.bf16.mxu0 0
    %1369 = vmatmul.mubr.bf16.gmra.mrb[0].mxu0 %v1148
    %v1370 = vpop.f32.mrb[0].mxu0
    %v1371 = vadd.f32 0.0, %v1370
    %v1372 = vpop.f32.mrb[0].mxu0
    %v1373 = vpop.f32.mrb[0].mxu0
    %v1374 = vadd.f32 0.0, %v1373
    %v1375 = vpop.f32.mrb[0].mxu0
    %1376 = vmatprep.mubr.bf16.mxu0 0
    %1377 = vmatmul.mubr.bf16.gmra.mrb[0].mxu0 %v1151
    %v1378 = vpop.f32.mrb[0].mxu0
    %v1379 = vadd.f32 0.0, %v1378
    %v1380 = vpop.f32.mrb[0].mxu0
    %v1381 = vpop.f32.mrb[0].mxu0
    %v1382 = vadd.f32 0.0, %v1381
    %v1383 = vpop.f32.mrb[0].mxu0
    %1384 = vmatprep.mubr.bf16.mxu0 0
    %1385 = vmatmul.mubr.bf16.gmra.mrb[0].mxu0 %v1154
    %v1386 = vpop.f32.mrb[0].mxu0
    %v1387 = vadd.f32 0.0, %v1386
    %v1388 = vpop.f32.mrb[0].mxu0
    %v1389 = vpop.f32.mrb[0].mxu0
    %v1390 = vadd.f32 0.0, %v1389
    %v1391 = vpop.f32.mrb[0].mxu0
    %1392 = vmatprep.mubr.bf16.mxu0 0
    %1393 = vmatmul.mubr.bf16.gmra.mrb[0].mxu0 %v1157
    %v1394 = vpop.f32.mrb[0].mxu0
    %v1395 = vadd.f32 0.0, %v1394
    %v1396 = vpop.f32.mrb[0].mxu0
    %v1397 = vpop.f32.mrb[0].mxu0
    %v1398 = vadd.f32 0.0, %v1397
    %v1399 = vpop.f32.mrb[0].mxu0
    %1400 = vmatprep.mubr.bf16.mxu0 0
    %1401 = vmatmul.mubr.bf16.gmra.mrb[0].mxu0 %v1160
    %v1402 = vpop.f32.mrb[0].mxu0
    %v1403 = vadd.f32 0.0, %v1402
    %v1404 = vpop.f32.mrb[0].mxu0
    %v1405 = vpop.f32.mrb[0].mxu0
    %v1406 = vadd.f32 0.0, %v1405
    %v1407 = vpop.f32.mrb[0].mxu0
    %1408 = vmatprep.mubr.bf16.mxu0 0
    %1409 = vmatmul.mubr.bf16.gmra.mrb[0].mxu0 %v1163
    %v1410 = vpop.f32.mrb[0].mxu0
    %v1411 = vadd.f32 0.0, %v1410
    %v1412 = vpop.f32.mrb[0].mxu0
    %v1413 = vpop.f32.mrb[0].mxu0
    %v1414 = vadd.f32 0.0, %v1413
    %v1415 = vpop.f32.mrb[0].mxu0
    %1416 = vmatprep.mubr.bf16.mxu0 0
    %1417 = vmatmul.mubr.bf16.gmra.mrb[0].mxu0 %v1166
    %v1418 = vpop.f32.mrb[0].mxu0
    %v1419 = vadd.f32 0.0, %v1418
    %v1420 = vpop.f32.mrb[0].mxu0
    %v1421 = vpop.f32.mrb[0].mxu0
    %v1422 = vadd.f32 0.0, %v1421
    %v1423 = vpop.f32.mrb[0].mxu0
    %1424 = vmatprep.mubr.bf16.mxu0 0
    %1425 = vmatmul.mubr.bf16.gmra.mrb[0].mxu0 %v1169
    %v1426 = vpop.f32.mrb[0].mxu0
    %v1427 = vadd.f32 0.0, %v1426
    %v1428 = vpop.f32.mrb[0].mxu0
    %v1429 = vpop.f32.mrb[0].mxu0
    %v1430 = vadd.f32 0.0, %v1429
    %v1431 = vpop.f32.mrb[0].mxu0
    %1432 = vmatprep.mubr.bf16.mxu0 0
    %1433 = vmatmul.mubr.bf16.gmra.mrb[0].mxu0 %v1172
    %v1434 = vpop.f32.mrb[0].mxu0
    %v1435 = vadd.f32 0.0, %v1434
    %v1436 = vpop.f32.mrb[0].mxu0
    %v1437 = vpop.f32.mrb[0].mxu0
    %v1438 = vadd.f32 0.0, %v1437
    %v1439 = vpop.f32.mrb[0].mxu0
    %1440 = vmatprep.mubr.bf16.mxu0 0
    %1441 = vmatmul.mubr.bf16.gmra.mrb[0].mxu0 %v1175
    %v1442 = vpop.f32.mrb[0].mxu0
    %v1443 = vadd.f32 0.0, %v1442
    %v1444 = vpop.f32.mrb[0].mxu0
    %v1445 = vpop.f32.mrb[0].mxu0
    %v1446 = vadd.f32 0.0, %v1445
    %v1447 = vpop.f32.mrb[0].mxu0
    %1448 = vmatprep.mubr.bf16.mxu0 0
    %1449 = vmatmul.mubr.bf16.gmra.mrb[0].mxu0 %v1178
    %v1450 = vpop.f32.mrb[0].mxu0
    %v1451 = vadd.f32 0.0, %v1450
    %v1452 = vpop.f32.mrb[0].mxu0
    %v1453 = vpop.f32.mrb[0].mxu0
    %v1454 = vadd.f32 0.0, %v1453
    %v1455 = vpop.f32.mrb[0].mxu0
    %1456 = vmatprep.mubr.bf16.mxu0 0
    %1457 = vmatmul.mubr.bf16.gmra.mrb[0].mxu0 %v1181
    %v1458 = vpop.f32.mrb[0].mxu0
    %v1459 = vadd.f32 0.0, %v1458
    %v1460 = vpop.f32.mrb[0].mxu0
    %v1461 = vpop.f32.mrb[0].mxu0
    %v1462 = vadd.f32 0.0, %v1461
    %v1463 = vpop.f32.mrb[0].mxu0
    %1464 = vmatprep.mubr.bf16.mxu0 0
    %1465 = vmatmul.mubr.bf16.gmra.mrb[0].mxu0 %v1184
    %v1466 = vpop.f32.mrb[0].mxu0
    %v1467 = vadd.f32 0.0, %v1466
    %v1468 = vpop.f32.mrb[0].mxu0
    %v1469 = vpop.f32.mrb[0].mxu0
    %v1470 = vadd.f32 0.0, %v1469
    %v1471 = vpop.f32.mrb[0].mxu0
    %1472 = vmatprep.mubr.bf16.mxu0 0
    %1473 = vmatmul.mubr.bf16.gmra.mrb[0].mxu0 %v1187
    %v1474 = vpop.f32.mrb[0].mxu0
    %v1475 = vadd.f32 0.0, %v1474
    %v1476 = vpop.f32.mrb[0].mxu0
    %v1477 = vpop.f32.mrb[0].mxu0
    %v1478 = vadd.f32 0.0, %v1477
    %v1479 = vpop.f32.mrb[0].mxu0
    %1480 = vdwg.mxu0
    %v1481 = vadd.f32 %v741, %v1227
    %v1482 = vadd.f32 %v744, %v1230
    %v1483 = vadd.f32 %v749, %v1235
    %v1484 = vadd.f32 %v752, %v1238
    %v1485 = vadd.f32 %v757, %v1243
    %v1486 = vadd.f32 %v760, %v1246
    %v1487 = vadd.f32 %v765, %v1251
    %v1488 = vadd.f32 %v768, %v1254
    %v1489 = vadd.f32 %v773, %v1259
    %v1490 = vadd.f32 %v776, %v1262
    %v1491 = vadd.f32 %v781, %v1267
    %v1492 = vadd.f32 %v784, %v1270
    %v1493 = vadd.f32 %v789, %v1275
    %v1494 = vadd.f32 %v792, %v1278
    %v1495 = vadd.f32 %v797, %v1283
    %v1496 = vadd.f32 %v800, %v1286
    %v1497 = vadd.f32 %v805, %v1291
    %v1498 = vadd.f32 %v808, %v1294
    %v1499 = vadd.f32 %v813, %v1299
    %v1500 = vadd.f32 %v816, %v1302
    %v1501 = vadd.f32 %v821, %v1307
    %v1502 = vadd.f32 %v824, %v1310
    %v1503 = vadd.f32 %v829, %v1315
    %v1504 = vadd.f32 %v832, %v1318
    %v1505 = vadd.f32 %v837, %v1323
    %v1506 = vadd.f32 %v840, %v1326
    %v1507 = vadd.f32 %v845, %v1331
    %v1508 = vadd.f32 %v848, %v1334
    %v1509 = vadd.f32 %v853, %v1339
    %v1510 = vadd.f32 %v856, %v1342
    %v1511 = vadd.f32 %v861, %v1347
    %v1512 = vadd.f32 %v864, %v1350
    %v1513 = vadd.f32 %v869, %v1355
    %v1514 = vadd.f32 %v872, %v1358
    %v1515 = vadd.f32 %v877, %v1363
    %v1516 = vadd.f32 %v880, %v1366
    %v1517 = vadd.f32 %v885, %v1371
    %v1518 = vadd.f32 %v888, %v1374
    %v1519 = vadd.f32 %v893, %v1379
    %v1520 = vadd.f32 %v896, %v1382
    %v1521 = vadd.f32 %v901, %v1387
    %v1522 = vadd.f32 %v904, %v1390
    %v1523 = vadd.f32 %v909, %v1395
    %v1524 = vadd.f32 %v912, %v1398
    %v1525 = vadd.f32 %v917, %v1403
    %v1526 = vadd.f32 %v920, %v1406
    %v1527 = vadd.f32 %v925, %v1411
    %v1528 = vadd.f32 %v928, %v1414
    %v1529 = vadd.f32 %v933, %v1419
    %v1530 = vadd.f32 %v936, %v1422
    %v1531 = vadd.f32 %v941, %v1427
    %v1532 = vadd.f32 %v944, %v1430
    %v1533 = vadd.f32 %v949, %v1435
    %v1534 = vadd.f32 %v952, %v1438
    %v1535 = vadd.f32 %v957, %v1443
    %v1536 = vadd.f32 %v960, %v1446
    %v1537 = vadd.f32 %v965, %v1451
    %v1538 = vadd.f32 %v968, %v1454
    %v1539 = vadd.f32 %v973, %v1459
    %v1540 = vadd.f32 %v976, %v1462
    %v1541 = vadd.f32 %v981, %v1467
    %v1542 = vadd.f32 %v984, %v1470
    %v1543 = vadd.f32 %v989, %v1475
    %v1544 = vadd.f32 %v992, %v1478
    %s1545 = scalar_lea.vmem %s0, 24
    %v1546 = vld [vmem:[%s1545] sm:$0xff]
    %v1547 = vld [vmem:[%s1545 + $0x8] sm:$0xff]
    %v1548 = vld [vmem:[%s1545 + $0x18] sm:$0xff]
    %v1549 = vld [vmem:[%s1545 + $0x20] sm:$0xff]
    %v1550 = vld [vmem:[%s1545 + $0x30] sm:$0xff]
    %v1551 = vld [vmem:[%s1545 + $0x38] sm:$0xff]
    %v1552 = vld [vmem:[%s1545 + $0x48] sm:$0xff]
    %v1553 = vld [vmem:[%s1545 + $0x50] sm:$0xff]
    %v1554 = vld [vmem:[%s1545 + $0x60] sm:$0xff]
    %v1555 = vld [vmem:[%s1545 + $0x68] sm:$0xff]
    %v1556 = vld [vmem:[%s1545 + $0x78] sm:$0xff]
    %v1557 = vld [vmem:[%s1545 + $0x80] sm:$0xff]
    %v1558 = vld [vmem:[%s1545 + $0x90] sm:$0xff]
    %v1559 = vld [vmem:[%s1545 + $0x98] sm:$0xff]
    %v1560 = vld [vmem:[%s1545 + $0xa8] sm:$0xff]
    %v1561 = vld [vmem:[%s1545 + $0xb0] sm:$0xff]
    %v1562 = vld [vmem:[%s1545 + $0xc0] sm:$0xff]
    %v1563 = vld [vmem:[%s1545 + $0xc8] sm:$0xff]
    %v1564 = vld [vmem:[%s1545 + $0xd8] sm:$0xff]
    %v1565 = vld [vmem:[%s1545 + $0xe0] sm:$0xff]
    %v1566 = vld [vmem:[%s1545 + $0xf0] sm:$0xff]
    %v1567 = vld [vmem:[%s1545 + $0xf8] sm:$0xff]
    %v1568 = vld [vmem:[%s1545 + $0x108] sm:$0xff]
    %v1569 = vld [vmem:[%s1545 + $0x110] sm:$0xff]
    %v1570 = vld [vmem:[%s1545 + $0x120] sm:$0xff]
    %v1571 = vld [vmem:[%s1545 + $0x128] sm:$0xff]
    %v1572 = vld [vmem:[%s1545 + $0x138] sm:$0xff]
    %v1573 = vld [vmem:[%s1545 + $0x140] sm:$0xff]
    %v1574 = vld [vmem:[%s1545 + $0x150] sm:$0xff]
    %v1575 = vld [vmem:[%s1545 + $0x158] sm:$0xff]
    %v1576 = vld [vmem:[%s1545 + $0x168] sm:$0xff]
    %v1577 = vld [vmem:[%s1545 + $0x170] sm:$0xff]
    %v1578 = vld [vmem:[%s1545 + $0x1b0] sm:$0xff]
    %v1579 = vld [vmem:[%s1545 + $0x1b8] sm:$0xff]
    %v1580 = vld [vmem:[%s1545 + $0x1c8] sm:$0xff]
    %v1581 = vld [vmem:[%s1545 + $0x1d0] sm:$0xff]
    %v1582 = vld [vmem:[%s1545 + $0x1e0] sm:$0xff]
    %v1583 = vld [vmem:[%s1545 + $0x1e8] sm:$0xff]
    %v1584 = vld [vmem:[%s1545 + $0x1f8] sm:$0xff]
    %v1585 = vld [vmem:[%s1545 + $0x200] sm:$0xff]
    %v1586 = vld [vmem:[%s1545 + $0x210] sm:$0xff]
    %v1587 = vld [vmem:[%s1545 + $0x218] sm:$0xff]
    %v1588 = vld [vmem:[%s1545 + $0x228] sm:$0xff]
    %v1589 = vld [vmem:[%s1545 + $0x230] sm:$0xff]
    %v1590 = vld [vmem:[%s1545 + $0x240] sm:$0xff]
    %v1591 = vld [vmem:[%s1545 + $0x248] sm:$0xff]
    %v1592 = vld [vmem:[%s1545 + $0x258] sm:$0xff]
    %v1593 = vld [vmem:[%s1545 + $0x260] sm:$0xff]
    %v1594 = vld [vmem:[%s1545 + $0x270] sm:$0xff]
    %v1595 = vld [vmem:[%s1545 + $0x278] sm:$0xff]
    %v1596 = vld [vmem:[%s1545 + $0x288] sm:$0xff]
    %v1597 = vld [vmem:[%s1545 + $0x290] sm:$0xff]
    %v1598 = vld [vmem:[%s1545 + $0x2a0] sm:$0xff]
    %v1599 = vld [vmem:[%s1545 + $0x2a8] sm:$0xff]
    %v1600 = vld [vmem:[%s1545 + $0x2b8] sm:$0xff]
    %v1601 = vld [vmem:[%s1545 + $0x2c0] sm:$0xff]
    %v1602 = vld [vmem:[%s1545 + $0x2d0] sm:$0xff]
    %v1603 = vld [vmem:[%s1545 + $0x2d8] sm:$0xff]
    %v1604 = vld [vmem:[%s1545 + $0x2e8] sm:$0xff]
    %v1605 = vld [vmem:[%s1545 + $0x2f0] sm:$0xff]
    %v1606 = vld [vmem:[%s1545 + $0x300] sm:$0xff]
    %v1607 = vld [vmem:[%s1545 + $0x308] sm:$0xff]
    %v1608 = vld [vmem:[%s1545 + $0x318] sm:$0xff]
    %v1609 = vld [vmem:[%s1545 + $0x320] sm:$0xff]
    %v1610 = vpack.c.bf16 %v1547, %v1546
    %v1611 = vpack.c.bf16 %v1549, %v1548
    %v1612 = vpack.c.bf16 %v1551, %v1550
    %v1613 = vpack.c.bf16 %v1553, %v1552
    %v1614 = vpack.c.bf16 %v1555, %v1554
    %v1615 = vpack.c.bf16 %v1557, %v1556
    %v1616 = vpack.c.bf16 %v1559, %v1558
    %v1617 = vpack.c.bf16 %v1561, %v1560
    %v1618 = vpack.c.bf16 %v1563, %v1562
    %v1619 = vpack.c.bf16 %v1565, %v1564
    %v1620 = vpack.c.bf16 %v1567, %v1566
    %v1621 = vpack.c.bf16 %v1569, %v1568
    %v1622 = vpack.c.bf16 %v1571, %v1570
    %v1623 = vpack.c.bf16 %v1573, %v1572
    %v1624 = vpack.c.bf16 %v1575, %v1574
    %v1625 = vpack.c.bf16 %v1577, %v1576
    %v1626 = vpack.c.bf16 %v1579, %v1578
    %v1627 = vpack.c.bf16 %v1581, %v1580
    %v1628 = vpack.c.bf16 %v1583, %v1582
    %v1629 = vpack.c.bf16 %v1585, %v1584
    %v1630 = vpack.c.bf16 %v1587, %v1586
    %v1631 = vpack.c.bf16 %v1589, %v1588
    %v1632 = vpack.c.bf16 %v1591, %v1590
    %v1633 = vpack.c.bf16 %v1593, %v1592
    %v1634 = vpack.c.bf16 %v1595, %v1594
    %v1635 = vpack.c.bf16 %v1597, %v1596
    %v1636 = vpack.c.bf16 %v1599, %v1598
    %v1637 = vpack.c.bf16 %v1601, %v1600
    %v1638 = vpack.c.bf16 %v1603, %v1602
    %v1639 = vpack.c.bf16 %v1605, %v1604
    %v1640 = vpack.c.bf16 %v1607, %v1606
    %v1641 = vpack.c.bf16 %v1609, %v1608
    %s1642 = scalar_lea.vmem %s1, 6
    %v1643 = vld [vmem:[%s1642] sm:$0x3]
    %v1645 = vsel %vm217, %v1610, 0
    %v1648 = vsel %vm217, %v1611, 0
    %v1651 = vsel %vm217, %v1612, 0
    %v1654 = vsel %vm217, %v1613, 0
    %v1657 = vsel %vm217, %v1614, 0
    %v1660 = vsel %vm217, %v1615, 0
    %v1663 = vsel %vm217, %v1616, 0
    %v1666 = vsel %vm217, %v1617, 0
    %v1669 = vsel %vm217, %v1618, 0
    %v1672 = vsel %vm217, %v1619, 0
    %v1675 = vsel %vm217, %v1620, 0
    %v1678 = vsel %vm217, %v1621, 0
    %v1681 = vsel %vm217, %v1622, 0
    %v1684 = vsel %vm217, %v1623, 0
    %v1687 = vsel %vm217, %v1624, 0
    %v1690 = vsel %vm217, %v1625, 0
    %v1693 = vsel %vm217, %v1626, 0
    %v1696 = vsel %vm217, %v1627, 0
    %v1699 = vsel %vm217, %v1628, 0
    %v1702 = vsel %vm217, %v1629, 0
    %v1705 = vsel %vm217, %v1630, 0
    %v1708 = vsel %vm217, %v1631, 0
    %v1711 = vsel %vm217, %v1632, 0
    %v1714 = vsel %vm217, %v1633, 0
    %v1717 = vsel %vm217, %v1634, 0
    %v1720 = vsel %vm217, %v1635, 0
    %v1723 = vsel %vm217, %v1636, 0
    %v1726 = vsel %vm217, %v1637, 0
    %v1729 = vsel %vm217, %v1638, 0
    %v1732 = vsel %vm217, %v1639, 0
    %v1735 = vsel %vm217, %v1640, 0
    %v1738 = vsel %vm217, %v1641, 0
    %v1741 = vsel %vm314, %v1643, 0
    %1743 = vmatprep.subr.bf16.mxu0 0
    %1744 = vmatpush1.bf16.msra.mxu0 %v1741
    %1745 = vmatprep.subr.bf16.mxu0 0
    %1746 = vmatpush1.bf16.msra.mxu0 0
    %1747 = vmatprep.subr.bf16.mxu0 0
    %1748 = vmatpush1.bf16.msra.mxu0 0
    %1749 = vmatprep.subr.bf16.mxu0 0
    %1750 = vmatpush1.bf16.msra.mxu0 0
    %1751 = vmatprep.subr.bf16.mxu0 0
    %1752 = vmatpush1.bf16.msra.mxu0 0
    %1753 = vmatprep.subr.bf16.mxu0 0
    %1754 = vmatpush1.bf16.msra.mxu0 0
    %1755 = vmatprep.subr.bf16.mxu0 0
    %1756 = vmatpush1.bf16.msra.mxu0 0
    %1757 = vmatprep.subr.bf16.mxu0 0
    %1758 = vmatpush1.bf16.msra.mxu0 0
    %1759 = vmatprep.subr.bf16.mxu0 0
    %1760 = vmatpush1.bf16.msra.mxu0 0
    %1761 = vmatprep.subr.bf16.mxu0 0
    %1762 = vmatpush1.bf16.msra.mxu0 0
    %1763 = vmatprep.subr.bf16.mxu0 0
    %1764 = vmatpush1.bf16.msra.mxu0 0
    %1765 = vmatprep.subr.bf16.mxu0 0
    %1766 = vmatpush1.bf16.msra.mxu0 0
    %1767 = vmatprep.subr.bf16.mxu0 0
    %1768 = vmatpush1.bf16.msra.mxu0 0
    %1769 = vmatprep.subr.bf16.mxu0 0
    %1770 = vmatpush1.bf16.msra.mxu0 0
    %1771 = vmatprep.subr.bf16.mxu0 0
    %1772 = vmatpush1.bf16.msra.mxu0 0
    %1773 = vmatprep.subr.bf16.mxu0 0
    %1774 = vmatpush1.bf16.msra.mxu0 0
    %1775 = vmatprep.mubr.bf16.mxu0 0
    %1776 = vmatmul.mubr.bf16.gmra.mrb[0].mxu0 %v1645
    %v1777 = vpop.f32.mrb[0].mxu0
    %v1778 = vadd.f32 0.0, %v1777
    %v1779 = vpop.f32.mrb[0].mxu0
    %v1780 = vpop.f32.mrb[0].mxu0
    %v1781 = vadd.f32 0.0, %v1780
    %v1782 = vpop.f32.mrb[0].mxu0
    %1783 = vmatprep.mubr.bf16.mxu0 0
    %1784 = vmatmul.mubr.bf16.gmra.mrb[0].mxu0 %v1648
    %v1785 = vpop.f32.mrb[0].mxu0
    %v1786 = vadd.f32 0.0, %v1785
    %v1787 = vpop.f32.mrb[0].mxu0
    %v1788 = vpop.f32.mrb[0].mxu0
    %v1789 = vadd.f32 0.0, %v1788
    %v1790 = vpop.f32.mrb[0].mxu0
    %1791 = vmatprep.mubr.bf16.mxu0 0
    %1792 = vmatmul.mubr.bf16.gmra.mrb[0].mxu0 %v1651
    %v1793 = vpop.f32.mrb[0].mxu0
    %v1794 = vadd.f32 0.0, %v1793
    %v1795 = vpop.f32.mrb[0].mxu0
    %v1796 = vpop.f32.mrb[0].mxu0
    %v1797 = vadd.f32 0.0, %v1796
    %v1798 = vpop.f32.mrb[0].mxu0
    %1799 = vmatprep.mubr.bf16.mxu0 0
    %1800 = vmatmul.mubr.bf16.gmra.mrb[0].mxu0 %v1654
    %v1801 = vpop.f32.mrb[0].mxu0
    %v1802 = vadd.f32 0.0, %v1801
    %v1803 = vpop.f32.mrb[0].mxu0
    %v1804 = vpop.f32.mrb[0].mxu0
    %v1805 = vadd.f32 0.0, %v1804
    %v1806 = vpop.f32.mrb[0].mxu0
    %1807 = vmatprep.mubr.bf16.mxu0 0
    %1808 = vmatmul.mubr.bf16.gmra.mrb[0].mxu0 %v1657
    %v1809 = vpop.f32.mrb[0].mxu0
    %v1810 = vadd.f32 0.0, %v1809
    %v1811 = vpop.f32.mrb[0].mxu0
    %v1812 = vpop.f32.mrb[0].mxu0
    %v1813 = vadd.f32 0.0, %v1812
    %v1814 = vpop.f32.mrb[0].mxu0
    %1815 = vmatprep.mubr.bf16.mxu0 0
    %1816 = vmatmul.mubr.bf16.gmra.mrb[0].mxu0 %v1660
    %v1817 = vpop.f32.mrb[0].mxu0
    %v1818 = vadd.f32 0.0, %v1817
    %v1819 = vpop.f32.mrb[0].mxu0
    %v1820 = vpop.f32.mrb[0].mxu0
    %v1821 = vadd.f32 0.0, %v1820
    %v1822 = vpop.f32.mrb[0].mxu0
    %1823 = vmatprep.mubr.bf16.mxu0 0
    %1824 = vmatmul.mubr.bf16.gmra.mrb[0].mxu0 %v1663
    %v1825 = vpop.f32.mrb[0].mxu0
    %v1826 = vadd.f32 0.0, %v1825
    %v1827 = vpop.f32.mrb[0].mxu0
    %v1828 = vpop.f32.mrb[0].mxu0
    %v1829 = vadd.f32 0.0, %v1828
    %v1830 = vpop.f32.mrb[0].mxu0
    %1831 = vmatprep.mubr.bf16.mxu0 0
    %1832 = vmatmul.mubr.bf16.gmra.mrb[0].mxu0 %v1666
    %v1833 = vpop.f32.mrb[0].mxu0
    %v1834 = vadd.f32 0.0, %v1833
    %v1835 = vpop.f32.mrb[0].mxu0
    %v1836 = vpop.f32.mrb[0].mxu0
    %v1837 = vadd.f32 0.0, %v1836
    %v1838 = vpop.f32.mrb[0].mxu0
    %1839 = vmatprep.mubr.bf16.mxu0 0
    %1840 = vmatmul.mubr.bf16.gmra.mrb[0].mxu0 %v1669
    %v1841 = vpop.f32.mrb[0].mxu0
    %v1842 = vadd.f32 0.0, %v1841
    %v1843 = vpop.f32.mrb[0].mxu0
    %v1844 = vpop.f32.mrb[0].mxu0
    %v1845 = vadd.f32 0.0, %v1844
    %v1846 = vpop.f32.mrb[0].mxu0
    %1847 = vmatprep.mubr.bf16.mxu0 0
    %1848 = vmatmul.mubr.bf16.gmra.mrb[0].mxu0 %v1672
    %v1849 = vpop.f32.mrb[0].mxu0
    %v1850 = vadd.f32 0.0, %v1849
    %v1851 = vpop.f32.mrb[0].mxu0
    %v1852 = vpop.f32.mrb[0].mxu0
    %v1853 = vadd.f32 0.0, %v1852
    %v1854 = vpop.f32.mrb[0].mxu0
    %1855 = vmatprep.mubr.bf16.mxu0 0
    %1856 = vmatmul.mubr.bf16.gmra.mrb[0].mxu0 %v1675
    %v1857 = vpop.f32.mrb[0].mxu0
    %v1858 = vadd.f32 0.0, %v1857
    %v1859 = vpop.f32.mrb[0].mxu0
    %v1860 = vpop.f32.mrb[0].mxu0
    %v1861 = vadd.f32 0.0, %v1860
    %v1862 = vpop.f32.mrb[0].mxu0
    %1863 = vmatprep.mubr.bf16.mxu0 0
    %1864 = vmatmul.mubr.bf16.gmra.mrb[0].mxu0 %v1678
    %v1865 = vpop.f32.mrb[0].mxu0
    %v1866 = vadd.f32 0.0, %v1865
    %v1867 = vpop.f32.mrb[0].mxu0
    %v1868 = vpop.f32.mrb[0].mxu0
    %v1869 = vadd.f32 0.0, %v1868
    %v1870 = vpop.f32.mrb[0].mxu0
    %1871 = vmatprep.mubr.bf16.mxu0 0
    %1872 = vmatmul.mubr.bf16.gmra.mrb[0].mxu0 %v1681
    %v1873 = vpop.f32.mrb[0].mxu0
    %v1874 = vadd.f32 0.0, %v1873
    %v1875 = vpop.f32.mrb[0].mxu0
    %v1876 = vpop.f32.mrb[0].mxu0
    %v1877 = vadd.f32 0.0, %v1876
    %v1878 = vpop.f32.mrb[0].mxu0
    %1879 = vmatprep.mubr.bf16.mxu0 0
    %1880 = vmatmul.mubr.bf16.gmra.mrb[0].mxu0 %v1684
    %v1881 = vpop.f32.mrb[0].mxu0
    %v1882 = vadd.f32 0.0, %v1881
    %v1883 = vpop.f32.mrb[0].mxu0
    %v1884 = vpop.f32.mrb[0].mxu0
    %v1885 = vadd.f32 0.0, %v1884
    %v1886 = vpop.f32.mrb[0].mxu0
    %1887 = vmatprep.mubr.bf16.mxu0 0
    %1888 = vmatmul.mubr.bf16.gmra.mrb[0].mxu0 %v1687
    %v1889 = vpop.f32.mrb[0].mxu0
    %v1890 = vadd.f32 0.0, %v1889
    %v1891 = vpop.f32.mrb[0].mxu0
    %v1892 = vpop.f32.mrb[0].mxu0
    %v1893 = vadd.f32 0.0, %v1892
    %v1894 = vpop.f32.mrb[0].mxu0
    %1895 = vmatprep.mubr.bf16.mxu0 0
    %1896 = vmatmul.mubr.bf16.gmra.mrb[0].mxu0 %v1690
    %v1897 = vpop.f32.mrb[0].mxu0
    %v1898 = vadd.f32 0.0, %v1897
    %v1899 = vpop.f32.mrb[0].mxu0
    %v1900 = vpop.f32.mrb[0].mxu0
    %v1901 = vadd.f32 0.0, %v1900
    %v1902 = vpop.f32.mrb[0].mxu0
    %1903 = vmatprep.mubr.bf16.mxu0 0
    %1904 = vmatmul.mubr.bf16.gmra.mrb[0].mxu0 %v1693
    %v1905 = vpop.f32.mrb[0].mxu0
    %v1906 = vadd.f32 0.0, %v1905
    %v1907 = vpop.f32.mrb[0].mxu0
    %v1908 = vpop.f32.mrb[0].mxu0
    %v1909 = vadd.f32 0.0, %v1908
    %v1910 = vpop.f32.mrb[0].mxu0
    %1911 = vmatprep.mubr.bf16.mxu0 0
    %1912 = vmatmul.mubr.bf16.gmra.mrb[0].mxu0 %v1696
    %v1913 = vpop.f32.mrb[0].mxu0
    %v1914 = vadd.f32 0.0, %v1913
    %v1915 = vpop.f32.mrb[0].mxu0
    %v1916 = vpop.f32.mrb[0].mxu0
    %v1917 = vadd.f32 0.0, %v1916
    %v1918 = vpop.f32.mrb[0].mxu0
    %1919 = vmatprep.mubr.bf16.mxu0 0
    %1920 = vmatmul.mubr.bf16.gmra.mrb[0].mxu0 %v1699
    %v1921 = vpop.f32.mrb[0].mxu0
    %v1922 = vadd.f32 0.0, %v1921
    %v1923 = vpop.f32.mrb[0].mxu0
    %v1924 = vpop.f32.mrb[0].mxu0
    %v1925 = vadd.f32 0.0, %v1924
    %v1926 = vpop.f32.mrb[0].mxu0
    %1927 = vmatprep.mubr.bf16.mxu0 0
    %1928 = vmatmul.mubr.bf16.gmra.mrb[0].mxu0 %v1702
    %v1929 = vpop.f32.mrb[0].mxu0
    %v1930 = vadd.f32 0.0, %v1929
    %v1931 = vpop.f32.mrb[0].mxu0
    %v1932 = vpop.f32.mrb[0].mxu0
    %v1933 = vadd.f32 0.0, %v1932
    %v1934 = vpop.f32.mrb[0].mxu0
    %1935 = vmatprep.mubr.bf16.mxu0 0
    %1936 = vmatmul.mubr.bf16.gmra.mrb[0].mxu0 %v1705
    %v1937 = vpop.f32.mrb[0].mxu0
    %v1938 = vadd.f32 0.0, %v1937
    %v1939 = vpop.f32.mrb[0].mxu0
    %v1940 = vpop.f32.mrb[0].mxu0
    %v1941 = vadd.f32 0.0, %v1940
    %v1942 = vpop.f32.mrb[0].mxu0
    %1943 = vmatprep.mubr.bf16.mxu0 0
    %1944 = vmatmul.mubr.bf16.gmra.mrb[0].mxu0 %v1708
    %v1945 = vpop.f32.mrb[0].mxu0
    %v1946 = vadd.f32 0.0, %v1945
    %v1947 = vpop.f32.mrb[0].mxu0
    %v1948 = vpop.f32.mrb[0].mxu0
    %v1949 = vadd.f32 0.0, %v1948
    %v1950 = vpop.f32.mrb[0].mxu0
    %1951 = vmatprep.mubr.bf16.mxu0 0
    %1952 = vmatmul.mubr.bf16.gmra.mrb[0].mxu0 %v1711
    %v1953 = vpop.f32.mrb[0].mxu0
    %v1954 = vadd.f32 0.0, %v1953
    %v1955 = vpop.f32.mrb[0].mxu0
    %v1956 = vpop.f32.mrb[0].mxu0
    %v1957 = vadd.f32 0.0, %v1956
    %v1958 = vpop.f32.mrb[0].mxu0
    %1959 = vmatprep.mubr.bf16.mxu0 0
    %1960 = vmatmul.mubr.bf16.gmra.mrb[0].mxu0 %v1714
    %v1961 = vpop.f32.mrb[0].mxu0
    %v1962 = vadd.f32 0.0, %v1961
    %v1963 = vpop.f32.mrb[0].mxu0
    %v1964 = vpop.f32.mrb[0].mxu0
    %v1965 = vadd.f32 0.0, %v1964
    %v1966 = vpop.f32.mrb[0].mxu0
    %1967 = vmatprep.mubr.bf16.mxu0 0
    %1968 = vmatmul.mubr.bf16.gmra.mrb[0].mxu0 %v1717
    %v1969 = vpop.f32.mrb[0].mxu0
    %v1970 = vadd.f32 0.0, %v1969
    %v1971 = vpop.f32.mrb[0].mxu0
    %v1972 = vpop.f32.mrb[0].mxu0
    %v1973 = vadd.f32 0.0, %v1972
    %v1974 = vpop.f32.mrb[0].mxu0
    %1975 = vmatprep.mubr.bf16.mxu0 0
    %1976 = vmatmul.mubr.bf16.gmra.mrb[0].mxu0 %v1720
    %v1977 = vpop.f32.mrb[0].mxu0
    %v1978 = vadd.f32 0.0, %v1977
    %v1979 = vpop.f32.mrb[0].mxu0
    %v1980 = vpop.f32.mrb[0].mxu0
    %v1981 = vadd.f32 0.0, %v1980
    %v1982 = vpop.f32.mrb[0].mxu0
    %1983 = vmatprep.mubr.bf16.mxu0 0
    %1984 = vmatmul.mubr.bf16.gmra.mrb[0].mxu0 %v1723
    %v1985 = vpop.f32.mrb[0].mxu0
    %v1986 = vadd.f32 0.0, %v1985
    %v1987 = vpop.f32.mrb[0].mxu0
    %v1988 = vpop.f32.mrb[0].mxu0
    %v1989 = vadd.f32 0.0, %v1988
    %v1990 = vpop.f32.mrb[0].mxu0
    %1991 = vmatprep.mubr.bf16.mxu0 0
    %1992 = vmatmul.mubr.bf16.gmra.mrb[0].mxu0 %v1726
    %v1993 = vpop.f32.mrb[0].mxu0
    %v1994 = vadd.f32 0.0, %v1993
    %v1995 = vpop.f32.mrb[0].mxu0
    %v1996 = vpop.f32.mrb[0].mxu0
    %v1997 = vadd.f32 0.0, %v1996
    %v1998 = vpop.f32.mrb[0].mxu0
    %1999 = vmatprep.mubr.bf16.mxu0 0
    %2000 = vmatmul.mubr.bf16.gmra.mrb[0].mxu0 %v1729
    %v2001 = vpop.f32.mrb[0].mxu0
    %v2002 = vadd.f32 0.0, %v2001
    %v2003 = vpop.f32.mrb[0].mxu0
    %v2004 = vpop.f32.mrb[0].mxu0
    %v2005 = vadd.f32 0.0, %v2004
    %v2006 = vpop.f32.mrb[0].mxu0
    %2007 = vmatprep.mubr.bf16.mxu0 0
    %2008 = vmatmul.mubr.bf16.gmra.mrb[0].mxu0 %v1732
    %v2009 = vpop.f32.mrb[0].mxu0
    %v2010 = vadd.f32 0.0, %v2009
    %v2011 = vpop.f32.mrb[0].mxu0
    %v2012 = vpop.f32.mrb[0].mxu0
    %v2013 = vadd.f32 0.0, %v2012
    %v2014 = vpop.f32.mrb[0].mxu0
    %2015 = vmatprep.mubr.bf16.mxu0 0
    %2016 = vmatmul.mubr.bf16.gmra.mrb[0].mxu0 %v1735
    %v2017 = vpop.f32.mrb[0].mxu0
    %v2018 = vadd.f32 0.0, %v2017
    %v2019 = vpop.f32.mrb[0].mxu0
    %v2020 = vpop.f32.mrb[0].mxu0
    %v2021 = vadd.f32 0.0, %v2020
    %v2022 = vpop.f32.mrb[0].mxu0
    %2023 = vmatprep.mubr.bf16.mxu0 0
    %2024 = vmatmul.mubr.bf16.gmra.mrb[0].mxu0 %v1738
    %v2025 = vpop.f32.mrb[0].mxu0
    %v2026 = vadd.f32 0.0, %v2025
    %v2027 = vpop.f32.mrb[0].mxu0
    %v2028 = vpop.f32.mrb[0].mxu0
    %v2029 = vadd.f32 0.0, %v2028
    %v2030 = vpop.f32.mrb[0].mxu0
    %2031 = vdwg.mxu0
    %v2032 = vadd.f32 %v1481, %v1778
    %v2033 = vadd.f32 %v1482, %v1781
    %v2034 = vadd.f32 %v1483, %v1786
    %v2035 = vadd.f32 %v1484, %v1789
    %v2036 = vadd.f32 %v1485, %v1794
    %v2037 = vadd.f32 %v1486, %v1797
    %v2038 = vadd.f32 %v1487, %v1802
    %v2039 = vadd.f32 %v1488, %v1805
    %v2040 = vadd.f32 %v1489, %v1810
    %v2041 = vadd.f32 %v1490, %v1813
    %v2042 = vadd.f32 %v1491, %v1818
    %v2043 = vadd.f32 %v1492, %v1821
    %v2044 = vadd.f32 %v1493, %v1826
    %v2045 = vadd.f32 %v1494, %v1829
    %v2046 = vadd.f32 %v1495, %v1834
    %v2047 = vadd.f32 %v1496, %v1837
    %v2048 = vadd.f32 %v1497, %v1842
    %v2049 = vadd.f32 %v1498, %v1845
    %v2050 = vadd.f32 %v1499, %v1850
    %v2051 = vadd.f32 %v1500, %v1853
    %v2052 = vadd.f32 %v1501, %v1858
    %v2053 = vadd.f32 %v1502, %v1861
    %v2054 = vadd.f32 %v1503, %v1866
    %v2055 = vadd.f32 %v1504, %v1869
    %v2056 = vadd.f32 %v1505, %v1874
    %v2057 = vadd.f32 %v1506, %v1877
    %v2058 = vadd.f32 %v1507, %v1882
    %v2059 = vadd.f32 %v1508, %v1885
    %v2060 = vadd.f32 %v1509, %v1890
    %v2061 = vadd.f32 %v1510, %v1893
    %v2062 = vadd.f32 %v1511, %v1898
    %v2063 = vadd.f32 %v1512, %v1901
    %v2064 = vadd.f32 %v1513, %v1906
    %v2065 = vadd.f32 %v1514, %v1909
    %v2066 = vadd.f32 %v1515, %v1914
    %v2067 = vadd.f32 %v1516, %v1917
    %v2068 = vadd.f32 %v1517, %v1922
    %v2069 = vadd.f32 %v1518, %v1925
    %v2070 = vadd.f32 %v1519, %v1930
    %v2071 = vadd.f32 %v1520, %v1933
    %v2072 = vadd.f32 %v1521, %v1938
    %v2073 = vadd.f32 %v1522, %v1941
    %v2074 = vadd.f32 %v1523, %v1946
    %v2075 = vadd.f32 %v1524, %v1949
    %v2076 = vadd.f32 %v1525, %v1954
    %v2077 = vadd.f32 %v1526, %v1957
    %v2078 = vadd.f32 %v1527, %v1962
    %v2079 = vadd.f32 %v1528, %v1965
    %v2080 = vadd.f32 %v1529, %v1970
    %v2081 = vadd.f32 %v1530, %v1973
    %v2082 = vadd.f32 %v1531, %v1978
    %v2083 = vadd.f32 %v1532, %v1981
    %v2084 = vadd.f32 %v1533, %v1986
    %v2085 = vadd.f32 %v1534, %v1989
    %v2086 = vadd.f32 %v1535, %v1994
    %v2087 = vadd.f32 %v1536, %v1997
    %v2088 = vadd.f32 %v1537, %v2002
    %v2089 = vadd.f32 %v1538, %v2005
    %v2090 = vadd.f32 %v1539, %v2010
    %v2091 = vadd.f32 %v1540, %v2013
    %v2092 = vadd.f32 %v1541, %v2018
    %v2093 = vadd.f32 %v1542, %v2021
    %v2094 = vadd.f32 %v1543, %v2026
    %v2095 = vadd.f32 %v1544, %v2029
    %v2096 = vld [vmem:[%s1545 + $0x1] sm:$0xff]
    %v2097 = vld [vmem:[%s1545 + $0x9] sm:$0xff]
    %v2098 = vld [vmem:[%s1545 + $0x19] sm:$0xff]
    %v2099 = vld [vmem:[%s1545 + $0x21] sm:$0xff]
    %v2100 = vld [vmem:[%s1545 + $0x31] sm:$0xff]
    %v2101 = vld [vmem:[%s1545 + $0x39] sm:$0xff]
    %v2102 = vld [vmem:[%s1545 + $0x49] sm:$0xff]
    %v2103 = vld [vmem:[%s1545 + $0x51] sm:$0xff]
    %v2104 = vld [vmem:[%s1545 + $0x61] sm:$0xff]
    %v2105 = vld [vmem:[%s1545 + $0x69] sm:$0xff]
    %v2106 = vld [vmem:[%s1545 + $0x79] sm:$0xff]
    %v2107 = vld [vmem:[%s1545 + $0x81] sm:$0xff]
    %v2108 = vld [vmem:[%s1545 + $0x91] sm:$0xff]
    %v2109 = vld [vmem:[%s1545 + $0x99] sm:$0xff]
    %v2110 = vld [vmem:[%s1545 + $0xa9] sm:$0xff]
    %v2111 = vld [vmem:[%s1545 + $0xb1] sm:$0xff]
    %v2112 = vld [vmem:[%s1545 + $0xc1] sm:$0xff]
    %v2113 = vld [vmem:[%s1545 + $0xc9] sm:$0xff]
    %v2114 = vld [vmem:[%s1545 + $0xd9] sm:$0xff]
    %v2115 = vld [vmem:[%s1545 + $0xe1] sm:$0xff]
    %v2116 = vld [vmem:[%s1545 + $0xf1] sm:$0xff]
    %v2117 = vld [vmem:[%s1545 + $0xf9] sm:$0xff]
    %v2118 = vld [vmem:[%s1545 + $0x109] sm:$0xff]
    %v2119 = vld [vmem:[%s1545 + $0x111] sm:$0xff]
    %v2120 = vld [vmem:[%s1545 + $0x121] sm:$0xff]
    %v2121 = vld [vmem:[%s1545 + $0x129] sm:$0xff]
    %v2122 = vld [vmem:[%s1545 + $0x139] sm:$0xff]
    %v2123 = vld [vmem:[%s1545 + $0x141] sm:$0xff]
    %v2124 = vld [vmem:[%s1545 + $0x151] sm:$0xff]
    %v2125 = vld [vmem:[%s1545 + $0x159] sm:$0xff]
    %v2126 = vld [vmem:[%s1545 + $0x169] sm:$0xff]
    %v2127 = vld [vmem:[%s1545 + $0x171] sm:$0xff]
    %v2128 = vld [vmem:[%s1545 + $0x1b1] sm:$0xff]
    %v2129 = vld [vmem:[%s1545 + $0x1b9] sm:$0xff]
    %v2130 = vld [vmem:[%s1545 + $0x1c9] sm:$0xff]
    %v2131 = vld [vmem:[%s1545 + $0x1d1] sm:$0xff]
    %v2132 = vld [vmem:[%s1545 + $0x1e1] sm:$0xff]
    %v2133 = vld [vmem:[%s1545 + $0x1e9] sm:$0xff]
    %v2134 = vld [vmem:[%s1545 + $0x1f9] sm:$0xff]
    %v2135 = vld [vmem:[%s1545 + $0x201] sm:$0xff]
    %v2136 = vld [vmem:[%s1545 + $0x211] sm:$0xff]
    %v2137 = vld [vmem:[%s1545 + $0x219] sm:$0xff]
    %v2138 = vld [vmem:[%s1545 + $0x229] sm:$0xff]
    %v2139 = vld [vmem:[%s1545 + $0x231] sm:$0xff]
    %v2140 = vld [vmem:[%s1545 + $0x241] sm:$0xff]
    %v2141 = vld [vmem:[%s1545 + $0x249] sm:$0xff]
    %v2142 = vld [vmem:[%s1545 + $0x259] sm:$0xff]
    %v2143 = vld [vmem:[%s1545 + $0x261] sm:$0xff]
    %v2144 = vld [vmem:[%s1545 + $0x271] sm:$0xff]
    %v2145 = vld [vmem:[%s1545 + $0x279] sm:$0xff]
    %v2146 = vld [vmem:[%s1545 + $0x289] sm:$0xff]
    %v2147 = vld [vmem:[%s1545 + $0x291] sm:$0xff]
    %v2148 = vld [vmem:[%s1545 + $0x2a1] sm:$0xff]
    %v2149 = vld [vmem:[%s1545 + $0x2a9] sm:$0xff]
    %v2150 = vld [vmem:[%s1545 + $0x2b9] sm:$0xff]
    %v2151 = vld [vmem:[%s1545 + $0x2c1] sm:$0xff]
    %v2152 = vld [vmem:[%s1545 + $0x2d1] sm:$0xff]
    %v2153 = vld [vmem:[%s1545 + $0x2d9] sm:$0xff]
    %v2154 = vld [vmem:[%s1545 + $0x2e9] sm:$0xff]
    %v2155 = vld [vmem:[%s1545 + $0x2f1] sm:$0xff]
    %v2156 = vld [vmem:[%s1545 + $0x301] sm:$0xff]
    %v2157 = vld [vmem:[%s1545 + $0x309] sm:$0xff]
    %v2158 = vld [vmem:[%s1545 + $0x319] sm:$0xff]
    %v2159 = vld [vmem:[%s1545 + $0x321] sm:$0xff]
    %v2160 = vpack.c.bf16 %v2097, %v2096
    %v2161 = vpack.c.bf16 %v2099, %v2098
    %v2162 = vpack.c.bf16 %v2101, %v2100
    %v2163 = vpack.c.bf16 %v2103, %v2102
    %v2164 = vpack.c.bf16 %v2105, %v2104
    %v2165 = vpack.c.bf16 %v2107, %v2106
    %v2166 = vpack.c.bf16 %v2109, %v2108
    %v2167 = vpack.c.bf16 %v2111, %v2110
    %v2168 = vpack.c.bf16 %v2113, %v2112
    %v2169 = vpack.c.bf16 %v2115, %v2114
    %v2170 = vpack.c.bf16 %v2117, %v2116
    %v2171 = vpack.c.bf16 %v2119, %v2118
    %v2172 = vpack.c.bf16 %v2121, %v2120
    %v2173 = vpack.c.bf16 %v2123, %v2122
    %v2174 = vpack.c.bf16 %v2125, %v2124
    %v2175 = vpack.c.bf16 %v2127, %v2126
    %v2176 = vpack.c.bf16 %v2129, %v2128
    %v2177 = vpack.c.bf16 %v2131, %v2130
    %v2178 = vpack.c.bf16 %v2133, %v2132
    %v2179 = vpack.c.bf16 %v2135, %v2134
    %v2180 = vpack.c.bf16 %v2137, %v2136
    %v2181 = vpack.c.bf16 %v2139, %v2138
    %v2182 = vpack.c.bf16 %v2141, %v2140
    %v2183 = vpack.c.bf16 %v2143, %v2142
    %v2184 = vpack.c.bf16 %v2145, %v2144
    %v2185 = vpack.c.bf16 %v2147, %v2146
    %v2186 = vpack.c.bf16 %v2149, %v2148
    %v2187 = vpack.c.bf16 %v2151, %v2150
    %v2188 = vpack.c.bf16 %v2153, %v2152
    %v2189 = vpack.c.bf16 %v2155, %v2154
    %v2190 = vpack.c.bf16 %v2157, %v2156
    %v2191 = vpack.c.bf16 %v2159, %v2158
    %s2192 = scalar_lea.vmem %s1, 8
    %v2193 = vld [vmem:[%s2192] sm:$0x3]
    %v2195 = vsel %vm217, %v2160, 0
    %v2198 = vsel %vm217, %v2161, 0
    %v2201 = vsel %vm217, %v2162, 0
    %v2204 = vsel %vm217, %v2163, 0
    %v2207 = vsel %vm217, %v2164, 0
    %v2210 = vsel %vm217, %v2165, 0
    %v2213 = vsel %vm217, %v2166, 0
    %v2216 = vsel %vm217, %v2167, 0
    %v2219 = vsel %vm217, %v2168, 0
    %v2222 = vsel %vm217, %v2169, 0
    %v2225 = vsel %vm217, %v2170, 0
    %v2228 = vsel %vm217, %v2171, 0
    %v2231 = vsel %vm217, %v2172, 0
    %v2234 = vsel %vm217, %v2173, 0
    %v2237 = vsel %vm217, %v2174, 0
    %v2240 = vsel %vm217, %v2175, 0
    %v2243 = vsel %vm217, %v2176, 0
    %v2246 = vsel %vm217, %v2177, 0
    %v2249 = vsel %vm217, %v2178, 0
    %v2252 = vsel %vm217, %v2179, 0
    %v2255 = vsel %vm217, %v2180, 0
    %v2258 = vsel %vm217, %v2181, 0
    %v2261 = vsel %vm217, %v2182, 0
    %v2264 = vsel %vm217, %v2183, 0
    %v2267 = vsel %vm217, %v2184, 0
    %v2270 = vsel %vm217, %v2185, 0
    %v2273 = vsel %vm217, %v2186, 0
    %v2276 = vsel %vm217, %v2187, 0
    %v2279 = vsel %vm217, %v2188, 0
    %v2282 = vsel %vm217, %v2189, 0
    %v2285 = vsel %vm217, %v2190, 0
    %v2288 = vsel %vm217, %v2191, 0
    %v2291 = vsel %vm314, %v2193, 0
    %2293 = vmatprep.subr.bf16.mxu0 0
    %2294 = vmatpush1.bf16.msra.mxu0 %v2291
    %2295 = vmatprep.subr.bf16.mxu0 0
    %2296 = vmatpush1.bf16.msra.mxu0 0
    %2297 = vmatprep.subr.bf16.mxu0 0
    %2298 = vmatpush1.bf16.msra.mxu0 0
    %2299 = vmatprep.subr.bf16.mxu0 0
    %2300 = vmatpush1.bf16.msra.mxu0 0
    %2301 = vmatprep.subr.bf16.mxu0 0
    %2302 = vmatpush1.bf16.msra.mxu0 0
    %2303 = vmatprep.subr.bf16.mxu0 0
    %2304 = vmatpush1.bf16.msra.mxu0 0
    %2305 = vmatprep.subr.bf16.mxu0 0
    %2306 = vmatpush1.bf16.msra.mxu0 0
    %2307 = vmatprep.subr.bf16.mxu0 0
    %2308 = vmatpush1.bf16.msra.mxu0 0
    %2309 = vmatprep.subr.bf16.mxu0 0
    %2310 = vmatpush1.bf16.msra.mxu0 0
    %2311 = vmatprep.subr.bf16.mxu0 0
    %2312 = vmatpush1.bf16.msra.mxu0 0
    %2313 = vmatprep.subr.bf16.mxu0 0
    %2314 = vmatpush1.bf16.msra.mxu0 0
    %2315 = vmatprep.subr.bf16.mxu0 0
    %2316 = vmatpush1.bf16.msra.mxu0 0
    %2317 = vmatprep.subr.bf16.mxu0 0
    %2318 = vmatpush1.bf16.msra.mxu0 0
    %2319 = vmatprep.subr.bf16.mxu0 0
    %2320 = vmatpush1.bf16.msra.mxu0 0
    %2321 = vmatprep.subr.bf16.mxu0 0
    %2322 = vmatpush1.bf16.msra.mxu0 0
    %2323 = vmatprep.subr.bf16.mxu0 0
    %2324 = vmatpush1.bf16.msra.mxu0 0
    %2325 = vmatprep.mubr.bf16.mxu0 0
    %2326 = vmatmul.mubr.bf16.gmra.mrb[0].mxu0 %v2195
    %v2327 = vpop.f32.mrb[0].mxu0
    %v2328 = vadd.f32 0.0, %v2327
    %v2329 = vpop.f32.mrb[0].mxu0
    %v2330 = vpop.f32.mrb[0].mxu0
    %v2331 = vadd.f32 0.0, %v2330
    %v2332 = vpop.f32.mrb[0].mxu0
    %2333 = vmatprep.mubr.bf16.mxu0 0
    %2334 = vmatmul.mubr.bf16.gmra.mrb[0].mxu0 %v2198
    %v2335 = vpop.f32.mrb[0].mxu0
    %v2336 = vadd.f32 0.0, %v2335
    %v2337 = vpop.f32.mrb[0].mxu0
    %v2338 = vpop.f32.mrb[0].mxu0
    %v2339 = vadd.f32 0.0, %v2338
    %v2340 = vpop.f32.mrb[0].mxu0
    %2341 = vmatprep.mubr.bf16.mxu0 0
    %2342 = vmatmul.mubr.bf16.gmra.mrb[0].mxu0 %v2201
    %v2343 = vpop.f32.mrb[0].mxu0
    %v2344 = vadd.f32 0.0, %v2343
    %v2345 = vpop.f32.mrb[0].mxu0
    %v2346 = vpop.f32.mrb[0].mxu0
    %v2347 = vadd.f32 0.0, %v2346
    %v2348 = vpop.f32.mrb[0].mxu0
    %2349 = vmatprep.mubr.bf16.mxu0 0
    %2350 = vmatmul.mubr.bf16.gmra.mrb[0].mxu0 %v2204
    %v2351 = vpop.f32.mrb[0].mxu0
    %v2352 = vadd.f32 0.0, %v2351
    %v2353 = vpop.f32.mrb[0].mxu0
    %v2354 = vpop.f32.mrb[0].mxu0
    %v2355 = vadd.f32 0.0, %v2354
    %v2356 = vpop.f32.mrb[0].mxu0
    %2357 = vmatprep.mubr.bf16.mxu0 0
    %2358 = vmatmul.mubr.bf16.gmra.mrb[0].mxu0 %v2207
    %v2359 = vpop.f32.mrb[0].mxu0
    %v2360 = vadd.f32 0.0, %v2359
    %v2361 = vpop.f32.mrb[0].mxu0
    %v2362 = vpop.f32.mrb[0].mxu0
    %v2363 = vadd.f32 0.0, %v2362
    %v2364 = vpop.f32.mrb[0].mxu0
    %2365 = vmatprep.mubr.bf16.mxu0 0
    %2366 = vmatmul.mubr.bf16.gmra.mrb[0].mxu0 %v2210
    %v2367 = vpop.f32.mrb[0].mxu0
    %v2368 = vadd.f32 0.0, %v2367
    %v2369 = vpop.f32.mrb[0].mxu0
    %v2370 = vpop.f32.mrb[0].mxu0
    %v2371 = vadd.f32 0.0, %v2370
    %v2372 = vpop.f32.mrb[0].mxu0
    %2373 = vmatprep.mubr.bf16.mxu0 0
    %2374 = vmatmul.mubr.bf16.gmra.mrb[0].mxu0 %v2213
    %v2375 = vpop.f32.mrb[0].mxu0
    %v2376 = vadd.f32 0.0, %v2375
    %v2377 = vpop.f32.mrb[0].mxu0
    %v2378 = vpop.f32.mrb[0].mxu0
    %v2379 = vadd.f32 0.0, %v2378
    %v2380 = vpop.f32.mrb[0].mxu0
    %2381 = vmatprep.mubr.bf16.mxu0 0
    %2382 = vmatmul.mubr.bf16.gmra.mrb[0].mxu0 %v2216
    %v2383 = vpop.f32.mrb[0].mxu0
    %v2384 = vadd.f32 0.0, %v2383
    %v2385 = vpop.f32.mrb[0].mxu0
    %v2386 = vpop.f32.mrb[0].mxu0
    %v2387 = vadd.f32 0.0, %v2386
    %v2388 = vpop.f32.mrb[0].mxu0
    %2389 = vmatprep.mubr.bf16.mxu0 0
    %2390 = vmatmul.mubr.bf16.gmra.mrb[0].mxu0 %v2219
    %v2391 = vpop.f32.mrb[0].mxu0
    %v2392 = vadd.f32 0.0, %v2391
    %v2393 = vpop.f32.mrb[0].mxu0
    %v2394 = vpop.f32.mrb[0].mxu0
    %v2395 = vadd.f32 0.0, %v2394
    %v2396 = vpop.f32.mrb[0].mxu0
    %2397 = vmatprep.mubr.bf16.mxu0 0
    %2398 = vmatmul.mubr.bf16.gmra.mrb[0].mxu0 %v2222
    %v2399 = vpop.f32.mrb[0].mxu0
    %v2400 = vadd.f32 0.0, %v2399
    %v2401 = vpop.f32.mrb[0].mxu0
    %v2402 = vpop.f32.mrb[0].mxu0
    %v2403 = vadd.f32 0.0, %v2402
    %v2404 = vpop.f32.mrb[0].mxu0
    %2405 = vmatprep.mubr.bf16.mxu0 0
    %2406 = vmatmul.mubr.bf16.gmra.mrb[0].mxu0 %v2225
    %v2407 = vpop.f32.mrb[0].mxu0
    %v2408 = vadd.f32 0.0, %v2407
    %v2409 = vpop.f32.mrb[0].mxu0
    %v2410 = vpop.f32.mrb[0].mxu0
    %v2411 = vadd.f32 0.0, %v2410
    %v2412 = vpop.f32.mrb[0].mxu0
    %2413 = vmatprep.mubr.bf16.mxu0 0
    %2414 = vmatmul.mubr.bf16.gmra.mrb[0].mxu0 %v2228
    %v2415 = vpop.f32.mrb[0].mxu0
    %v2416 = vadd.f32 0.0, %v2415
    %v2417 = vpop.f32.mrb[0].mxu0
    %v2418 = vpop.f32.mrb[0].mxu0
    %v2419 = vadd.f32 0.0, %v2418
    %v2420 = vpop.f32.mrb[0].mxu0
    %2421 = vmatprep.mubr.bf16.mxu0 0
    %2422 = vmatmul.mubr.bf16.gmra.mrb[0].mxu0 %v2231
    %v2423 = vpop.f32.mrb[0].mxu0
    %v2424 = vadd.f32 0.0, %v2423
    %v2425 = vpop.f32.mrb[0].mxu0
    %v2426 = vpop.f32.mrb[0].mxu0
    %v2427 = vadd.f32 0.0, %v2426
    %v2428 = vpop.f32.mrb[0].mxu0
    %2429 = vmatprep.mubr.bf16.mxu0 0
    %2430 = vmatmul.mubr.bf16.gmra.mrb[0].mxu0 %v2234
    %v2431 = vpop.f32.mrb[0].mxu0
    %v2432 = vadd.f32 0.0, %v2431
    %v2433 = vpop.f32.mrb[0].mxu0
    %v2434 = vpop.f32.mrb[0].mxu0
    %v2435 = vadd.f32 0.0, %v2434
    %v2436 = vpop.f32.mrb[0].mxu0
    %2437 = vmatprep.mubr.bf16.mxu0 0
    %2438 = vmatmul.mubr.bf16.gmra.mrb[0].mxu0 %v2237
    %v2439 = vpop.f32.mrb[0].mxu0
    %v2440 = vadd.f32 0.0, %v2439
    %v2441 = vpop.f32.mrb[0].mxu0
    %v2442 = vpop.f32.mrb[0].mxu0
    %v2443 = vadd.f32 0.0, %v2442
    %v2444 = vpop.f32.mrb[0].mxu0
    %2445 = vmatprep.mubr.bf16.mxu0 0
    %2446 = vmatmul.mubr.bf16.gmra.mrb[0].mxu0 %v2240
    %v2447 = vpop.f32.mrb[0].mxu0
    %v2448 = vadd.f32 0.0, %v2447
    %v2449 = vpop.f32.mrb[0].mxu0
    %v2450 = vpop.f32.mrb[0].mxu0
    %v2451 = vadd.f32 0.0, %v2450
    %v2452 = vpop.f32.mrb[0].mxu0
    %2453 = vmatprep.mubr.bf16.mxu0 0
    %2454 = vmatmul.mubr.bf16.gmra.mrb[0].mxu0 %v2243
    %v2455 = vpop.f32.mrb[0].mxu0
    %v2456 = vadd.f32 0.0, %v2455
    %v2457 = vpop.f32.mrb[0].mxu0
    %v2458 = vpop.f32.mrb[0].mxu0
    %v2459 = vadd.f32 0.0, %v2458
    %v2460 = vpop.f32.mrb[0].mxu0
    %2461 = vmatprep.mubr.bf16.mxu0 0
    %2462 = vmatmul.mubr.bf16.gmra.mrb[0].mxu0 %v2246
    %v2463 = vpop.f32.mrb[0].mxu0
    %v2464 = vadd.f32 0.0, %v2463
    %v2465 = vpop.f32.mrb[0].mxu0
    %v2466 = vpop.f32.mrb[0].mxu0
    %v2467 = vadd.f32 0.0, %v2466
    %v2468 = vpop.f32.mrb[0].mxu0
    %2469 = vmatprep.mubr.bf16.mxu0 0
    %2470 = vmatmul.mubr.bf16.gmra.mrb[0].mxu0 %v2249
    %v2471 = vpop.f32.mrb[0].mxu0
    %v2472 = vadd.f32 0.0, %v2471
    %v2473 = vpop.f32.mrb[0].mxu0
    %v2474 = vpop.f32.mrb[0].mxu0
    %v2475 = vadd.f32 0.0, %v2474
    %v2476 = vpop.f32.mrb[0].mxu0
    %2477 = vmatprep.mubr.bf16.mxu0 0
    %2478 = vmatmul.mubr.bf16.gmra.mrb[0].mxu0 %v2252
    %v2479 = vpop.f32.mrb[0].mxu0
    %v2480 = vadd.f32 0.0, %v2479
    %v2481 = vpop.f32.mrb[0].mxu0
    %v2482 = vpop.f32.mrb[0].mxu0
    %v2483 = vadd.f32 0.0, %v2482
    %v2484 = vpop.f32.mrb[0].mxu0
    %2485 = vmatprep.mubr.bf16.mxu0 0
    %2486 = vmatmul.mubr.bf16.gmra.mrb[0].mxu0 %v2255
    %v2487 = vpop.f32.mrb[0].mxu0
    %v2488 = vadd.f32 0.0, %v2487
    %v2489 = vpop.f32.mrb[0].mxu0
    %v2490 = vpop.f32.mrb[0].mxu0
    %v2491 = vadd.f32 0.0, %v2490
    %v2492 = vpop.f32.mrb[0].mxu0
    %2493 = vmatprep.mubr.bf16.mxu0 0
    %2494 = vmatmul.mubr.bf16.gmra.mrb[0].mxu0 %v2258
    %v2495 = vpop.f32.mrb[0].mxu0
    %v2496 = vadd.f32 0.0, %v2495
    %v2497 = vpop.f32.mrb[0].mxu0
    %v2498 = vpop.f32.mrb[0].mxu0
    %v2499 = vadd.f32 0.0, %v2498
    %v2500 = vpop.f32.mrb[0].mxu0
    %2501 = vmatprep.mubr.bf16.mxu0 0
    %2502 = vmatmul.mubr.bf16.gmra.mrb[0].mxu0 %v2261
    %v2503 = vpop.f32.mrb[0].mxu0
    %v2504 = vadd.f32 0.0, %v2503
    %v2505 = vpop.f32.mrb[0].mxu0
    %v2506 = vpop.f32.mrb[0].mxu0
    %v2507 = vadd.f32 0.0, %v2506
    %v2508 = vpop.f32.mrb[0].mxu0
    %2509 = vmatprep.mubr.bf16.mxu0 0
    %2510 = vmatmul.mubr.bf16.gmra.mrb[0].mxu0 %v2264
    %v2511 = vpop.f32.mrb[0].mxu0
    %v2512 = vadd.f32 0.0, %v2511
    %v2513 = vpop.f32.mrb[0].mxu0
    %v2514 = vpop.f32.mrb[0].mxu0
    %v2515 = vadd.f32 0.0, %v2514
    %v2516 = vpop.f32.mrb[0].mxu0
    %2517 = vmatprep.mubr.bf16.mxu0 0
    %2518 = vmatmul.mubr.bf16.gmra.mrb[0].mxu0 %v2267
    %v2519 = vpop.f32.mrb[0].mxu0
    %v2520 = vadd.f32 0.0, %v2519
    %v2521 = vpop.f32.mrb[0].mxu0
    %v2522 = vpop.f32.mrb[0].mxu0
    %v2523 = vadd.f32 0.0, %v2522
    %v2524 = vpop.f32.mrb[0].mxu0
    %2525 = vmatprep.mubr.bf16.mxu0 0
    %2526 = vmatmul.mubr.bf16.gmra.mrb[0].mxu0 %v2270
    %v2527 = vpop.f32.mrb[0].mxu0
    %v2528 = vadd.f32 0.0, %v2527
    %v2529 = vpop.f32.mrb[0].mxu0
    %v2530 = vpop.f32.mrb[0].mxu0
    %v2531 = vadd.f32 0.0, %v2530
    %v2532 = vpop.f32.mrb[0].mxu0
    %2533 = vmatprep.mubr.bf16.mxu0 0
    %2534 = vmatmul.mubr.bf16.gmra.mrb[0].mxu0 %v2273
    %v2535 = vpop.f32.mrb[0].mxu0
    %v2536 = vadd.f32 0.0, %v2535
    %v2537 = vpop.f32.mrb[0].mxu0
    %v2538 = vpop.f32.mrb[0].mxu0
    %v2539 = vadd.f32 0.0, %v2538
    %v2540 = vpop.f32.mrb[0].mxu0
    %2541 = vmatprep.mubr.bf16.mxu0 0
    %2542 = vmatmul.mubr.bf16.gmra.mrb[0].mxu0 %v2276
    %v2543 = vpop.f32.mrb[0].mxu0
    %v2544 = vadd.f32 0.0, %v2543
    %v2545 = vpop.f32.mrb[0].mxu0
    %v2546 = vpop.f32.mrb[0].mxu0
    %v2547 = vadd.f32 0.0, %v2546
    %v2548 = vpop.f32.mrb[0].mxu0
    %2549 = vmatprep.mubr.bf16.mxu0 0
    %2550 = vmatmul.mubr.bf16.gmra.mrb[0].mxu0 %v2279
    %v2551 = vpop.f32.mrb[0].mxu0
    %v2552 = vadd.f32 0.0, %v2551
    %v2553 = vpop.f32.mrb[0].mxu0
    %v2554 = vpop.f32.mrb[0].mxu0
    %v2555 = vadd.f32 0.0, %v2554
    %v2556 = vpop.f32.mrb[0].mxu0
    %2557 = vmatprep.mubr.bf16.mxu0 0
    %2558 = vmatmul.mubr.bf16.gmra.mrb[0].mxu0 %v2282
    %v2559 = vpop.f32.mrb[0].mxu0
    %v2560 = vadd.f32 0.0, %v2559
    %v2561 = vpop.f32.mrb[0].mxu0
    %v2562 = vpop.f32.mrb[0].mxu0
    %v2563 = vadd.f32 0.0, %v2562
    %v2564 = vpop.f32.mrb[0].mxu0
    %2565 = vmatprep.mubr.bf16.mxu0 0
    %2566 = vmatmul.mubr.bf16.gmra.mrb[0].mxu0 %v2285
    %v2567 = vpop.f32.mrb[0].mxu0
    %v2568 = vadd.f32 0.0, %v2567
    %v2569 = vpop.f32.mrb[0].mxu0
    %v2570 = vpop.f32.mrb[0].mxu0
    %v2571 = vadd.f32 0.0, %v2570
    %v2572 = vpop.f32.mrb[0].mxu0
    %2573 = vmatprep.mubr.bf16.mxu0 0
    %2574 = vmatmul.mubr.bf16.gmra.mrb[0].mxu0 %v2288
    %v2575 = vpop.f32.mrb[0].mxu0
    %v2576 = vadd.f32 0.0, %v2575
    %v2577 = vpop.f32.mrb[0].mxu0
    %v2578 = vpop.f32.mrb[0].mxu0
    %v2579 = vadd.f32 0.0, %v2578
    %v2580 = vpop.f32.mrb[0].mxu0
    %2581 = vdwg.mxu0
    %v2582 = vadd.f32 %v2032, %v2328
    %v2583 = vadd.f32 %v2033, %v2331
    %v2584 = vadd.f32 %v2034, %v2336
    %v2585 = vadd.f32 %v2035, %v2339
    %v2586 = vadd.f32 %v2036, %v2344
    %v2587 = vadd.f32 %v2037, %v2347
    %v2588 = vadd.f32 %v2038, %v2352
    %v2589 = vadd.f32 %v2039, %v2355
    %v2590 = vadd.f32 %v2040, %v2360
    %v2591 = vadd.f32 %v2041, %v2363
    %v2592 = vadd.f32 %v2042, %v2368
    %v2593 = vadd.f32 %v2043, %v2371
    %v2594 = vadd.f32 %v2044, %v2376
    %v2595 = vadd.f32 %v2045, %v2379
    %v2596 = vadd.f32 %v2046, %v2384
    %v2597 = vadd.f32 %v2047, %v2387
    %v2598 = vadd.f32 %v2048, %v2392
    %v2599 = vadd.f32 %v2049, %v2395
    %v2600 = vadd.f32 %v2050, %v2400
    %v2601 = vadd.f32 %v2051, %v2403
    %v2602 = vadd.f32 %v2052, %v2408
    %v2603 = vadd.f32 %v2053, %v2411
    %v2604 = vadd.f32 %v2054, %v2416
    %v2605 = vadd.f32 %v2055, %v2419
    %v2606 = vadd.f32 %v2056, %v2424
    %v2607 = vadd.f32 %v2057, %v2427
    %v2608 = vadd.f32 %v2058, %v2432
    %v2609 = vadd.f32 %v2059, %v2435
    %v2610 = vadd.f32 %v2060, %v2440
    %v2611 = vadd.f32 %v2061, %v2443
    %v2612 = vadd.f32 %v2062, %v2448
    %v2613 = vadd.f32 %v2063, %v2451
    %v2614 = vadd.f32 %v2064, %v2456
    %v2615 = vadd.f32 %v2065, %v2459
    %v2616 = vadd.f32 %v2066, %v2464
    %v2617 = vadd.f32 %v2067, %v2467
    %v2618 = vadd.f32 %v2068, %v2472
    %v2619 = vadd.f32 %v2069, %v2475
    %v2620 = vadd.f32 %v2070, %v2480
    %v2621 = vadd.f32 %v2071, %v2483
    %v2622 = vadd.f32 %v2072, %v2488
    %v2623 = vadd.f32 %v2073, %v2491
    %v2624 = vadd.f32 %v2074, %v2496
    %v2625 = vadd.f32 %v2075, %v2499
    %v2626 = vadd.f32 %v2076, %v2504
    %v2627 = vadd.f32 %v2077, %v2507
    %v2628 = vadd.f32 %v2078, %v2512
    %v2629 = vadd.f32 %v2079, %v2515
    %v2630 = vadd.f32 %v2080, %v2520
    %v2631 = vadd.f32 %v2081, %v2523
    %v2632 = vadd.f32 %v2082, %v2528
    %v2633 = vadd.f32 %v2083, %v2531
    %v2634 = vadd.f32 %v2084, %v2536
    %v2635 = vadd.f32 %v2085, %v2539
    %v2636 = vadd.f32 %v2086, %v2544
    %v2637 = vadd.f32 %v2087, %v2547
    %v2638 = vadd.f32 %v2088, %v2552
    %v2639 = vadd.f32 %v2089, %v2555
    %v2640 = vadd.f32 %v2090, %v2560
    %v2641 = vadd.f32 %v2091, %v2563
    %v2642 = vadd.f32 %v2092, %v2568
    %v2643 = vadd.f32 %v2093, %v2571
    %v2644 = vadd.f32 %v2094, %v2576
    %v2645 = vadd.f32 %v2095, %v2579
    %v2646 = vld [vmem:[%s1545 + $0x2] sm:$0xff]
    %v2647 = vld [vmem:[%s1545 + $0xa] sm:$0xff]
    %v2648 = vld [vmem:[%s1545 + $0x1a] sm:$0xff]
    %v2649 = vld [vmem:[%s1545 + $0x22] sm:$0xff]
    %v2650 = vld [vmem:[%s1545 + $0x32] sm:$0xff]
    %v2651 = vld [vmem:[%s1545 + $0x3a] sm:$0xff]
    %v2652 = vld [vmem:[%s1545 + $0x4a] sm:$0xff]
    %v2653 = vld [vmem:[%s1545 + $0x52] sm:$0xff]
    %v2654 = vld [vmem:[%s1545 + $0x62] sm:$0xff]
    %v2655 = vld [vmem:[%s1545 + $0x6a] sm:$0xff]
    %v2656 = vld [vmem:[%s1545 + $0x7a] sm:$0xff]
    %v2657 = vld [vmem:[%s1545 + $0x82] sm:$0xff]
    %v2658 = vld [vmem:[%s1545 + $0x92] sm:$0xff]
    %v2659 = vld [vmem:[%s1545 + $0x9a] sm:$0xff]
    %v2660 = vld [vmem:[%s1545 + $0xaa] sm:$0xff]
    %v2661 = vld [vmem:[%s1545 + $0xb2] sm:$0xff]
    %v2662 = vld [vmem:[%s1545 + $0xc2] sm:$0xff]
    %v2663 = vld [vmem:[%s1545 + $0xca] sm:$0xff]
    %v2664 = vld [vmem:[%s1545 + $0xda] sm:$0xff]
    %v2665 = vld [vmem:[%s1545 + $0xe2] sm:$0xff]
    %v2666 = vld [vmem:[%s1545 + $0xf2] sm:$0xff]
    %v2667 = vld [vmem:[%s1545 + $0xfa] sm:$0xff]
    %v2668 = vld [vmem:[%s1545 + $0x10a] sm:$0xff]
    %v2669 = vld [vmem:[%s1545 + $0x112] sm:$0xff]
    %v2670 = vld [vmem:[%s1545 + $0x122] sm:$0xff]
    %v2671 = vld [vmem:[%s1545 + $0x12a] sm:$0xff]
    %v2672 = vld [vmem:[%s1545 + $0x13a] sm:$0xff]
    %v2673 = vld [vmem:[%s1545 + $0x142] sm:$0xff]
    %v2674 = vld [vmem:[%s1545 + $0x152] sm:$0xff]
    %v2675 = vld [vmem:[%s1545 + $0x15a] sm:$0xff]
    %v2676 = vld [vmem:[%s1545 + $0x16a] sm:$0xff]
    %v2677 = vld [vmem:[%s1545 + $0x172] sm:$0xff]
    %v2678 = vld [vmem:[%s1545 + $0x1b2] sm:$0xff]
    %v2679 = vld [vmem:[%s1545 + $0x1ba] sm:$0xff]
    %v2680 = vld [vmem:[%s1545 + $0x1ca] sm:$0xff]
    %v2681 = vld [vmem:[%s1545 + $0x1d2] sm:$0xff]
    %v2682 = vld [vmem:[%s1545 + $0x1e2] sm:$0xff]
    %v2683 = vld [vmem:[%s1545 + $0x1ea] sm:$0xff]
    %v2684 = vld [vmem:[%s1545 + $0x1fa] sm:$0xff]
    %v2685 = vld [vmem:[%s1545 + $0x202] sm:$0xff]
    %v2686 = vld [vmem:[%s1545 + $0x212] sm:$0xff]
    %v2687 = vld [vmem:[%s1545 + $0x21a] sm:$0xff]
    %v2688 = vld [vmem:[%s1545 + $0x22a] sm:$0xff]
    %v2689 = vld [vmem:[%s1545 + $0x232] sm:$0xff]
    %v2690 = vld [vmem:[%s1545 + $0x242] sm:$0xff]
    %v2691 = vld [vmem:[%s1545 + $0x24a] sm:$0xff]
    %v2692 = vld [vmem:[%s1545 + $0x25a] sm:$0xff]
    %v2693 = vld [vmem:[%s1545 + $0x262] sm:$0xff]
    %v2694 = vld [vmem:[%s1545 + $0x272] sm:$0xff]
    %v2695 = vld [vmem:[%s1545 + $0x27a] sm:$0xff]
    %v2696 = vld [vmem:[%s1545 + $0x28a] sm:$0xff]
    %v2697 = vld [vmem:[%s1545 + $0x292] sm:$0xff]
    %v2698 = vld [vmem:[%s1545 + $0x2a2] sm:$0xff]
    %v2699 = vld [vmem:[%s1545 + $0x2aa] sm:$0xff]
    %v2700 = vld [vmem:[%s1545 + $0x2ba] sm:$0xff]
    %v2701 = vld [vmem:[%s1545 + $0x2c2] sm:$0xff]
    %v2702 = vld [vmem:[%s1545 + $0x2d2] sm:$0xff]
    %v2703 = vld [vmem:[%s1545 + $0x2da] sm:$0xff]
    %v2704 = vld [vmem:[%s1545 + $0x2ea] sm:$0xff]
    %v2705 = vld [vmem:[%s1545 + $0x2f2] sm:$0xff]
    %v2706 = vld [vmem:[%s1545 + $0x302] sm:$0xff]
    %v2707 = vld [vmem:[%s1545 + $0x30a] sm:$0xff]
    %v2708 = vld [vmem:[%s1545 + $0x31a] sm:$0xff]
    %v2709 = vld [vmem:[%s1545 + $0x322] sm:$0xff]
    %v2710 = vpack.c.bf16 %v2647, %v2646
    %v2711 = vpack.c.bf16 %v2649, %v2648
    %v2712 = vpack.c.bf16 %v2651, %v2650
    %v2713 = vpack.c.bf16 %v2653, %v2652
    %v2714 = vpack.c.bf16 %v2655, %v2654
    %v2715 = vpack.c.bf16 %v2657, %v2656
    %v2716 = vpack.c.bf16 %v2659, %v2658
    %v2717 = vpack.c.bf16 %v2661, %v2660
    %v2718 = vpack.c.bf16 %v2663, %v2662
    %v2719 = vpack.c.bf16 %v2665, %v2664
    %v2720 = vpack.c.bf16 %v2667, %v2666
    %v2721 = vpack.c.bf16 %v2669, %v2668
    %v2722 = vpack.c.bf16 %v2671, %v2670
    %v2723 = vpack.c.bf16 %v2673, %v2672
    %v2724 = vpack.c.bf16 %v2675, %v2674
    %v2725 = vpack.c.bf16 %v2677, %v2676
    %v2726 = vpack.c.bf16 %v2679, %v2678
    %v2727 = vpack.c.bf16 %v2681, %v2680
    %v2728 = vpack.c.bf16 %v2683, %v2682
    %v2729 = vpack.c.bf16 %v2685, %v2684
    %v2730 = vpack.c.bf16 %v2687, %v2686
    %v2731 = vpack.c.bf16 %v2689, %v2688
    %v2732 = vpack.c.bf16 %v2691, %v2690
    %v2733 = vpack.c.bf16 %v2693, %v2692
    %v2734 = vpack.c.bf16 %v2695, %v2694
    %v2735 = vpack.c.bf16 %v2697, %v2696
    %v2736 = vpack.c.bf16 %v2699, %v2698
    %v2737 = vpack.c.bf16 %v2701, %v2700
    %v2738 = vpack.c.bf16 %v2703, %v2702
    %v2739 = vpack.c.bf16 %v2705, %v2704
    %v2740 = vpack.c.bf16 %v2707, %v2706
    %v2741 = vpack.c.bf16 %v2709, %v2708
    %s2742 = scalar_lea.vmem %s1, 10
    %v2743 = vld [vmem:[%s2742] sm:$0x3]
    %v2745 = vsel %vm217, %v2710, 0
    %v2748 = vsel %vm217, %v2711, 0
    %v2751 = vsel %vm217, %v2712, 0
    %v2754 = vsel %vm217, %v2713, 0
    %v2757 = vsel %vm217, %v2714, 0
    %v2760 = vsel %vm217, %v2715, 0
    %v2763 = vsel %vm217, %v2716, 0
    %v2766 = vsel %vm217, %v2717, 0
    %v2769 = vsel %vm217, %v2718, 0
    %v2772 = vsel %vm217, %v2719, 0
    %v2775 = vsel %vm217, %v2720, 0
    %v2778 = vsel %vm217, %v2721, 0
    %v2781 = vsel %vm217, %v2722, 0
    %v2784 = vsel %vm217, %v2723, 0
    %v2787 = vsel %vm217, %v2724, 0
    %v2790 = vsel %vm217, %v2725, 0
    %v2793 = vsel %vm217, %v2726, 0
    %v2796 = vsel %vm217, %v2727, 0
    %v2799 = vsel %vm217, %v2728, 0
    %v2802 = vsel %vm217, %v2729, 0
    %v2805 = vsel %vm217, %v2730, 0
    %v2808 = vsel %vm217, %v2731, 0
    %v2811 = vsel %vm217, %v2732, 0
    %v2814 = vsel %vm217, %v2733, 0
    %v2817 = vsel %vm217, %v2734, 0
    %v2820 = vsel %vm217, %v2735, 0
    %v2823 = vsel %vm217, %v2736, 0
    %v2826 = vsel %vm217, %v2737, 0
    %v2829 = vsel %vm217, %v2738, 0
    %v2832 = vsel %vm217, %v2739, 0
    %v2835 = vsel %vm217, %v2740, 0
    %v2838 = vsel %vm217, %v2741, 0
    %v2841 = vsel %vm314, %v2743, 0
    %2843 = vmatprep.subr.bf16.mxu0 0
    %2844 = vmatpush1.bf16.msra.mxu0 %v2841
    %2845 = vmatprep.subr.bf16.mxu0 0
    %2846 = vmatpush1.bf16.msra.mxu0 0
    %2847 = vmatprep.subr.bf16.mxu0 0
    %2848 = vmatpush1.bf16.msra.mxu0 0
    %2849 = vmatprep.subr.bf16.mxu0 0
    %2850 = vmatpush1.bf16.msra.mxu0 0
    %2851 = vmatprep.subr.bf16.mxu0 0
    %2852 = vmatpush1.bf16.msra.mxu0 0
    %2853 = vmatprep.subr.bf16.mxu0 0
    %2854 = vmatpush1.bf16.msra.mxu0 0
    %2855 = vmatprep.subr.bf16.mxu0 0
    %2856 = vmatpush1.bf16.msra.mxu0 0
    %2857 = vmatprep.subr.bf16.mxu0 0
    %2858 = vmatpush1.bf16.msra.mxu0 0
    %2859 = vmatprep.subr.bf16.mxu0 0
    %2860 = vmatpush1.bf16.msra.mxu0 0
    %2861 = vmatprep.subr.bf16.mxu0 0
    %2862 = vmatpush1.bf16.msra.mxu0 0
    %2863 = vmatprep.subr.bf16.mxu0 0
    %2864 = vmatpush1.bf16.msra.mxu0 0
    %2865 = vmatprep.subr.bf16.mxu0 0
    %2866 = vmatpush1.bf16.msra.mxu0 0
    %2867 = vmatprep.subr.bf16.mxu0 0
    %2868 = vmatpush1.bf16.msra.mxu0 0
    %2869 = vmatprep.subr.bf16.mxu0 0
    %2870 = vmatpush1.bf16.msra.mxu0 0
    %2871 = vmatprep.subr.bf16.mxu0 0
    %2872 = vmatpush1.bf16.msra.mxu0 0
    %2873 = vmatprep.subr.bf16.mxu0 0
    %2874 = vmatpush1.bf16.msra.mxu0 0
    %2875 = vmatprep.mubr.bf16.mxu0 0
    %2876 = vmatmul.mubr.bf16.gmra.mrb[0].mxu0 %v2745
    %v2877 = vpop.f32.mrb[0].mxu0
    %v2878 = vadd.f32 0.0, %v2877
    %v2879 = vpop.f32.mrb[0].mxu0
    %v2880 = vpop.f32.mrb[0].mxu0
    %v2881 = vadd.f32 0.0, %v2880
    %v2882 = vpop.f32.mrb[0].mxu0
    %2883 = vmatprep.mubr.bf16.mxu0 0
    %2884 = vmatmul.mubr.bf16.gmra.mrb[0].mxu0 %v2748
    %v2885 = vpop.f32.mrb[0].mxu0
    %v2886 = vadd.f32 0.0, %v2885
    %v2887 = vpop.f32.mrb[0].mxu0
    %v2888 = vpop.f32.mrb[0].mxu0
    %v2889 = vadd.f32 0.0, %v2888
    %v2890 = vpop.f32.mrb[0].mxu0
    %2891 = vmatprep.mubr.bf16.mxu0 0
    %2892 = vmatmul.mubr.bf16.gmra.mrb[0].mxu0 %v2751
    %v2893 = vpop.f32.mrb[0].mxu0
    %v2894 = vadd.f32 0.0, %v2893
    %v2895 = vpop.f32.mrb[0].mxu0
    %v2896 = vpop.f32.mrb[0].mxu0
    %v2897 = vadd.f32 0.0, %v2896
    %v2898 = vpop.f32.mrb[0].mxu0
    %2899 = vmatprep.mubr.bf16.mxu0 0
    %2900 = vmatmul.mubr.bf16.gmra.mrb[0].mxu0 %v2754
    %v2901 = vpop.f32.mrb[0].mxu0
    %v2902 = vadd.f32 0.0, %v2901
    %v2903 = vpop.f32.mrb[0].mxu0
    %v2904 = vpop.f32.mrb[0].mxu0
    %v2905 = vadd.f32 0.0, %v2904
    %v2906 = vpop.f32.mrb[0].mxu0
    %2907 = vmatprep.mubr.bf16.mxu0 0
    %2908 = vmatmul.mubr.bf16.gmra.mrb[0].mxu0 %v2757
    %v2909 = vpop.f32.mrb[0].mxu0
    %v2910 = vadd.f32 0.0, %v2909
    %v2911 = vpop.f32.mrb[0].mxu0
    %v2912 = vpop.f32.mrb[0].mxu0
    %v2913 = vadd.f32 0.0, %v2912
    %v2914 = vpop.f32.mrb[0].mxu0
    %2915 = vmatprep.mubr.bf16.mxu0 0
    %2916 = vmatmul.mubr.bf16.gmra.mrb[0].mxu0 %v2760
    %v2917 = vpop.f32.mrb[0].mxu0
    %v2918 = vadd.f32 0.0, %v2917
    %v2919 = vpop.f32.mrb[0].mxu0
    %v2920 = vpop.f32.mrb[0].mxu0
    %v2921 = vadd.f32 0.0, %v2920
    %v2922 = vpop.f32.mrb[0].mxu0
    %2923 = vmatprep.mubr.bf16.mxu0 0
    %2924 = vmatmul.mubr.bf16.gmra.mrb[0].mxu0 %v2763
    %v2925 = vpop.f32.mrb[0].mxu0
    %v2926 = vadd.f32 0.0, %v2925
    %v2927 = vpop.f32.mrb[0].mxu0
    %v2928 = vpop.f32.mrb[0].mxu0
    %v2929 = vadd.f32 0.0, %v2928
    %v2930 = vpop.f32.mrb[0].mxu0
    %2931 = vmatprep.mubr.bf16.mxu0 0
    %2932 = vmatmul.mubr.bf16.gmra.mrb[0].mxu0 %v2766
    %v2933 = vpop.f32.mrb[0].mxu0
    %v2934 = vadd.f32 0.0, %v2933
    %v2935 = vpop.f32.mrb[0].mxu0
    %v2936 = vpop.f32.mrb[0].mxu0
    %v2937 = vadd.f32 0.0, %v2936
    %v2938 = vpop.f32.mrb[0].mxu0
    %2939 = vmatprep.mubr.bf16.mxu0 0
    %2940 = vmatmul.mubr.bf16.gmra.mrb[0].mxu0 %v2769
    %v2941 = vpop.f32.mrb[0].mxu0
    %v2942 = vadd.f32 0.0, %v2941
    %v2943 = vpop.f32.mrb[0].mxu0
    %v2944 = vpop.f32.mrb[0].mxu0
    %v2945 = vadd.f32 0.0, %v2944
    %v2946 = vpop.f32.mrb[0].mxu0
    %2947 = vmatprep.mubr.bf16.mxu0 0
    %2948 = vmatmul.mubr.bf16.gmra.mrb[0].mxu0 %v2772
    %v2949 = vpop.f32.mrb[0].mxu0
    %v2950 = vadd.f32 0.0, %v2949
    %v2951 = vpop.f32.mrb[0].mxu0
    %v2952 = vpop.f32.mrb[0].mxu0
    %v2953 = vadd.f32 0.0, %v2952
    %v2954 = vpop.f32.mrb[0].mxu0
    %2955 = vmatprep.mubr.bf16.mxu0 0
    %2956 = vmatmul.mubr.bf16.gmra.mrb[0].mxu0 %v2775
    %v2957 = vpop.f32.mrb[0].mxu0
    %v2958 = vadd.f32 0.0, %v2957
    %v2959 = vpop.f32.mrb[0].mxu0
    %v2960 = vpop.f32.mrb[0].mxu0
    %v2961 = vadd.f32 0.0, %v2960
    %v2962 = vpop.f32.mrb[0].mxu0
    %2963 = vmatprep.mubr.bf16.mxu0 0
    %2964 = vmatmul.mubr.bf16.gmra.mrb[0].mxu0 %v2778
    %v2965 = vpop.f32.mrb[0].mxu0
    %v2966 = vadd.f32 0.0, %v2965
    %v2967 = vpop.f32.mrb[0].mxu0
    %v2968 = vpop.f32.mrb[0].mxu0
    %v2969 = vadd.f32 0.0, %v2968
    %v2970 = vpop.f32.mrb[0].mxu0
    %2971 = vmatprep.mubr.bf16.mxu0 0
    %2972 = vmatmul.mubr.bf16.gmra.mrb[0].mxu0 %v2781
    %v2973 = vpop.f32.mrb[0].mxu0
    %v2974 = vadd.f32 0.0, %v2973
    %v2975 = vpop.f32.mrb[0].mxu0
    %v2976 = vpop.f32.mrb[0].mxu0
    %v2977 = vadd.f32 0.0, %v2976
    %v2978 = vpop.f32.mrb[0].mxu0
    %2979 = vmatprep.mubr.bf16.mxu0 0
    %2980 = vmatmul.mubr.bf16.gmra.mrb[0].mxu0 %v2784
    %v2981 = vpop.f32.mrb[0].mxu0
    %v2982 = vadd.f32 0.0, %v2981
    %v2983 = vpop.f32.mrb[0].mxu0
    %v2984 = vpop.f32.mrb[0].mxu0
    %v2985 = vadd.f32 0.0, %v2984
    %v2986 = vpop.f32.mrb[0].mxu0
    %2987 = vmatprep.mubr.bf16.mxu0 0
    %2988 = vmatmul.mubr.bf16.gmra.mrb[0].mxu0 %v2787
    %v2989 = vpop.f32.mrb[0].mxu0
    %v2990 = vadd.f32 0.0, %v2989
    %v2991 = vpop.f32.mrb[0].mxu0
    %v2992 = vpop.f32.mrb[0].mxu0
    %v2993 = vadd.f32 0.0, %v2992
    %v2994 = vpop.f32.mrb[0].mxu0
    %2995 = vmatprep.mubr.bf16.mxu0 0
    %2996 = vmatmul.mubr.bf16.gmra.mrb[0].mxu0 %v2790
    %v2997 = vpop.f32.mrb[0].mxu0
    %v2998 = vadd.f32 0.0, %v2997
    %v2999 = vpop.f32.mrb[0].mxu0
    %v3000 = vpop.f32.mrb[0].mxu0
    %v3001 = vadd.f32 0.0, %v3000
    %v3002 = vpop.f32.mrb[0].mxu0
    %3003 = vmatprep.mubr.bf16.mxu0 0
    %3004 = vmatmul.mubr.bf16.gmra.mrb[0].mxu0 %v2793
    %v3005 = vpop.f32.mrb[0].mxu0
    %v3006 = vadd.f32 0.0, %v3005
    %v3007 = vpop.f32.mrb[0].mxu0
    %v3008 = vpop.f32.mrb[0].mxu0
    %v3009 = vadd.f32 0.0, %v3008
    %v3010 = vpop.f32.mrb[0].mxu0
    %3011 = vmatprep.mubr.bf16.mxu0 0
    %3012 = vmatmul.mubr.bf16.gmra.mrb[0].mxu0 %v2796
    %v3013 = vpop.f32.mrb[0].mxu0
    %v3014 = vadd.f32 0.0, %v3013
    %v3015 = vpop.f32.mrb[0].mxu0
    %v3016 = vpop.f32.mrb[0].mxu0
    %v3017 = vadd.f32 0.0, %v3016
    %v3018 = vpop.f32.mrb[0].mxu0
    %3019 = vmatprep.mubr.bf16.mxu0 0
    %3020 = vmatmul.mubr.bf16.gmra.mrb[0].mxu0 %v2799
    %v3021 = vpop.f32.mrb[0].mxu0
    %v3022 = vadd.f32 0.0, %v3021
    %v3023 = vpop.f32.mrb[0].mxu0
    %v3024 = vpop.f32.mrb[0].mxu0
    %v3025 = vadd.f32 0.0, %v3024
    %v3026 = vpop.f32.mrb[0].mxu0
    %3027 = vmatprep.mubr.bf16.mxu0 0
    %3028 = vmatmul.mubr.bf16.gmra.mrb[0].mxu0 %v2802
    %v3029 = vpop.f32.mrb[0].mxu0
    %v3030 = vadd.f32 0.0, %v3029
    %v3031 = vpop.f32.mrb[0].mxu0
    %v3032 = vpop.f32.mrb[0].mxu0
    %v3033 = vadd.f32 0.0, %v3032
    %v3034 = vpop.f32.mrb[0].mxu0
    %3035 = vmatprep.mubr.bf16.mxu0 0
    %3036 = vmatmul.mubr.bf16.gmra.mrb[0].mxu0 %v2805
    %v3037 = vpop.f32.mrb[0].mxu0
    %v3038 = vadd.f32 0.0, %v3037
    %v3039 = vpop.f32.mrb[0].mxu0
    %v3040 = vpop.f32.mrb[0].mxu0
    %v3041 = vadd.f32 0.0, %v3040
    %v3042 = vpop.f32.mrb[0].mxu0
    %3043 = vmatprep.mubr.bf16.mxu0 0
    %3044 = vmatmul.mubr.bf16.gmra.mrb[0].mxu0 %v2808
    %v3045 = vpop.f32.mrb[0].mxu0
    %v3046 = vadd.f32 0.0, %v3045
    %v3047 = vpop.f32.mrb[0].mxu0
    %v3048 = vpop.f32.mrb[0].mxu0
    %v3049 = vadd.f32 0.0, %v3048
    %v3050 = vpop.f32.mrb[0].mxu0
    %3051 = vmatprep.mubr.bf16.mxu0 0
    %3052 = vmatmul.mubr.bf16.gmra.mrb[0].mxu0 %v2811
    %v3053 = vpop.f32.mrb[0].mxu0
    %v3054 = vadd.f32 0.0, %v3053
    %v3055 = vpop.f32.mrb[0].mxu0
    %v3056 = vpop.f32.mrb[0].mxu0
    %v3057 = vadd.f32 0.0, %v3056
    %v3058 = vpop.f32.mrb[0].mxu0
    %3059 = vmatprep.mubr.bf16.mxu0 0
    %3060 = vmatmul.mubr.bf16.gmra.mrb[0].mxu0 %v2814
    %v3061 = vpop.f32.mrb[0].mxu0
    %v3062 = vadd.f32 0.0, %v3061
    %v3063 = vpop.f32.mrb[0].mxu0
    %v3064 = vpop.f32.mrb[0].mxu0
    %v3065 = vadd.f32 0.0, %v3064
    %v3066 = vpop.f32.mrb[0].mxu0
    %3067 = vmatprep.mubr.bf16.mxu0 0
    %3068 = vmatmul.mubr.bf16.gmra.mrb[0].mxu0 %v2817
    %v3069 = vpop.f32.mrb[0].mxu0
    %v3070 = vadd.f32 0.0, %v3069
    %v3071 = vpop.f32.mrb[0].mxu0
    %v3072 = vpop.f32.mrb[0].mxu0
    %v3073 = vadd.f32 0.0, %v3072
    %v3074 = vpop.f32.mrb[0].mxu0
    %3075 = vmatprep.mubr.bf16.mxu0 0
    %3076 = vmatmul.mubr.bf16.gmra.mrb[0].mxu0 %v2820
    %v3077 = vpop.f32.mrb[0].mxu0
    %v3078 = vadd.f32 0.0, %v3077
    %v3079 = vpop.f32.mrb[0].mxu0
    %v3080 = vpop.f32.mrb[0].mxu0
    %v3081 = vadd.f32 0.0, %v3080
    %v3082 = vpop.f32.mrb[0].mxu0
    %3083 = vmatprep.mubr.bf16.mxu0 0
    %3084 = vmatmul.mubr.bf16.gmra.mrb[0].mxu0 %v2823
    %v3085 = vpop.f32.mrb[0].mxu0
    %v3086 = vadd.f32 0.0, %v3085
    %v3087 = vpop.f32.mrb[0].mxu0
    %v3088 = vpop.f32.mrb[0].mxu0
    %v3089 = vadd.f32 0.0, %v3088
    %v3090 = vpop.f32.mrb[0].mxu0
    %3091 = vmatprep.mubr.bf16.mxu0 0
    %3092 = vmatmul.mubr.bf16.gmra.mrb[0].mxu0 %v2826
    %v3093 = vpop.f32.mrb[0].mxu0
    %v3094 = vadd.f32 0.0, %v3093
    %v3095 = vpop.f32.mrb[0].mxu0
    %v3096 = vpop.f32.mrb[0].mxu0
    %v3097 = vadd.f32 0.0, %v3096
    %v3098 = vpop.f32.mrb[0].mxu0
    %3099 = vmatprep.mubr.bf16.mxu0 0
    %3100 = vmatmul.mubr.bf16.gmra.mrb[0].mxu0 %v2829
    %v3101 = vpop.f32.mrb[0].mxu0
    %v3102 = vadd.f32 0.0, %v3101
    %v3103 = vpop.f32.mrb[0].mxu0
    %v3104 = vpop.f32.mrb[0].mxu0
    %v3105 = vadd.f32 0.0, %v3104
    %v3106 = vpop.f32.mrb[0].mxu0
    %3107 = vmatprep.mubr.bf16.mxu0 0
    %3108 = vmatmul.mubr.bf16.gmra.mrb[0].mxu0 %v2832
    %v3109 = vpop.f32.mrb[0].mxu0
    %v3110 = vadd.f32 0.0, %v3109
    %v3111 = vpop.f32.mrb[0].mxu0
    %v3112 = vpop.f32.mrb[0].mxu0
    %v3113 = vadd.f32 0.0, %v3112
    %v3114 = vpop.f32.mrb[0].mxu0
    %3115 = vmatprep.mubr.bf16.mxu0 0
    %3116 = vmatmul.mubr.bf16.gmra.mrb[0].mxu0 %v2835
    %v3117 = vpop.f32.mrb[0].mxu0
    %v3118 = vadd.f32 0.0, %v3117
    %v3119 = vpop.f32.mrb[0].mxu0
    %v3120 = vpop.f32.mrb[0].mxu0
    %v3121 = vadd.f32 0.0, %v3120
    %v3122 = vpop.f32.mrb[0].mxu0
    %3123 = vmatprep.mubr.bf16.mxu0 0
    %3124 = vmatmul.mubr.bf16.gmra.mrb[0].mxu0 %v2838
    %v3125 = vpop.f32.mrb[0].mxu0
    %v3126 = vadd.f32 0.0, %v3125
    %v3127 = vpop.f32.mrb[0].mxu0
    %v3128 = vpop.f32.mrb[0].mxu0
    %v3129 = vadd.f32 0.0, %v3128
    %v3130 = vpop.f32.mrb[0].mxu0
    %3131 = vdwg.mxu0
    %v3132 = vadd.f32 %v2582, %v2878
    %v3133 = vadd.f32 %v2583, %v2881
    %v3134 = vadd.f32 %v2584, %v2886
    %v3135 = vadd.f32 %v2585, %v2889
    %v3136 = vadd.f32 %v2586, %v2894
    %v3137 = vadd.f32 %v2587, %v2897
    %v3138 = vadd.f32 %v2588, %v2902
    %v3139 = vadd.f32 %v2589, %v2905
    %v3140 = vadd.f32 %v2590, %v2910
    %v3141 = vadd.f32 %v2591, %v2913
    %v3142 = vadd.f32 %v2592, %v2918
    %v3143 = vadd.f32 %v2593, %v2921
    %v3144 = vadd.f32 %v2594, %v2926
    %v3145 = vadd.f32 %v2595, %v2929
    %v3146 = vadd.f32 %v2596, %v2934
    %v3147 = vadd.f32 %v2597, %v2937
    %v3148 = vadd.f32 %v2598, %v2942
    %v3149 = vadd.f32 %v2599, %v2945
    %v3150 = vadd.f32 %v2600, %v2950
    %v3151 = vadd.f32 %v2601, %v2953
    %v3152 = vadd.f32 %v2602, %v2958
    %v3153 = vadd.f32 %v2603, %v2961
    %v3154 = vadd.f32 %v2604, %v2966
    %v3155 = vadd.f32 %v2605, %v2969
    %v3156 = vadd.f32 %v2606, %v2974
    %v3157 = vadd.f32 %v2607, %v2977
    %v3158 = vadd.f32 %v2608, %v2982
    %v3159 = vadd.f32 %v2609, %v2985
    %v3160 = vadd.f32 %v2610, %v2990
    %v3161 = vadd.f32 %v2611, %v2993
    %v3162 = vadd.f32 %v2612, %v2998
    %v3163 = vadd.f32 %v2613, %v3001
    %v3164 = vadd.f32 %v2614, %v3006
    %v3165 = vadd.f32 %v2615, %v3009
    %v3166 = vadd.f32 %v2616, %v3014
    %v3167 = vadd.f32 %v2617, %v3017
    %v3168 = vadd.f32 %v2618, %v3022
    %v3169 = vadd.f32 %v2619, %v3025
    %v3170 = vadd.f32 %v2620, %v3030
    %v3171 = vadd.f32 %v2621, %v3033
    %v3172 = vadd.f32 %v2622, %v3038
    %v3173 = vadd.f32 %v2623, %v3041
    %v3174 = vadd.f32 %v2624, %v3046
    %v3175 = vadd.f32 %v2625, %v3049
    %v3176 = vadd.f32 %v2626, %v3054
    %v3177 = vadd.f32 %v2627, %v3057
    %v3178 = vadd.f32 %v2628, %v3062
    %v3179 = vadd.f32 %v2629, %v3065
    %v3180 = vadd.f32 %v2630, %v3070
    %v3181 = vadd.f32 %v2631, %v3073
    %v3182 = vadd.f32 %v2632, %v3078
    %v3183 = vadd.f32 %v2633, %v3081
    %v3184 = vadd.f32 %v2634, %v3086
    %v3185 = vadd.f32 %v2635, %v3089
    %v3186 = vadd.f32 %v2636, %v3094
    %v3187 = vadd.f32 %v2637, %v3097
    %v3188 = vadd.f32 %v2638, %v3102
    %v3189 = vadd.f32 %v2639, %v3105
    %v3190 = vadd.f32 %v2640, %v3110
    %v3191 = vadd.f32 %v2641, %v3113
    %v3192 = vadd.f32 %v2642, %v3118
    %v3193 = vadd.f32 %v2643, %v3121
    %v3194 = vadd.f32 %v2644, %v3126
    %v3195 = vadd.f32 %v2645, %v3129
    %s3196 = scalar_lea.vmem %s0, 48
    %v3197 = vld [vmem:[%s3196] sm:$0xff]
    %v3198 = vld [vmem:[%s3196 + $0x8] sm:$0xff]
    %v3199 = vld [vmem:[%s3196 + $0x18] sm:$0xff]
    %v3200 = vld [vmem:[%s3196 + $0x20] sm:$0xff]
    %v3201 = vld [vmem:[%s3196 + $0x30] sm:$0xff]
    %v3202 = vld [vmem:[%s3196 + $0x38] sm:$0xff]
    %v3203 = vld [vmem:[%s3196 + $0x48] sm:$0xff]
    %v3204 = vld [vmem:[%s3196 + $0x50] sm:$0xff]
    %v3205 = vld [vmem:[%s3196 + $0x60] sm:$0xff]
    %v3206 = vld [vmem:[%s3196 + $0x68] sm:$0xff]
    %v3207 = vld [vmem:[%s3196 + $0x78] sm:$0xff]
    %v3208 = vld [vmem:[%s3196 + $0x80] sm:$0xff]
    %v3209 = vld [vmem:[%s3196 + $0x90] sm:$0xff]
    %v3210 = vld [vmem:[%s3196 + $0x98] sm:$0xff]
    %v3211 = vld [vmem:[%s3196 + $0xa8] sm:$0xff]
    %v3212 = vld [vmem:[%s3196 + $0xb0] sm:$0xff]
    %v3213 = vld [vmem:[%s3196 + $0xc0] sm:$0xff]
    %v3214 = vld [vmem:[%s3196 + $0xc8] sm:$0xff]
    %v3215 = vld [vmem:[%s3196 + $0xd8] sm:$0xff]
    %v3216 = vld [vmem:[%s3196 + $0xe0] sm:$0xff]
    %v3217 = vld [vmem:[%s3196 + $0xf0] sm:$0xff]
    %v3218 = vld [vmem:[%s3196 + $0xf8] sm:$0xff]
    %v3219 = vld [vmem:[%s3196 + $0x108] sm:$0xff]
    %v3220 = vld [vmem:[%s3196 + $0x110] sm:$0xff]
    %v3221 = vld [vmem:[%s3196 + $0x120] sm:$0xff]
    %v3222 = vld [vmem:[%s3196 + $0x128] sm:$0xff]
    %v3223 = vld [vmem:[%s3196 + $0x138] sm:$0xff]
    %v3224 = vld [vmem:[%s3196 + $0x140] sm:$0xff]
    %v3225 = vld [vmem:[%s3196 + $0x150] sm:$0xff]
    %v3226 = vld [vmem:[%s3196 + $0x158] sm:$0xff]
    %v3227 = vld [vmem:[%s3196 + $0x168] sm:$0xff]
    %v3228 = vld [vmem:[%s3196 + $0x170] sm:$0xff]
    %v3229 = vld [vmem:[%s3196 + $0x1b0] sm:$0xff]
    %v3230 = vld [vmem:[%s3196 + $0x1b8] sm:$0xff]
    %v3231 = vld [vmem:[%s3196 + $0x1c8] sm:$0xff]
    %v3232 = vld [vmem:[%s3196 + $0x1d0] sm:$0xff]
    %v3233 = vld [vmem:[%s3196 + $0x1e0] sm:$0xff]
    %v3234 = vld [vmem:[%s3196 + $0x1e8] sm:$0xff]
    %v3235 = vld [vmem:[%s3196 + $0x1f8] sm:$0xff]
    %v3236 = vld [vmem:[%s3196 + $0x200] sm:$0xff]
    %v3237 = vld [vmem:[%s3196 + $0x210] sm:$0xff]
    %v3238 = vld [vmem:[%s3196 + $0x218] sm:$0xff]
    %v3239 = vld [vmem:[%s3196 + $0x228] sm:$0xff]
    %v3240 = vld [vmem:[%s3196 + $0x230] sm:$0xff]
    %v3241 = vld [vmem:[%s3196 + $0x240] sm:$0xff]
    %v3242 = vld [vmem:[%s3196 + $0x248] sm:$0xff]
    %v3243 = vld [vmem:[%s3196 + $0x258] sm:$0xff]
    %v3244 = vld [vmem:[%s3196 + $0x260] sm:$0xff]
    %v3245 = vld [vmem:[%s3196 + $0x270] sm:$0xff]
    %v3246 = vld [vmem:[%s3196 + $0x278] sm:$0xff]
    %v3247 = vld [vmem:[%s3196 + $0x288] sm:$0xff]
    %v3248 = vld [vmem:[%s3196 + $0x290] sm:$0xff]
    %v3249 = vld [vmem:[%s3196 + $0x2a0] sm:$0xff]
    %v3250 = vld [vmem:[%s3196 + $0x2a8] sm:$0xff]
    %v3251 = vld [vmem:[%s3196 + $0x2b8] sm:$0xff]
    %v3252 = vld [vmem:[%s3196 + $0x2c0] sm:$0xff]
    %v3253 = vld [vmem:[%s3196 + $0x2d0] sm:$0xff]
    %v3254 = vld [vmem:[%s3196 + $0x2d8] sm:$0xff]
    %v3255 = vld [vmem:[%s3196 + $0x2e8] sm:$0xff]
    %v3256 = vld [vmem:[%s3196 + $0x2f0] sm:$0xff]
    %v3257 = vld [vmem:[%s3196 + $0x300] sm:$0xff]
    %v3258 = vld [vmem:[%s3196 + $0x308] sm:$0xff]
    %v3259 = vld [vmem:[%s3196 + $0x318] sm:$0xff]
    %v3260 = vld [vmem:[%s3196 + $0x320] sm:$0xff]
    %v3261 = vpack.c.bf16 %v3198, %v3197
    %v3262 = vpack.c.bf16 %v3200, %v3199
    %v3263 = vpack.c.bf16 %v3202, %v3201
    %v3264 = vpack.c.bf16 %v3204, %v3203
    %v3265 = vpack.c.bf16 %v3206, %v3205
    %v3266 = vpack.c.bf16 %v3208, %v3207
    %v3267 = vpack.c.bf16 %v3210, %v3209
    %v3268 = vpack.c.bf16 %v3212, %v3211
    %v3269 = vpack.c.bf16 %v3214, %v3213
    %v3270 = vpack.c.bf16 %v3216, %v3215
    %v3271 = vpack.c.bf16 %v3218, %v3217
    %v3272 = vpack.c.bf16 %v3220, %v3219
    %v3273 = vpack.c.bf16 %v3222, %v3221
    %v3274 = vpack.c.bf16 %v3224, %v3223
    %v3275 = vpack.c.bf16 %v3226, %v3225
    %v3276 = vpack.c.bf16 %v3228, %v3227
    %v3277 = vpack.c.bf16 %v3230, %v3229
    %v3278 = vpack.c.bf16 %v3232, %v3231
    %v3279 = vpack.c.bf16 %v3234, %v3233
    %v3280 = vpack.c.bf16 %v3236, %v3235
    %v3281 = vpack.c.bf16 %v3238, %v3237
    %v3282 = vpack.c.bf16 %v3240, %v3239
    %v3283 = vpack.c.bf16 %v3242, %v3241
    %v3284 = vpack.c.bf16 %v3244, %v3243
    %v3285 = vpack.c.bf16 %v3246, %v3245
    %v3286 = vpack.c.bf16 %v3248, %v3247
    %v3287 = vpack.c.bf16 %v3250, %v3249
    %v3288 = vpack.c.bf16 %v3252, %v3251
    %v3289 = vpack.c.bf16 %v3254, %v3253
    %v3290 = vpack.c.bf16 %v3256, %v3255
    %v3291 = vpack.c.bf16 %v3258, %v3257
    %v3292 = vpack.c.bf16 %v3260, %v3259
    %s3293 = scalar_lea.vmem %s1, 12
    %v3294 = vld [vmem:[%s3293] sm:$0x3]
    %v3296 = vsel %vm217, %v3261, 0
    %v3299 = vsel %vm217, %v3262, 0
    %v3302 = vsel %vm217, %v3263, 0
    %v3305 = vsel %vm217, %v3264, 0
    %v3308 = vsel %vm217, %v3265, 0
    %v3311 = vsel %vm217, %v3266, 0
    %v3314 = vsel %vm217, %v3267, 0
    %v3317 = vsel %vm217, %v3268, 0
    %v3320 = vsel %vm217, %v3269, 0
    %v3323 = vsel %vm217, %v3270, 0
    %v3326 = vsel %vm217, %v3271, 0
    %v3329 = vsel %vm217, %v3272, 0
    %v3332 = vsel %vm217, %v3273, 0
    %v3335 = vsel %vm217, %v3274, 0
    %v3338 = vsel %vm217, %v3275, 0
    %v3341 = vsel %vm217, %v3276, 0
    %v3344 = vsel %vm217, %v3277, 0
    %v3347 = vsel %vm217, %v3278, 0
    %v3350 = vsel %vm217, %v3279, 0
    %v3353 = vsel %vm217, %v3280, 0
    %v3356 = vsel %vm217, %v3281, 0
    %v3359 = vsel %vm217, %v3282, 0
    %v3362 = vsel %vm217, %v3283, 0
    %v3365 = vsel %vm217, %v3284, 0
    %v3368 = vsel %vm217, %v3285, 0
    %v3371 = vsel %vm217, %v3286, 0
    %v3374 = vsel %vm217, %v3287, 0
    %v3377 = vsel %vm217, %v3288, 0
    %v3380 = vsel %vm217, %v3289, 0
    %v3383 = vsel %vm217, %v3290, 0
    %v3386 = vsel %vm217, %v3291, 0
    %v3389 = vsel %vm217, %v3292, 0
    %v3392 = vsel %vm314, %v3294, 0
    %3394 = vmatprep.subr.bf16.mxu0 0
    %3395 = vmatpush1.bf16.msra.mxu0 %v3392
    %3396 = vmatprep.subr.bf16.mxu0 0
    %3397 = vmatpush1.bf16.msra.mxu0 0
    %3398 = vmatprep.subr.bf16.mxu0 0
    %3399 = vmatpush1.bf16.msra.mxu0 0
    %3400 = vmatprep.subr.bf16.mxu0 0
    %3401 = vmatpush1.bf16.msra.mxu0 0
    %3402 = vmatprep.subr.bf16.mxu0 0
    %3403 = vmatpush1.bf16.msra.mxu0 0
    %3404 = vmatprep.subr.bf16.mxu0 0
    %3405 = vmatpush1.bf16.msra.mxu0 0
    %3406 = vmatprep.subr.bf16.mxu0 0
    %3407 = vmatpush1.bf16.msra.mxu0 0
    %3408 = vmatprep.subr.bf16.mxu0 0
    %3409 = vmatpush1.bf16.msra.mxu0 0
    %3410 = vmatprep.subr.bf16.mxu0 0
    %3411 = vmatpush1.bf16.msra.mxu0 0
    %3412 = vmatprep.subr.bf16.mxu0 0
    %3413 = vmatpush1.bf16.msra.mxu0 0
    %3414 = vmatprep.subr.bf16.mxu0 0
    %3415 = vmatpush1.bf16.msra.mxu0 0
    %3416 = vmatprep.subr.bf16.mxu0 0
    %3417 = vmatpush1.bf16.msra.mxu0 0
    %3418 = vmatprep.subr.bf16.mxu0 0
    %3419 = vmatpush1.bf16.msra.mxu0 0
    %3420 = vmatprep.subr.bf16.mxu0 0
    %3421 = vmatpush1.bf16.msra.mxu0 0
    %3422 = vmatprep.subr.bf16.mxu0 0
    %3423 = vmatpush1.bf16.msra.mxu0 0
    %3424 = vmatprep.subr.bf16.mxu0 0
    %3425 = vmatpush1.bf16.msra.mxu0 0
    %3426 = vmatprep.mubr.bf16.mxu0 0
    %3427 = vmatmul.mubr.bf16.gmra.mrb[0].mxu0 %v3296
    %v3428 = vpop.f32.mrb[0].mxu0
    %v3429 = vadd.f32 0.0, %v3428
    %v3430 = vpop.f32.mrb[0].mxu0
    %v3431 = vpop.f32.mrb[0].mxu0
    %v3432 = vadd.f32 0.0, %v3431
    %v3433 = vpop.f32.mrb[0].mxu0
    %3434 = vmatprep.mubr.bf16.mxu0 0
    %3435 = vmatmul.mubr.bf16.gmra.mrb[0].mxu0 %v3299
    %v3436 = vpop.f32.mrb[0].mxu0
    %v3437 = vadd.f32 0.0, %v3436
    %v3438 = vpop.f32.mrb[0].mxu0
    %v3439 = vpop.f32.mrb[0].mxu0
    %v3440 = vadd.f32 0.0, %v3439
    %v3441 = vpop.f32.mrb[0].mxu0
    %3442 = vmatprep.mubr.bf16.mxu0 0
    %3443 = vmatmul.mubr.bf16.gmra.mrb[0].mxu0 %v3302
    %v3444 = vpop.f32.mrb[0].mxu0
    %v3445 = vadd.f32 0.0, %v3444
    %v3446 = vpop.f32.mrb[0].mxu0
    %v3447 = vpop.f32.mrb[0].mxu0
    %v3448 = vadd.f32 0.0, %v3447
    %v3449 = vpop.f32.mrb[0].mxu0
    %3450 = vmatprep.mubr.bf16.mxu0 0
    %3451 = vmatmul.mubr.bf16.gmra.mrb[0].mxu0 %v3305
    %v3452 = vpop.f32.mrb[0].mxu0
    %v3453 = vadd.f32 0.0, %v3452
    %v3454 = vpop.f32.mrb[0].mxu0
    %v3455 = vpop.f32.mrb[0].mxu0
    %v3456 = vadd.f32 0.0, %v3455
    %v3457 = vpop.f32.mrb[0].mxu0
    %3458 = vmatprep.mubr.bf16.mxu0 0
    %3459 = vmatmul.mubr.bf16.gmra.mrb[0].mxu0 %v3308
    %v3460 = vpop.f32.mrb[0].mxu0
    %v3461 = vadd.f32 0.0, %v3460
    %v3462 = vpop.f32.mrb[0].mxu0
    %v3463 = vpop.f32.mrb[0].mxu0
    %v3464 = vadd.f32 0.0, %v3463
    %v3465 = vpop.f32.mrb[0].mxu0
    %3466 = vmatprep.mubr.bf16.mxu0 0
    %3467 = vmatmul.mubr.bf16.gmra.mrb[0].mxu0 %v3311
    %v3468 = vpop.f32.mrb[0].mxu0
    %v3469 = vadd.f32 0.0, %v3468
    %v3470 = vpop.f32.mrb[0].mxu0
    %v3471 = vpop.f32.mrb[0].mxu0
    %v3472 = vadd.f32 0.0, %v3471
    %v3473 = vpop.f32.mrb[0].mxu0
    %3474 = vmatprep.mubr.bf16.mxu0 0
    %3475 = vmatmul.mubr.bf16.gmra.mrb[0].mxu0 %v3314
    %v3476 = vpop.f32.mrb[0].mxu0
    %v3477 = vadd.f32 0.0, %v3476
    %v3478 = vpop.f32.mrb[0].mxu0
    %v3479 = vpop.f32.mrb[0].mxu0
    %v3480 = vadd.f32 0.0, %v3479
    %v3481 = vpop.f32.mrb[0].mxu0
    %3482 = vmatprep.mubr.bf16.mxu0 0
    %3483 = vmatmul.mubr.bf16.gmra.mrb[0].mxu0 %v3317
    %v3484 = vpop.f32.mrb[0].mxu0
    %v3485 = vadd.f32 0.0, %v3484
    %v3486 = vpop.f32.mrb[0].mxu0
    %v3487 = vpop.f32.mrb[0].mxu0
    %v3488 = vadd.f32 0.0, %v3487
    %v3489 = vpop.f32.mrb[0].mxu0
    %3490 = vmatprep.mubr.bf16.mxu0 0
    %3491 = vmatmul.mubr.bf16.gmra.mrb[0].mxu0 %v3320
    %v3492 = vpop.f32.mrb[0].mxu0
    %v3493 = vadd.f32 0.0, %v3492
    %v3494 = vpop.f32.mrb[0].mxu0
    %v3495 = vpop.f32.mrb[0].mxu0
    %v3496 = vadd.f32 0.0, %v3495
    %v3497 = vpop.f32.mrb[0].mxu0
    %3498 = vmatprep.mubr.bf16.mxu0 0
    %3499 = vmatmul.mubr.bf16.gmra.mrb[0].mxu0 %v3323
    %v3500 = vpop.f32.mrb[0].mxu0
    %v3501 = vadd.f32 0.0, %v3500
    %v3502 = vpop.f32.mrb[0].mxu0
    %v3503 = vpop.f32.mrb[0].mxu0
    %v3504 = vadd.f32 0.0, %v3503
    %v3505 = vpop.f32.mrb[0].mxu0
    %3506 = vmatprep.mubr.bf16.mxu0 0
    %3507 = vmatmul.mubr.bf16.gmra.mrb[0].mxu0 %v3326
    %v3508 = vpop.f32.mrb[0].mxu0
    %v3509 = vadd.f32 0.0, %v3508
    %v3510 = vpop.f32.mrb[0].mxu0
    %v3511 = vpop.f32.mrb[0].mxu0
    %v3512 = vadd.f32 0.0, %v3511
    %v3513 = vpop.f32.mrb[0].mxu0
    %3514 = vmatprep.mubr.bf16.mxu0 0
    %3515 = vmatmul.mubr.bf16.gmra.mrb[0].mxu0 %v3329
    %v3516 = vpop.f32.mrb[0].mxu0
    %v3517 = vadd.f32 0.0, %v3516
    %v3518 = vpop.f32.mrb[0].mxu0
    %v3519 = vpop.f32.mrb[0].mxu0
    %v3520 = vadd.f32 0.0, %v3519
    %v3521 = vpop.f32.mrb[0].mxu0
    %3522 = vmatprep.mubr.bf16.mxu0 0
    %3523 = vmatmul.mubr.bf16.gmra.mrb[0].mxu0 %v3332
    %v3524 = vpop.f32.mrb[0].mxu0
    %v3525 = vadd.f32 0.0, %v3524
    %v3526 = vpop.f32.mrb[0].mxu0
    %v3527 = vpop.f32.mrb[0].mxu0
    %v3528 = vadd.f32 0.0, %v3527
    %v3529 = vpop.f32.mrb[0].mxu0
    %3530 = vmatprep.mubr.bf16.mxu0 0
    %3531 = vmatmul.mubr.bf16.gmra.mrb[0].mxu0 %v3335
    %v3532 = vpop.f32.mrb[0].mxu0
    %v3533 = vadd.f32 0.0, %v3532
    %v3534 = vpop.f32.mrb[0].mxu0
    %v3535 = vpop.f32.mrb[0].mxu0
    %v3536 = vadd.f32 0.0, %v3535
    %v3537 = vpop.f32.mrb[0].mxu0
    %3538 = vmatprep.mubr.bf16.mxu0 0
    %3539 = vmatmul.mubr.bf16.gmra.mrb[0].mxu0 %v3338
    %v3540 = vpop.f32.mrb[0].mxu0
    %v3541 = vadd.f32 0.0, %v3540
    %v3542 = vpop.f32.mrb[0].mxu0
    %v3543 = vpop.f32.mrb[0].mxu0
    %v3544 = vadd.f32 0.0, %v3543
    %v3545 = vpop.f32.mrb[0].mxu0
    %3546 = vmatprep.mubr.bf16.mxu0 0
    %3547 = vmatmul.mubr.bf16.gmra.mrb[0].mxu0 %v3341
    %v3548 = vpop.f32.mrb[0].mxu0
    %v3549 = vadd.f32 0.0, %v3548
    %v3550 = vpop.f32.mrb[0].mxu0
    %v3551 = vpop.f32.mrb[0].mxu0
    %v3552 = vadd.f32 0.0, %v3551
    %v3553 = vpop.f32.mrb[0].mxu0
    %3554 = vmatprep.mubr.bf16.mxu0 0
    %3555 = vmatmul.mubr.bf16.gmra.mrb[0].mxu0 %v3344
    %v3556 = vpop.f32.mrb[0].mxu0
    %v3557 = vadd.f32 0.0, %v3556
    %v3558 = vpop.f32.mrb[0].mxu0
    %v3559 = vpop.f32.mrb[0].mxu0
    %v3560 = vadd.f32 0.0, %v3559
    %v3561 = vpop.f32.mrb[0].mxu0
    %3562 = vmatprep.mubr.bf16.mxu0 0
    %3563 = vmatmul.mubr.bf16.gmra.mrb[0].mxu0 %v3347
    %v3564 = vpop.f32.mrb[0].mxu0
    %v3565 = vadd.f32 0.0, %v3564
    %v3566 = vpop.f32.mrb[0].mxu0
    %v3567 = vpop.f32.mrb[0].mxu0
    %v3568 = vadd.f32 0.0, %v3567
    %v3569 = vpop.f32.mrb[0].mxu0
    %3570 = vmatprep.mubr.bf16.mxu0 0
    %3571 = vmatmul.mubr.bf16.gmra.mrb[0].mxu0 %v3350
    %v3572 = vpop.f32.mrb[0].mxu0
    %v3573 = vadd.f32 0.0, %v3572
    %v3574 = vpop.f32.mrb[0].mxu0
    %v3575 = vpop.f32.mrb[0].mxu0
    %v3576 = vadd.f32 0.0, %v3575
    %v3577 = vpop.f32.mrb[0].mxu0
    %3578 = vmatprep.mubr.bf16.mxu0 0
    %3579 = vmatmul.mubr.bf16.gmra.mrb[0].mxu0 %v3353
    %v3580 = vpop.f32.mrb[0].mxu0
    %v3581 = vadd.f32 0.0, %v3580
    %v3582 = vpop.f32.mrb[0].mxu0
    %v3583 = vpop.f32.mrb[0].mxu0
    %v3584 = vadd.f32 0.0, %v3583
    %v3585 = vpop.f32.mrb[0].mxu0
    %3586 = vmatprep.mubr.bf16.mxu0 0
    %3587 = vmatmul.mubr.bf16.gmra.mrb[0].mxu0 %v3356
    %v3588 = vpop.f32.mrb[0].mxu0
    %v3589 = vadd.f32 0.0, %v3588
    %v3590 = vpop.f32.mrb[0].mxu0
    %v3591 = vpop.f32.mrb[0].mxu0
    %v3592 = vadd.f32 0.0, %v3591
    %v3593 = vpop.f32.mrb[0].mxu0
    %3594 = vmatprep.mubr.bf16.mxu0 0
    %3595 = vmatmul.mubr.bf16.gmra.mrb[0].mxu0 %v3359
    %v3596 = vpop.f32.mrb[0].mxu0
    %v3597 = vadd.f32 0.0, %v3596
    %v3598 = vpop.f32.mrb[0].mxu0
    %v3599 = vpop.f32.mrb[0].mxu0
    %v3600 = vadd.f32 0.0, %v3599
    %v3601 = vpop.f32.mrb[0].mxu0
    %3602 = vmatprep.mubr.bf16.mxu0 0
    %3603 = vmatmul.mubr.bf16.gmra.mrb[0].mxu0 %v3362
    %v3604 = vpop.f32.mrb[0].mxu0
    %v3605 = vadd.f32 0.0, %v3604
    %v3606 = vpop.f32.mrb[0].mxu0
    %v3607 = vpop.f32.mrb[0].mxu0
    %v3608 = vadd.f32 0.0, %v3607
    %v3609 = vpop.f32.mrb[0].mxu0
    %3610 = vmatprep.mubr.bf16.mxu0 0
    %3611 = vmatmul.mubr.bf16.gmra.mrb[0].mxu0 %v3365
    %v3612 = vpop.f32.mrb[0].mxu0
    %v3613 = vadd.f32 0.0, %v3612
    %v3614 = vpop.f32.mrb[0].mxu0
    %v3615 = vpop.f32.mrb[0].mxu0
    %v3616 = vadd.f32 0.0, %v3615
    %v3617 = vpop.f32.mrb[0].mxu0
    %3618 = vmatprep.mubr.bf16.mxu0 0
    %3619 = vmatmul.mubr.bf16.gmra.mrb[0].mxu0 %v3368
    %v3620 = vpop.f32.mrb[0].mxu0
    %v3621 = vadd.f32 0.0, %v3620
    %v3622 = vpop.f32.mrb[0].mxu0
    %v3623 = vpop.f32.mrb[0].mxu0
    %v3624 = vadd.f32 0.0, %v3623
    %v3625 = vpop.f32.mrb[0].mxu0
    %3626 = vmatprep.mubr.bf16.mxu0 0
    %3627 = vmatmul.mubr.bf16.gmra.mrb[0].mxu0 %v3371
    %v3628 = vpop.f32.mrb[0].mxu0
    %v3629 = vadd.f32 0.0, %v3628
    %v3630 = vpop.f32.mrb[0].mxu0
    %v3631 = vpop.f32.mrb[0].mxu0
    %v3632 = vadd.f32 0.0, %v3631
    %v3633 = vpop.f32.mrb[0].mxu0
    %3634 = vmatprep.mubr.bf16.mxu0 0
    %3635 = vmatmul.mubr.bf16.gmra.mrb[0].mxu0 %v3374
    %v3636 = vpop.f32.mrb[0].mxu0
    %v3637 = vadd.f32 0.0, %v3636
    %v3638 = vpop.f32.mrb[0].mxu0
    %v3639 = vpop.f32.mrb[0].mxu0
    %v3640 = vadd.f32 0.0, %v3639
    %v3641 = vpop.f32.mrb[0].mxu0
    %3642 = vmatprep.mubr.bf16.mxu0 0
    %3643 = vmatmul.mubr.bf16.gmra.mrb[0].mxu0 %v3377
    %v3644 = vpop.f32.mrb[0].mxu0
    %v3645 = vadd.f32 0.0, %v3644
    %v3646 = vpop.f32.mrb[0].mxu0
    %v3647 = vpop.f32.mrb[0].mxu0
    %v3648 = vadd.f32 0.0, %v3647
    %v3649 = vpop.f32.mrb[0].mxu0
    %3650 = vmatprep.mubr.bf16.mxu0 0
    %3651 = vmatmul.mubr.bf16.gmra.mrb[0].mxu0 %v3380
    %v3652 = vpop.f32.mrb[0].mxu0
    %v3653 = vadd.f32 0.0, %v3652
    %v3654 = vpop.f32.mrb[0].mxu0
    %v3655 = vpop.f32.mrb[0].mxu0
    %v3656 = vadd.f32 0.0, %v3655
    %v3657 = vpop.f32.mrb[0].mxu0
    %3658 = vmatprep.mubr.bf16.mxu0 0
    %3659 = vmatmul.mubr.bf16.gmra.mrb[0].mxu0 %v3383
    %v3660 = vpop.f32.mrb[0].mxu0
    %v3661 = vadd.f32 0.0, %v3660
    %v3662 = vpop.f32.mrb[0].mxu0
    %v3663 = vpop.f32.mrb[0].mxu0
    %v3664 = vadd.f32 0.0, %v3663
    %v3665 = vpop.f32.mrb[0].mxu0
    %3666 = vmatprep.mubr.bf16.mxu0 0
    %3667 = vmatmul.mubr.bf16.gmra.mrb[0].mxu0 %v3386
    %v3668 = vpop.f32.mrb[0].mxu0
    %v3669 = vadd.f32 0.0, %v3668
    %v3670 = vpop.f32.mrb[0].mxu0
    %v3671 = vpop.f32.mrb[0].mxu0
    %v3672 = vadd.f32 0.0, %v3671
    %v3673 = vpop.f32.mrb[0].mxu0
    %3674 = vmatprep.mubr.bf16.mxu0 0
    %3675 = vmatmul.mubr.bf16.gmra.mrb[0].mxu0 %v3389
    %v3676 = vpop.f32.mrb[0].mxu0
    %v3677 = vadd.f32 0.0, %v3676
    %v3678 = vpop.f32.mrb[0].mxu0
    %v3679 = vpop.f32.mrb[0].mxu0
    %v3680 = vadd.f32 0.0, %v3679
    %v3681 = vpop.f32.mrb[0].mxu0
    %3682 = vdwg.mxu0
    %v3683 = vadd.f32 %v3132, %v3429
    %v3684 = vadd.f32 %v3133, %v3432
    %v3685 = vadd.f32 %v3134, %v3437
    %v3686 = vadd.f32 %v3135, %v3440
    %v3687 = vadd.f32 %v3136, %v3445
    %v3688 = vadd.f32 %v3137, %v3448
    %v3689 = vadd.f32 %v3138, %v3453
    %v3690 = vadd.f32 %v3139, %v3456
    %v3691 = vadd.f32 %v3140, %v3461
    %v3692 = vadd.f32 %v3141, %v3464
    %v3693 = vadd.f32 %v3142, %v3469
    %v3694 = vadd.f32 %v3143, %v3472
    %v3695 = vadd.f32 %v3144, %v3477
    %v3696 = vadd.f32 %v3145, %v3480
    %v3697 = vadd.f32 %v3146, %v3485
    %v3698 = vadd.f32 %v3147, %v3488
    %v3699 = vadd.f32 %v3148, %v3493
    %v3700 = vadd.f32 %v3149, %v3496
    %v3701 = vadd.f32 %v3150, %v3501
    %v3702 = vadd.f32 %v3151, %v3504
    %v3703 = vadd.f32 %v3152, %v3509
    %v3704 = vadd.f32 %v3153, %v3512
    %v3705 = vadd.f32 %v3154, %v3517
    %v3706 = vadd.f32 %v3155, %v3520
    %v3707 = vadd.f32 %v3156, %v3525
    %v3708 = vadd.f32 %v3157, %v3528
    %v3709 = vadd.f32 %v3158, %v3533
    %v3710 = vadd.f32 %v3159, %v3536
    %v3711 = vadd.f32 %v3160, %v3541
    %v3712 = vadd.f32 %v3161, %v3544
    %v3713 = vadd.f32 %v3162, %v3549
    %v3714 = vadd.f32 %v3163, %v3552
    %v3715 = vadd.f32 %v3164, %v3557
    %v3716 = vadd.f32 %v3165, %v3560
    %v3717 = vadd.f32 %v3166, %v3565
    %v3718 = vadd.f32 %v3167, %v3568
    %v3719 = vadd.f32 %v3168, %v3573
    %v3720 = vadd.f32 %v3169, %v3576
    %v3721 = vadd.f32 %v3170, %v3581
    %v3722 = vadd.f32 %v3171, %v3584
    %v3723 = vadd.f32 %v3172, %v3589
    %v3724 = vadd.f32 %v3173, %v3592
    %v3725 = vadd.f32 %v3174, %v3597
    %v3726 = vadd.f32 %v3175, %v3600
    %v3727 = vadd.f32 %v3176, %v3605
    %v3728 = vadd.f32 %v3177, %v3608
    %v3729 = vadd.f32 %v3178, %v3613
    %v3730 = vadd.f32 %v3179, %v3616
    %v3731 = vadd.f32 %v3180, %v3621
    %v3732 = vadd.f32 %v3181, %v3624
    %v3733 = vadd.f32 %v3182, %v3629
    %v3734 = vadd.f32 %v3183, %v3632
    %v3735 = vadd.f32 %v3184, %v3637
    %v3736 = vadd.f32 %v3185, %v3640
    %v3737 = vadd.f32 %v3186, %v3645
    %v3738 = vadd.f32 %v3187, %v3648
    %v3739 = vadd.f32 %v3188, %v3653
    %v3740 = vadd.f32 %v3189, %v3656
    %v3741 = vadd.f32 %v3190, %v3661
    %v3742 = vadd.f32 %v3191, %v3664
    %v3743 = vadd.f32 %v3192, %v3669
    %v3744 = vadd.f32 %v3193, %v3672
    %v3745 = vadd.f32 %v3194, %v3677
    %v3746 = vadd.f32 %v3195, %v3680
    %v3747 = vld [vmem:[%s3196 + $0x1] sm:$0xff]
    %v3748 = vld [vmem:[%s3196 + $0x9] sm:$0xff]
    %v3749 = vld [vmem:[%s3196 + $0x19] sm:$0xff]
    %v3750 = vld [vmem:[%s3196 + $0x21] sm:$0xff]
    %v3751 = vld [vmem:[%s3196 + $0x31] sm:$0xff]
    %v3752 = vld [vmem:[%s3196 + $0x39] sm:$0xff]
    %v3753 = vld [vmem:[%s3196 + $0x49] sm:$0xff]
    %v3754 = vld [vmem:[%s3196 + $0x51] sm:$0xff]
    %v3755 = vld [vmem:[%s3196 + $0x61] sm:$0xff]
    %v3756 = vld [vmem:[%s3196 + $0x69] sm:$0xff]
    %v3757 = vld [vmem:[%s3196 + $0x79] sm:$0xff]
    %v3758 = vld [vmem:[%s3196 + $0x81] sm:$0xff]
    %v3759 = vld [vmem:[%s3196 + $0x91] sm:$0xff]
    %v3760 = vld [vmem:[%s3196 + $0x99] sm:$0xff]
    %v3761 = vld [vmem:[%s3196 + $0xa9] sm:$0xff]
    %v3762 = vld [vmem:[%s3196 + $0xb1] sm:$0xff]
    %v3763 = vld [vmem:[%s3196 + $0xc1] sm:$0xff]
    %v3764 = vld [vmem:[%s3196 + $0xc9] sm:$0xff]
    %v3765 = vld [vmem:[%s3196 + $0xd9] sm:$0xff]
    %v3766 = vld [vmem:[%s3196 + $0xe1] sm:$0xff]
    %v3767 = vld [vmem:[%s3196 + $0xf1] sm:$0xff]
    %v3768 = vld [vmem:[%s3196 + $0xf9] sm:$0xff]
    %v3769 = vld [vmem:[%s3196 + $0x109] sm:$0xff]
    %v3770 = vld [vmem:[%s3196 + $0x111] sm:$0xff]
    %v3771 = vld [vmem:[%s3196 + $0x121] sm:$0xff]
    %v3772 = vld [vmem:[%s3196 + $0x129] sm:$0xff]
    %v3773 = vld [vmem:[%s3196 + $0x139] sm:$0xff]
    %v3774 = vld [vmem:[%s3196 + $0x141] sm:$0xff]
    %v3775 = vld [vmem:[%s3196 + $0x151] sm:$0xff]
    %v3776 = vld [vmem:[%s3196 + $0x159] sm:$0xff]
    %v3777 = vld [vmem:[%s3196 + $0x169] sm:$0xff]
    %v3778 = vld [vmem:[%s3196 + $0x171] sm:$0xff]
    %v3779 = vld [vmem:[%s3196 + $0x1b1] sm:$0xff]
    %v3780 = vld [vmem:[%s3196 + $0x1b9] sm:$0xff]
    %v3781 = vld [vmem:[%s3196 + $0x1c9] sm:$0xff]
    %v3782 = vld [vmem:[%s3196 + $0x1d1] sm:$0xff]
    %v3783 = vld [vmem:[%s3196 + $0x1e1] sm:$0xff]
    %v3784 = vld [vmem:[%s3196 + $0x1e9] sm:$0xff]
    %v3785 = vld [vmem:[%s3196 + $0x1f9] sm:$0xff]
    %v3786 = vld [vmem:[%s3196 + $0x201] sm:$0xff]
    %v3787 = vld [vmem:[%s3196 + $0x211] sm:$0xff]
    %v3788 = vld [vmem:[%s3196 + $0x219] sm:$0xff]
    %v3789 = vld [vmem:[%s3196 + $0x229] sm:$0xff]
    %v3790 = vld [vmem:[%s3196 + $0x231] sm:$0xff]
    %v3791 = vld [vmem:[%s3196 + $0x241] sm:$0xff]
    %v3792 = vld [vmem:[%s3196 + $0x249] sm:$0xff]
    %v3793 = vld [vmem:[%s3196 + $0x259] sm:$0xff]
    %v3794 = vld [vmem:[%s3196 + $0x261] sm:$0xff]
    %v3795 = vld [vmem:[%s3196 + $0x271] sm:$0xff]
    %v3796 = vld [vmem:[%s3196 + $0x279] sm:$0xff]
    %v3797 = vld [vmem:[%s3196 + $0x289] sm:$0xff]
    %v3798 = vld [vmem:[%s3196 + $0x291] sm:$0xff]
    %v3799 = vld [vmem:[%s3196 + $0x2a1] sm:$0xff]
    %v3800 = vld [vmem:[%s3196 + $0x2a9] sm:$0xff]
    %v3801 = vld [vmem:[%s3196 + $0x2b9] sm:$0xff]
    %v3802 = vld [vmem:[%s3196 + $0x2c1] sm:$0xff]
    %v3803 = vld [vmem:[%s3196 + $0x2d1] sm:$0xff]
    %v3804 = vld [vmem:[%s3196 + $0x2d9] sm:$0xff]
    %v3805 = vld [vmem:[%s3196 + $0x2e9] sm:$0xff]
    %v3806 = vld [vmem:[%s3196 + $0x2f1] sm:$0xff]
    %v3807 = vld [vmem:[%s3196 + $0x301] sm:$0xff]
    %v3808 = vld [vmem:[%s3196 + $0x309] sm:$0xff]
    %v3809 = vld [vmem:[%s3196 + $0x319] sm:$0xff]
    %v3810 = vld [vmem:[%s3196 + $0x321] sm:$0xff]
    %v3811 = vpack.c.bf16 %v3748, %v3747
    %v3812 = vpack.c.bf16 %v3750, %v3749
    %v3813 = vpack.c.bf16 %v3752, %v3751
    %v3814 = vpack.c.bf16 %v3754, %v3753
    %v3815 = vpack.c.bf16 %v3756, %v3755
    %v3816 = vpack.c.bf16 %v3758, %v3757
    %v3817 = vpack.c.bf16 %v3760, %v3759
    %v3818 = vpack.c.bf16 %v3762, %v3761
    %v3819 = vpack.c.bf16 %v3764, %v3763
    %v3820 = vpack.c.bf16 %v3766, %v3765
    %v3821 = vpack.c.bf16 %v3768, %v3767
    %v3822 = vpack.c.bf16 %v3770, %v3769
    %v3823 = vpack.c.bf16 %v3772, %v3771
    %v3824 = vpack.c.bf16 %v3774, %v3773
    %v3825 = vpack.c.bf16 %v3776, %v3775
    %v3826 = vpack.c.bf16 %v3778, %v3777
    %v3827 = vpack.c.bf16 %v3780, %v3779
    %v3828 = vpack.c.bf16 %v3782, %v3781
    %v3829 = vpack.c.bf16 %v3784, %v3783
    %v3830 = vpack.c.bf16 %v3786, %v3785
    %v3831 = vpack.c.bf16 %v3788, %v3787
    %v3832 = vpack.c.bf16 %v3790, %v3789
    %v3833 = vpack.c.bf16 %v3792, %v3791
    %v3834 = vpack.c.bf16 %v3794, %v3793
    %v3835 = vpack.c.bf16 %v3796, %v3795
    %v3836 = vpack.c.bf16 %v3798, %v3797
    %v3837 = vpack.c.bf16 %v3800, %v3799
    %v3838 = vpack.c.bf16 %v3802, %v3801
    %v3839 = vpack.c.bf16 %v3804, %v3803
    %v3840 = vpack.c.bf16 %v3806, %v3805
    %v3841 = vpack.c.bf16 %v3808, %v3807
    %v3842 = vpack.c.bf16 %v3810, %v3809
    %s3843 = scalar_lea.vmem %s1, 14
    %v3844 = vld [vmem:[%s3843] sm:$0x3]
    %v3846 = vsel %vm217, %v3811, 0
    %v3849 = vsel %vm217, %v3812, 0
    %v3852 = vsel %vm217, %v3813, 0
    %v3855 = vsel %vm217, %v3814, 0
    %v3858 = vsel %vm217, %v3815, 0
    %v3861 = vsel %vm217, %v3816, 0
    %v3864 = vsel %vm217, %v3817, 0
    %v3867 = vsel %vm217, %v3818, 0
    %v3870 = vsel %vm217, %v3819, 0
    %v3873 = vsel %vm217, %v3820, 0
    %v3876 = vsel %vm217, %v3821, 0
    %v3879 = vsel %vm217, %v3822, 0
    %v3882 = vsel %vm217, %v3823, 0
    %v3885 = vsel %vm217, %v3824, 0
    %v3888 = vsel %vm217, %v3825, 0
    %v3891 = vsel %vm217, %v3826, 0
    %v3894 = vsel %vm217, %v3827, 0
    %v3897 = vsel %vm217, %v3828, 0
    %v3900 = vsel %vm217, %v3829, 0
    %v3903 = vsel %vm217, %v3830, 0
    %v3906 = vsel %vm217, %v3831, 0
    %v3909 = vsel %vm217, %v3832, 0
    %v3912 = vsel %vm217, %v3833, 0
    %v3915 = vsel %vm217, %v3834, 0
    %v3918 = vsel %vm217, %v3835, 0
    %v3921 = vsel %vm217, %v3836, 0
    %v3924 = vsel %vm217, %v3837, 0
    %v3927 = vsel %vm217, %v3838, 0
    %v3930 = vsel %vm217, %v3839, 0
    %v3933 = vsel %vm217, %v3840, 0
    %v3936 = vsel %vm217, %v3841, 0
    %v3939 = vsel %vm217, %v3842, 0
    %v3942 = vsel %vm314, %v3844, 0
    %3944 = vmatprep.subr.bf16.mxu0 0
    %3945 = vmatpush1.bf16.msra.mxu0 %v3942
    %3946 = vmatprep.subr.bf16.mxu0 0
    %3947 = vmatpush1.bf16.msra.mxu0 0
    %3948 = vmatprep.subr.bf16.mxu0 0
    %3949 = vmatpush1.bf16.msra.mxu0 0
    %3950 = vmatprep.subr.bf16.mxu0 0
    %3951 = vmatpush1.bf16.msra.mxu0 0
    %3952 = vmatprep.subr.bf16.mxu0 0
    %3953 = vmatpush1.bf16.msra.mxu0 0
    %3954 = vmatprep.subr.bf16.mxu0 0
    %3955 = vmatpush1.bf16.msra.mxu0 0
    %3956 = vmatprep.subr.bf16.mxu0 0
    %3957 = vmatpush1.bf16.msra.mxu0 0
    %3958 = vmatprep.subr.bf16.mxu0 0
    %3959 = vmatpush1.bf16.msra.mxu0 0
    %3960 = vmatprep.subr.bf16.mxu0 0
    %3961 = vmatpush1.bf16.msra.mxu0 0
    %3962 = vmatprep.subr.bf16.mxu0 0
    %3963 = vmatpush1.bf16.msra.mxu0 0
    %3964 = vmatprep.subr.bf16.mxu0 0
    %3965 = vmatpush1.bf16.msra.mxu0 0
    %3966 = vmatprep.subr.bf16.mxu0 0
    %3967 = vmatpush1.bf16.msra.mxu0 0
    %3968 = vmatprep.subr.bf16.mxu0 0
    %3969 = vmatpush1.bf16.msra.mxu0 0
    %3970 = vmatprep.subr.bf16.mxu0 0
    %3971 = vmatpush1.bf16.msra.mxu0 0
    %3972 = vmatprep.subr.bf16.mxu0 0
    %3973 = vmatpush1.bf16.msra.mxu0 0
    %3974 = vmatprep.subr.bf16.mxu0 0
    %3975 = vmatpush1.bf16.msra.mxu0 0
    %3976 = vmatprep.mubr.bf16.mxu0 0
    %3977 = vmatmul.mubr.bf16.gmra.mrb[0].mxu0 %v3846
    %v3978 = vpop.f32.mrb[0].mxu0
    %v3979 = vadd.f32 0.0, %v3978
    %v3980 = vpop.f32.mrb[0].mxu0
    %v3981 = vpop.f32.mrb[0].mxu0
    %v3982 = vadd.f32 0.0, %v3981
    %v3983 = vpop.f32.mrb[0].mxu0
    %3984 = vmatprep.mubr.bf16.mxu0 0
    %3985 = vmatmul.mubr.bf16.gmra.mrb[0].mxu0 %v3849
    %v3986 = vpop.f32.mrb[0].mxu0
    %v3987 = vadd.f32 0.0, %v3986
    %v3988 = vpop.f32.mrb[0].mxu0
    %v3989 = vpop.f32.mrb[0].mxu0
    %v3990 = vadd.f32 0.0, %v3989
    %v3991 = vpop.f32.mrb[0].mxu0
    %3992 = vmatprep.mubr.bf16.mxu0 0
    %3993 = vmatmul.mubr.bf16.gmra.mrb[0].mxu0 %v3852
    %v3994 = vpop.f32.mrb[0].mxu0
    %v3995 = vadd.f32 0.0, %v3994
    %v3996 = vpop.f32.mrb[0].mxu0
    %v3997 = vpop.f32.mrb[0].mxu0
    %v3998 = vadd.f32 0.0, %v3997
    %v3999 = vpop.f32.mrb[0].mxu0
    %4000 = vmatprep.mubr.bf16.mxu0 0
    %4001 = vmatmul.mubr.bf16.gmra.mrb[0].mxu0 %v3855
    %v4002 = vpop.f32.mrb[0].mxu0
    %v4003 = vadd.f32 0.0, %v4002
    %v4004 = vpop.f32.mrb[0].mxu0
    %v4005 = vpop.f32.mrb[0].mxu0
    %v4006 = vadd.f32 0.0, %v4005
    %v4007 = vpop.f32.mrb[0].mxu0
    %4008 = vmatprep.mubr.bf16.mxu0 0
    %4009 = vmatmul.mubr.bf16.gmra.mrb[0].mxu0 %v3858
    %v4010 = vpop.f32.mrb[0].mxu0
    %v4011 = vadd.f32 0.0, %v4010
    %v4012 = vpop.f32.mrb[0].mxu0
    %v4013 = vpop.f32.mrb[0].mxu0
    %v4014 = vadd.f32 0.0, %v4013
    %v4015 = vpop.f32.mrb[0].mxu0
    %4016 = vmatprep.mubr.bf16.mxu0 0
    %4017 = vmatmul.mubr.bf16.gmra.mrb[0].mxu0 %v3861
    %v4018 = vpop.f32.mrb[0].mxu0
    %v4019 = vadd.f32 0.0, %v4018
    %v4020 = vpop.f32.mrb[0].mxu0
    %v4021 = vpop.f32.mrb[0].mxu0
    %v4022 = vadd.f32 0.0, %v4021
    %v4023 = vpop.f32.mrb[0].mxu0
    %4024 = vmatprep.mubr.bf16.mxu0 0
    %4025 = vmatmul.mubr.bf16.gmra.mrb[0].mxu0 %v3864
    %v4026 = vpop.f32.mrb[0].mxu0
    %v4027 = vadd.f32 0.0, %v4026
    %v4028 = vpop.f32.mrb[0].mxu0
    %v4029 = vpop.f32.mrb[0].mxu0
    %v4030 = vadd.f32 0.0, %v4029
    %v4031 = vpop.f32.mrb[0].mxu0
    %4032 = vmatprep.mubr.bf16.mxu0 0
    %4033 = vmatmul.mubr.bf16.gmra.mrb[0].mxu0 %v3867
    %v4034 = vpop.f32.mrb[0].mxu0
    %v4035 = vadd.f32 0.0, %v4034
    %v4036 = vpop.f32.mrb[0].mxu0
    %v4037 = vpop.f32.mrb[0].mxu0
    %v4038 = vadd.f32 0.0, %v4037
    %v4039 = vpop.f32.mrb[0].mxu0
    %4040 = vmatprep.mubr.bf16.mxu0 0
    %4041 = vmatmul.mubr.bf16.gmra.mrb[0].mxu0 %v3870
    %v4042 = vpop.f32.mrb[0].mxu0
    %v4043 = vadd.f32 0.0, %v4042
    %v4044 = vpop.f32.mrb[0].mxu0
    %v4045 = vpop.f32.mrb[0].mxu0
    %v4046 = vadd.f32 0.0, %v4045
    %v4047 = vpop.f32.mrb[0].mxu0
    %4048 = vmatprep.mubr.bf16.mxu0 0
    %4049 = vmatmul.mubr.bf16.gmra.mrb[0].mxu0 %v3873
    %v4050 = vpop.f32.mrb[0].mxu0
    %v4051 = vadd.f32 0.0, %v4050
    %v4052 = vpop.f32.mrb[0].mxu0
    %v4053 = vpop.f32.mrb[0].mxu0
    %v4054 = vadd.f32 0.0, %v4053
    %v4055 = vpop.f32.mrb[0].mxu0
    %4056 = vmatprep.mubr.bf16.mxu0 0
    %4057 = vmatmul.mubr.bf16.gmra.mrb[0].mxu0 %v3876
    %v4058 = vpop.f32.mrb[0].mxu0
    %v4059 = vadd.f32 0.0, %v4058
    %v4060 = vpop.f32.mrb[0].mxu0
    %v4061 = vpop.f32.mrb[0].mxu0
    %v4062 = vadd.f32 0.0, %v4061
    %v4063 = vpop.f32.mrb[0].mxu0
    %4064 = vmatprep.mubr.bf16.mxu0 0
    %4065 = vmatmul.mubr.bf16.gmra.mrb[0].mxu0 %v3879
    %v4066 = vpop.f32.mrb[0].mxu0
    %v4067 = vadd.f32 0.0, %v4066
    %v4068 = vpop.f32.mrb[0].mxu0
    %v4069 = vpop.f32.mrb[0].mxu0
    %v4070 = vadd.f32 0.0, %v4069
    %v4071 = vpop.f32.mrb[0].mxu0
    %4072 = vmatprep.mubr.bf16.mxu0 0
    %4073 = vmatmul.mubr.bf16.gmra.mrb[0].mxu0 %v3882
    %v4074 = vpop.f32.mrb[0].mxu0
    %v4075 = vadd.f32 0.0, %v4074
    %v4076 = vpop.f32.mrb[0].mxu0
    %v4077 = vpop.f32.mrb[0].mxu0
    %v4078 = vadd.f32 0.0, %v4077
    %v4079 = vpop.f32.mrb[0].mxu0
    %4080 = vmatprep.mubr.bf16.mxu0 0
    %4081 = vmatmul.mubr.bf16.gmra.mrb[0].mxu0 %v3885
    %v4082 = vpop.f32.mrb[0].mxu0
    %v4083 = vadd.f32 0.0, %v4082
    %v4084 = vpop.f32.mrb[0].mxu0
    %v4085 = vpop.f32.mrb[0].mxu0
    %v4086 = vadd.f32 0.0, %v4085
    %v4087 = vpop.f32.mrb[0].mxu0
    %4088 = vmatprep.mubr.bf16.mxu0 0
    %4089 = vmatmul.mubr.bf16.gmra.mrb[0].mxu0 %v3888
    %v4090 = vpop.f32.mrb[0].mxu0
    %v4091 = vadd.f32 0.0, %v4090
    %v4092 = vpop.f32.mrb[0].mxu0
    %v4093 = vpop.f32.mrb[0].mxu0
    %v4094 = vadd.f32 0.0, %v4093
    %v4095 = vpop.f32.mrb[0].mxu0
    %4096 = vmatprep.mubr.bf16.mxu0 0
    %4097 = vmatmul.mubr.bf16.gmra.mrb[0].mxu0 %v3891
    %v4098 = vpop.f32.mrb[0].mxu0
    %v4099 = vadd.f32 0.0, %v4098
    %v4100 = vpop.f32.mrb[0].mxu0
    %v4101 = vpop.f32.mrb[0].mxu0
    %v4102 = vadd.f32 0.0, %v4101
    %v4103 = vpop.f32.mrb[0].mxu0
    %4104 = vmatprep.mubr.bf16.mxu0 0
    %4105 = vmatmul.mubr.bf16.gmra.mrb[0].mxu0 %v3894
    %v4106 = vpop.f32.mrb[0].mxu0
    %v4107 = vadd.f32 0.0, %v4106
    %v4108 = vpop.f32.mrb[0].mxu0
    %v4109 = vpop.f32.mrb[0].mxu0
    %v4110 = vadd.f32 0.0, %v4109
    %v4111 = vpop.f32.mrb[0].mxu0
    %4112 = vmatprep.mubr.bf16.mxu0 0
    %4113 = vmatmul.mubr.bf16.gmra.mrb[0].mxu0 %v3897
    %v4114 = vpop.f32.mrb[0].mxu0
    %v4115 = vadd.f32 0.0, %v4114
    %v4116 = vpop.f32.mrb[0].mxu0
    %v4117 = vpop.f32.mrb[0].mxu0
    %v4118 = vadd.f32 0.0, %v4117
    %v4119 = vpop.f32.mrb[0].mxu0
    %4120 = vmatprep.mubr.bf16.mxu0 0
    %4121 = vmatmul.mubr.bf16.gmra.mrb[0].mxu0 %v3900
    %v4122 = vpop.f32.mrb[0].mxu0
    %v4123 = vadd.f32 0.0, %v4122
    %v4124 = vpop.f32.mrb[0].mxu0
    %v4125 = vpop.f32.mrb[0].mxu0
    %v4126 = vadd.f32 0.0, %v4125
    %v4127 = vpop.f32.mrb[0].mxu0
    %4128 = vmatprep.mubr.bf16.mxu0 0
    %4129 = vmatmul.mubr.bf16.gmra.mrb[0].mxu0 %v3903
    %v4130 = vpop.f32.mrb[0].mxu0
    %v4131 = vadd.f32 0.0, %v4130
    %v4132 = vpop.f32.mrb[0].mxu0
    %v4133 = vpop.f32.mrb[0].mxu0
    %v4134 = vadd.f32 0.0, %v4133
    %v4135 = vpop.f32.mrb[0].mxu0
    %4136 = vmatprep.mubr.bf16.mxu0 0
    %4137 = vmatmul.mubr.bf16.gmra.mrb[0].mxu0 %v3906
    %v4138 = vpop.f32.mrb[0].mxu0
    %v4139 = vadd.f32 0.0, %v4138
    %v4140 = vpop.f32.mrb[0].mxu0
    %v4141 = vpop.f32.mrb[0].mxu0
    %v4142 = vadd.f32 0.0, %v4141
    %v4143 = vpop.f32.mrb[0].mxu0
    %4144 = vmatprep.mubr.bf16.mxu0 0
    %4145 = vmatmul.mubr.bf16.gmra.mrb[0].mxu0 %v3909
    %v4146 = vpop.f32.mrb[0].mxu0
    %v4147 = vadd.f32 0.0, %v4146
    %v4148 = vpop.f32.mrb[0].mxu0
    %v4149 = vpop.f32.mrb[0].mxu0
    %v4150 = vadd.f32 0.0, %v4149
    %v4151 = vpop.f32.mrb[0].mxu0
    %4152 = vmatprep.mubr.bf16.mxu0 0
    %4153 = vmatmul.mubr.bf16.gmra.mrb[0].mxu0 %v3912
    %v4154 = vpop.f32.mrb[0].mxu0
    %v4155 = vadd.f32 0.0, %v4154
    %v4156 = vpop.f32.mrb[0].mxu0
    %v4157 = vpop.f32.mrb[0].mxu0
    %v4158 = vadd.f32 0.0, %v4157
    %v4159 = vpop.f32.mrb[0].mxu0
    %4160 = vmatprep.mubr.bf16.mxu0 0
    %4161 = vmatmul.mubr.bf16.gmra.mrb[0].mxu0 %v3915
    %v4162 = vpop.f32.mrb[0].mxu0
    %v4163 = vadd.f32 0.0, %v4162
    %v4164 = vpop.f32.mrb[0].mxu0
    %v4165 = vpop.f32.mrb[0].mxu0
    %v4166 = vadd.f32 0.0, %v4165
    %v4167 = vpop.f32.mrb[0].mxu0
    %4168 = vmatprep.mubr.bf16.mxu0 0
    %4169 = vmatmul.mubr.bf16.gmra.mrb[0].mxu0 %v3918
    %v4170 = vpop.f32.mrb[0].mxu0
    %v4171 = vadd.f32 0.0, %v4170
    %v4172 = vpop.f32.mrb[0].mxu0
    %v4173 = vpop.f32.mrb[0].mxu0
    %v4174 = vadd.f32 0.0, %v4173
    %v4175 = vpop.f32.mrb[0].mxu0
    %4176 = vmatprep.mubr.bf16.mxu0 0
    %4177 = vmatmul.mubr.bf16.gmra.mrb[0].mxu0 %v3921
    %v4178 = vpop.f32.mrb[0].mxu0
    %v4179 = vadd.f32 0.0, %v4178
    %v4180 = vpop.f32.mrb[0].mxu0
    %v4181 = vpop.f32.mrb[0].mxu0
    %v4182 = vadd.f32 0.0, %v4181
    %v4183 = vpop.f32.mrb[0].mxu0
    %4184 = vmatprep.mubr.bf16.mxu0 0
    %4185 = vmatmul.mubr.bf16.gmra.mrb[0].mxu0 %v3924
    %v4186 = vpop.f32.mrb[0].mxu0
    %v4187 = vadd.f32 0.0, %v4186
    %v4188 = vpop.f32.mrb[0].mxu0
    %v4189 = vpop.f32.mrb[0].mxu0
    %v4190 = vadd.f32 0.0, %v4189
    %v4191 = vpop.f32.mrb[0].mxu0
    %4192 = vmatprep.mubr.bf16.mxu0 0
    %4193 = vmatmul.mubr.bf16.gmra.mrb[0].mxu0 %v3927
    %v4194 = vpop.f32.mrb[0].mxu0
    %v4195 = vadd.f32 0.0, %v4194
    %v4196 = vpop.f32.mrb[0].mxu0
    %v4197 = vpop.f32.mrb[0].mxu0
    %v4198 = vadd.f32 0.0, %v4197
    %v4199 = vpop.f32.mrb[0].mxu0
    %4200 = vmatprep.mubr.bf16.mxu0 0
    %4201 = vmatmul.mubr.bf16.gmra.mrb[0].mxu0 %v3930
    %v4202 = vpop.f32.mrb[0].mxu0
    %v4203 = vadd.f32 0.0, %v4202
    %v4204 = vpop.f32.mrb[0].mxu0
    %v4205 = vpop.f32.mrb[0].mxu0
    %v4206 = vadd.f32 0.0, %v4205
    %v4207 = vpop.f32.mrb[0].mxu0
    %4208 = vmatprep.mubr.bf16.mxu0 0
    %4209 = vmatmul.mubr.bf16.gmra.mrb[0].mxu0 %v3933
    %v4210 = vpop.f32.mrb[0].mxu0
    %v4211 = vadd.f32 0.0, %v4210
    %v4212 = vpop.f32.mrb[0].mxu0
    %v4213 = vpop.f32.mrb[0].mxu0
    %v4214 = vadd.f32 0.0, %v4213
    %v4215 = vpop.f32.mrb[0].mxu0
    %4216 = vmatprep.mubr.bf16.mxu0 0
    %4217 = vmatmul.mubr.bf16.gmra.mrb[0].mxu0 %v3936
    %v4218 = vpop.f32.mrb[0].mxu0
    %v4219 = vadd.f32 0.0, %v4218
    %v4220 = vpop.f32.mrb[0].mxu0
    %v4221 = vpop.f32.mrb[0].mxu0
    %v4222 = vadd.f32 0.0, %v4221
    %v4223 = vpop.f32.mrb[0].mxu0
    %4224 = vmatprep.mubr.bf16.mxu0 0
    %4225 = vmatmul.mubr.bf16.gmra.mrb[0].mxu0 %v3939
    %v4226 = vpop.f32.mrb[0].mxu0
    %v4227 = vadd.f32 0.0, %v4226
    %v4228 = vpop.f32.mrb[0].mxu0
    %v4229 = vpop.f32.mrb[0].mxu0
    %v4230 = vadd.f32 0.0, %v4229
    %v4231 = vpop.f32.mrb[0].mxu0
    %4232 = vdwg.mxu0
    %v4233 = vadd.f32 %v3683, %v3979
    %v4234 = vadd.f32 %v3684, %v3982
    %v4235 = vadd.f32 %v3685, %v3987
    %v4236 = vadd.f32 %v3686, %v3990
    %v4237 = vadd.f32 %v3687, %v3995
    %v4238 = vadd.f32 %v3688, %v3998
    %v4239 = vadd.f32 %v3689, %v4003
    %v4240 = vadd.f32 %v3690, %v4006
    %v4241 = vadd.f32 %v3691, %v4011
    %v4242 = vadd.f32 %v3692, %v4014
    %v4243 = vadd.f32 %v3693, %v4019
    %v4244 = vadd.f32 %v3694, %v4022
    %v4245 = vadd.f32 %v3695, %v4027
    %v4246 = vadd.f32 %v3696, %v4030
    %v4247 = vadd.f32 %v3697, %v4035
    %v4248 = vadd.f32 %v3698, %v4038
    %v4249 = vadd.f32 %v3699, %v4043
    %v4250 = vadd.f32 %v3700, %v4046
    %v4251 = vadd.f32 %v3701, %v4051
    %v4252 = vadd.f32 %v3702, %v4054
    %v4253 = vadd.f32 %v3703, %v4059
    %v4254 = vadd.f32 %v3704, %v4062
    %v4255 = vadd.f32 %v3705, %v4067
    %v4256 = vadd.f32 %v3706, %v4070
    %v4257 = vadd.f32 %v3707, %v4075
    %v4258 = vadd.f32 %v3708, %v4078
    %v4259 = vadd.f32 %v3709, %v4083
    %v4260 = vadd.f32 %v3710, %v4086
    %v4261 = vadd.f32 %v3711, %v4091
    %v4262 = vadd.f32 %v3712, %v4094
    %v4263 = vadd.f32 %v3713, %v4099
    %v4264 = vadd.f32 %v3714, %v4102
    %v4265 = vadd.f32 %v3715, %v4107
    %v4266 = vadd.f32 %v3716, %v4110
    %v4267 = vadd.f32 %v3717, %v4115
    %v4268 = vadd.f32 %v3718, %v4118
    %v4269 = vadd.f32 %v3719, %v4123
    %v4270 = vadd.f32 %v3720, %v4126
    %v4271 = vadd.f32 %v3721, %v4131
    %v4272 = vadd.f32 %v3722, %v4134
    %v4273 = vadd.f32 %v3723, %v4139
    %v4274 = vadd.f32 %v3724, %v4142
    %v4275 = vadd.f32 %v3725, %v4147
    %v4276 = vadd.f32 %v3726, %v4150
    %v4277 = vadd.f32 %v3727, %v4155
    %v4278 = vadd.f32 %v3728, %v4158
    %v4279 = vadd.f32 %v3729, %v4163
    %v4280 = vadd.f32 %v3730, %v4166
    %v4281 = vadd.f32 %v3731, %v4171
    %v4282 = vadd.f32 %v3732, %v4174
    %v4283 = vadd.f32 %v3733, %v4179
    %v4284 = vadd.f32 %v3734, %v4182
    %v4285 = vadd.f32 %v3735, %v4187
    %v4286 = vadd.f32 %v3736, %v4190
    %v4287 = vadd.f32 %v3737, %v4195
    %v4288 = vadd.f32 %v3738, %v4198
    %v4289 = vadd.f32 %v3739, %v4203
    %v4290 = vadd.f32 %v3740, %v4206
    %v4291 = vadd.f32 %v3741, %v4211
    %v4292 = vadd.f32 %v3742, %v4214
    %v4293 = vadd.f32 %v3743, %v4219
    %v4294 = vadd.f32 %v3744, %v4222
    %v4295 = vadd.f32 %v3745, %v4227
    %v4296 = vadd.f32 %v3746, %v4230
    %v4297 = vld [vmem:[%s3196 + $0x2] sm:$0xff]
    %v4298 = vld [vmem:[%s3196 + $0xa] sm:$0xff]
    %v4299 = vld [vmem:[%s3196 + $0x1a] sm:$0xff]
    %v4300 = vld [vmem:[%s3196 + $0x22] sm:$0xff]
    %v4301 = vld [vmem:[%s3196 + $0x32] sm:$0xff]
    %v4302 = vld [vmem:[%s3196 + $0x3a] sm:$0xff]
    %v4303 = vld [vmem:[%s3196 + $0x4a] sm:$0xff]
    %v4304 = vld [vmem:[%s3196 + $0x52] sm:$0xff]
    %v4305 = vld [vmem:[%s3196 + $0x62] sm:$0xff]
    %v4306 = vld [vmem:[%s3196 + $0x6a] sm:$0xff]
    %v4307 = vld [vmem:[%s3196 + $0x7a] sm:$0xff]
    %v4308 = vld [vmem:[%s3196 + $0x82] sm:$0xff]
    %v4309 = vld [vmem:[%s3196 + $0x92] sm:$0xff]
    %v4310 = vld [vmem:[%s3196 + $0x9a] sm:$0xff]
    %v4311 = vld [vmem:[%s3196 + $0xaa] sm:$0xff]
    %v4312 = vld [vmem:[%s3196 + $0xb2] sm:$0xff]
    %v4313 = vld [vmem:[%s3196 + $0xc2] sm:$0xff]
    %v4314 = vld [vmem:[%s3196 + $0xca] sm:$0xff]
    %v4315 = vld [vmem:[%s3196 + $0xda] sm:$0xff]
    %v4316 = vld [vmem:[%s3196 + $0xe2] sm:$0xff]
    %v4317 = vld [vmem:[%s3196 + $0xf2] sm:$0xff]
    %v4318 = vld [vmem:[%s3196 + $0xfa] sm:$0xff]
    %v4319 = vld [vmem:[%s3196 + $0x10a] sm:$0xff]
    %v4320 = vld [vmem:[%s3196 + $0x112] sm:$0xff]
    %v4321 = vld [vmem:[%s3196 + $0x122] sm:$0xff]
    %v4322 = vld [vmem:[%s3196 + $0x12a] sm:$0xff]
    %v4323 = vld [vmem:[%s3196 + $0x13a] sm:$0xff]
    %v4324 = vld [vmem:[%s3196 + $0x142] sm:$0xff]
    %v4325 = vld [vmem:[%s3196 + $0x152] sm:$0xff]
    %v4326 = vld [vmem:[%s3196 + $0x15a] sm:$0xff]
    %v4327 = vld [vmem:[%s3196 + $0x16a] sm:$0xff]
    %v4328 = vld [vmem:[%s3196 + $0x172] sm:$0xff]
    %v4329 = vld [vmem:[%s3196 + $0x1b2] sm:$0xff]
    %v4330 = vld [vmem:[%s3196 + $0x1ba] sm:$0xff]
    %v4331 = vld [vmem:[%s3196 + $0x1ca] sm:$0xff]
    %v4332 = vld [vmem:[%s3196 + $0x1d2] sm:$0xff]
    %v4333 = vld [vmem:[%s3196 + $0x1e2] sm:$0xff]
    %v4334 = vld [vmem:[%s3196 + $0x1ea] sm:$0xff]
    %v4335 = vld [vmem:[%s3196 + $0x1fa] sm:$0xff]
    %v4336 = vld [vmem:[%s3196 + $0x202] sm:$0xff]
    %v4337 = vld [vmem:[%s3196 + $0x212] sm:$0xff]
    %v4338 = vld [vmem:[%s3196 + $0x21a] sm:$0xff]
    %v4339 = vld [vmem:[%s3196 + $0x22a] sm:$0xff]
    %v4340 = vld [vmem:[%s3196 + $0x232] sm:$0xff]
    %v4341 = vld [vmem:[%s3196 + $0x242] sm:$0xff]
    %v4342 = vld [vmem:[%s3196 + $0x24a] sm:$0xff]
    %v4343 = vld [vmem:[%s3196 + $0x25a] sm:$0xff]
    %v4344 = vld [vmem:[%s3196 + $0x262] sm:$0xff]
    %v4345 = vld [vmem:[%s3196 + $0x272] sm:$0xff]
    %v4346 = vld [vmem:[%s3196 + $0x27a] sm:$0xff]
    %v4347 = vld [vmem:[%s3196 + $0x28a] sm:$0xff]
    %v4348 = vld [vmem:[%s3196 + $0x292] sm:$0xff]
    %v4349 = vld [vmem:[%s3196 + $0x2a2] sm:$0xff]
    %v4350 = vld [vmem:[%s3196 + $0x2aa] sm:$0xff]
    %v4351 = vld [vmem:[%s3196 + $0x2ba] sm:$0xff]
    %v4352 = vld [vmem:[%s3196 + $0x2c2] sm:$0xff]
    %v4353 = vld [vmem:[%s3196 + $0x2d2] sm:$0xff]
    %v4354 = vld [vmem:[%s3196 + $0x2da] sm:$0xff]
    %v4355 = vld [vmem:[%s3196 + $0x2ea] sm:$0xff]
    %v4356 = vld [vmem:[%s3196 + $0x2f2] sm:$0xff]
    %v4357 = vld [vmem:[%s3196 + $0x302] sm:$0xff]
    %v4358 = vld [vmem:[%s3196 + $0x30a] sm:$0xff]
    %v4359 = vld [vmem:[%s3196 + $0x31a] sm:$0xff]
    %v4360 = vld [vmem:[%s3196 + $0x322] sm:$0xff]
    %v4361 = vpack.c.bf16 %v4298, %v4297
    %v4362 = vpack.c.bf16 %v4300, %v4299
    %v4363 = vpack.c.bf16 %v4302, %v4301
    %v4364 = vpack.c.bf16 %v4304, %v4303
    %v4365 = vpack.c.bf16 %v4306, %v4305
    %v4366 = vpack.c.bf16 %v4308, %v4307
    %v4367 = vpack.c.bf16 %v4310, %v4309
    %v4368 = vpack.c.bf16 %v4312, %v4311
    %v4369 = vpack.c.bf16 %v4314, %v4313
    %v4370 = vpack.c.bf16 %v4316, %v4315
    %v4371 = vpack.c.bf16 %v4318, %v4317
    %v4372 = vpack.c.bf16 %v4320, %v4319
    %v4373 = vpack.c.bf16 %v4322, %v4321
    %v4374 = vpack.c.bf16 %v4324, %v4323
    %v4375 = vpack.c.bf16 %v4326, %v4325
    %v4376 = vpack.c.bf16 %v4328, %v4327
    %v4377 = vpack.c.bf16 %v4330, %v4329
    %v4378 = vpack.c.bf16 %v4332, %v4331
    %v4379 = vpack.c.bf16 %v4334, %v4333
    %v4380 = vpack.c.bf16 %v4336, %v4335
    %v4381 = vpack.c.bf16 %v4338, %v4337
    %v4382 = vpack.c.bf16 %v4340, %v4339
    %v4383 = vpack.c.bf16 %v4342, %v4341
    %v4384 = vpack.c.bf16 %v4344, %v4343
    %v4385 = vpack.c.bf16 %v4346, %v4345
    %v4386 = vpack.c.bf16 %v4348, %v4347
    %v4387 = vpack.c.bf16 %v4350, %v4349
    %v4388 = vpack.c.bf16 %v4352, %v4351
    %v4389 = vpack.c.bf16 %v4354, %v4353
    %v4390 = vpack.c.bf16 %v4356, %v4355
    %v4391 = vpack.c.bf16 %v4358, %v4357
    %v4392 = vpack.c.bf16 %v4360, %v4359
    %s4393 = scalar_lea.vmem %s1, 16
    %v4394 = vld [vmem:[%s4393] sm:$0x3]
    %v4396 = vsel %vm217, %v4361, 0
    %v4399 = vsel %vm217, %v4362, 0
    %v4402 = vsel %vm217, %v4363, 0
    %v4405 = vsel %vm217, %v4364, 0
    %v4408 = vsel %vm217, %v4365, 0
    %v4411 = vsel %vm217, %v4366, 0
    %v4414 = vsel %vm217, %v4367, 0
    %v4417 = vsel %vm217, %v4368, 0
    %v4420 = vsel %vm217, %v4369, 0
    %v4423 = vsel %vm217, %v4370, 0
    %v4426 = vsel %vm217, %v4371, 0
    %v4429 = vsel %vm217, %v4372, 0
    %v4432 = vsel %vm217, %v4373, 0
    %v4435 = vsel %vm217, %v4374, 0
    %v4438 = vsel %vm217, %v4375, 0
    %v4441 = vsel %vm217, %v4376, 0
    %v4444 = vsel %vm217, %v4377, 0
    %v4447 = vsel %vm217, %v4378, 0
    %v4450 = vsel %vm217, %v4379, 0
    %v4453 = vsel %vm217, %v4380, 0
    %v4456 = vsel %vm217, %v4381, 0
    %v4459 = vsel %vm217, %v4382, 0
    %v4462 = vsel %vm217, %v4383, 0
    %v4465 = vsel %vm217, %v4384, 0
    %v4468 = vsel %vm217, %v4385, 0
    %v4471 = vsel %vm217, %v4386, 0
    %v4474 = vsel %vm217, %v4387, 0
    %v4477 = vsel %vm217, %v4388, 0
    %v4480 = vsel %vm217, %v4389, 0
    %v4483 = vsel %vm217, %v4390, 0
    %v4486 = vsel %vm217, %v4391, 0
    %v4489 = vsel %vm217, %v4392, 0
    %v4492 = vsel %vm314, %v4394, 0
    %4494 = vmatprep.subr.bf16.mxu0 0
    %4495 = vmatpush1.bf16.msra.mxu0 %v4492
    %4496 = vmatprep.subr.bf16.mxu0 0
    %4497 = vmatpush1.bf16.msra.mxu0 0
    %4498 = vmatprep.subr.bf16.mxu0 0
    %4499 = vmatpush1.bf16.msra.mxu0 0
    %4500 = vmatprep.subr.bf16.mxu0 0
    %4501 = vmatpush1.bf16.msra.mxu0 0
    %4502 = vmatprep.subr.bf16.mxu0 0
    %4503 = vmatpush1.bf16.msra.mxu0 0
    %4504 = vmatprep.subr.bf16.mxu0 0
    %4505 = vmatpush1.bf16.msra.mxu0 0
    %4506 = vmatprep.subr.bf16.mxu0 0
    %4507 = vmatpush1.bf16.msra.mxu0 0
    %4508 = vmatprep.subr.bf16.mxu0 0
    %4509 = vmatpush1.bf16.msra.mxu0 0
    %4510 = vmatprep.subr.bf16.mxu0 0
    %4511 = vmatpush1.bf16.msra.mxu0 0
    %4512 = vmatprep.subr.bf16.mxu0 0
    %4513 = vmatpush1.bf16.msra.mxu0 0
    %4514 = vmatprep.subr.bf16.mxu0 0
    %4515 = vmatpush1.bf16.msra.mxu0 0
    %4516 = vmatprep.subr.bf16.mxu0 0
    %4517 = vmatpush1.bf16.msra.mxu0 0
    %4518 = vmatprep.subr.bf16.mxu0 0
    %4519 = vmatpush1.bf16.msra.mxu0 0
    %4520 = vmatprep.subr.bf16.mxu0 0
    %4521 = vmatpush1.bf16.msra.mxu0 0
    %4522 = vmatprep.subr.bf16.mxu0 0
    %4523 = vmatpush1.bf16.msra.mxu0 0
    %4524 = vmatprep.subr.bf16.mxu0 0
    %4525 = vmatpush1.bf16.msra.mxu0 0
    %4526 = vmatprep.mubr.bf16.mxu0 0
    %4527 = vmatmul.mubr.bf16.gmra.mrb[0].mxu0 %v4396
    %v4528 = vpop.f32.mrb[0].mxu0
    %v4529 = vadd.f32 0.0, %v4528
    %v4530 = vpop.f32.mrb[0].mxu0
    %v4531 = vpop.f32.mrb[0].mxu0
    %v4532 = vadd.f32 0.0, %v4531
    %v4533 = vpop.f32.mrb[0].mxu0
    %4534 = vmatprep.mubr.bf16.mxu0 0
    %4535 = vmatmul.mubr.bf16.gmra.mrb[0].mxu0 %v4399
    %v4536 = vpop.f32.mrb[0].mxu0
    %v4537 = vadd.f32 0.0, %v4536
    %v4538 = vpop.f32.mrb[0].mxu0
    %v4539 = vpop.f32.mrb[0].mxu0
    %v4540 = vadd.f32 0.0, %v4539
    %v4541 = vpop.f32.mrb[0].mxu0
    %4542 = vmatprep.mubr.bf16.mxu0 0
    %4543 = vmatmul.mubr.bf16.gmra.mrb[0].mxu0 %v4402
    %v4544 = vpop.f32.mrb[0].mxu0
    %v4545 = vadd.f32 0.0, %v4544
    %v4546 = vpop.f32.mrb[0].mxu0
    %v4547 = vpop.f32.mrb[0].mxu0
    %v4548 = vadd.f32 0.0, %v4547
    %v4549 = vpop.f32.mrb[0].mxu0
    %4550 = vmatprep.mubr.bf16.mxu0 0
    %4551 = vmatmul.mubr.bf16.gmra.mrb[0].mxu0 %v4405
    %v4552 = vpop.f32.mrb[0].mxu0
    %v4553 = vadd.f32 0.0, %v4552
    %v4554 = vpop.f32.mrb[0].mxu0
    %v4555 = vpop.f32.mrb[0].mxu0
    %v4556 = vadd.f32 0.0, %v4555
    %v4557 = vpop.f32.mrb[0].mxu0
    %4558 = vmatprep.mubr.bf16.mxu0 0
    %4559 = vmatmul.mubr.bf16.gmra.mrb[0].mxu0 %v4408
    %v4560 = vpop.f32.mrb[0].mxu0
    %v4561 = vadd.f32 0.0, %v4560
    %v4562 = vpop.f32.mrb[0].mxu0
    %v4563 = vpop.f32.mrb[0].mxu0
    %v4564 = vadd.f32 0.0, %v4563
    %v4565 = vpop.f32.mrb[0].mxu0
    %4566 = vmatprep.mubr.bf16.mxu0 0
    %4567 = vmatmul.mubr.bf16.gmra.mrb[0].mxu0 %v4411
    %v4568 = vpop.f32.mrb[0].mxu0
    %v4569 = vadd.f32 0.0, %v4568
    %v4570 = vpop.f32.mrb[0].mxu0
    %v4571 = vpop.f32.mrb[0].mxu0
    %v4572 = vadd.f32 0.0, %v4571
    %v4573 = vpop.f32.mrb[0].mxu0
    %4574 = vmatprep.mubr.bf16.mxu0 0
    %4575 = vmatmul.mubr.bf16.gmra.mrb[0].mxu0 %v4414
    %v4576 = vpop.f32.mrb[0].mxu0
    %v4577 = vadd.f32 0.0, %v4576
    %v4578 = vpop.f32.mrb[0].mxu0
    %v4579 = vpop.f32.mrb[0].mxu0
    %v4580 = vadd.f32 0.0, %v4579
    %v4581 = vpop.f32.mrb[0].mxu0
    %4582 = vmatprep.mubr.bf16.mxu0 0
    %4583 = vmatmul.mubr.bf16.gmra.mrb[0].mxu0 %v4417
    %v4584 = vpop.f32.mrb[0].mxu0
    %v4585 = vadd.f32 0.0, %v4584
    %v4586 = vpop.f32.mrb[0].mxu0
    %v4587 = vpop.f32.mrb[0].mxu0
    %v4588 = vadd.f32 0.0, %v4587
    %v4589 = vpop.f32.mrb[0].mxu0
    %4590 = vmatprep.mubr.bf16.mxu0 0
    %4591 = vmatmul.mubr.bf16.gmra.mrb[0].mxu0 %v4420
    %v4592 = vpop.f32.mrb[0].mxu0
    %v4593 = vadd.f32 0.0, %v4592
    %v4594 = vpop.f32.mrb[0].mxu0
    %v4595 = vpop.f32.mrb[0].mxu0
    %v4596 = vadd.f32 0.0, %v4595
    %v4597 = vpop.f32.mrb[0].mxu0
    %4598 = vmatprep.mubr.bf16.mxu0 0
    %4599 = vmatmul.mubr.bf16.gmra.mrb[0].mxu0 %v4423
    %v4600 = vpop.f32.mrb[0].mxu0
    %v4601 = vadd.f32 0.0, %v4600
    %v4602 = vpop.f32.mrb[0].mxu0
    %v4603 = vpop.f32.mrb[0].mxu0
    %v4604 = vadd.f32 0.0, %v4603
    %v4605 = vpop.f32.mrb[0].mxu0
    %4606 = vmatprep.mubr.bf16.mxu0 0
    %4607 = vmatmul.mubr.bf16.gmra.mrb[0].mxu0 %v4426
    %v4608 = vpop.f32.mrb[0].mxu0
    %v4609 = vadd.f32 0.0, %v4608
    %v4610 = vpop.f32.mrb[0].mxu0
    %v4611 = vpop.f32.mrb[0].mxu0
    %v4612 = vadd.f32 0.0, %v4611
    %v4613 = vpop.f32.mrb[0].mxu0
    %4614 = vmatprep.mubr.bf16.mxu0 0
    %4615 = vmatmul.mubr.bf16.gmra.mrb[0].mxu0 %v4429
    %v4616 = vpop.f32.mrb[0].mxu0
    %v4617 = vadd.f32 0.0, %v4616
    %v4618 = vpop.f32.mrb[0].mxu0
    %v4619 = vpop.f32.mrb[0].mxu0
    %v4620 = vadd.f32 0.0, %v4619
    %v4621 = vpop.f32.mrb[0].mxu0
    %4622 = vmatprep.mubr.bf16.mxu0 0
    %4623 = vmatmul.mubr.bf16.gmra.mrb[0].mxu0 %v4432
    %v4624 = vpop.f32.mrb[0].mxu0
    %v4625 = vadd.f32 0.0, %v4624
    %v4626 = vpop.f32.mrb[0].mxu0
    %v4627 = vpop.f32.mrb[0].mxu0
    %v4628 = vadd.f32 0.0, %v4627
    %v4629 = vpop.f32.mrb[0].mxu0
    %4630 = vmatprep.mubr.bf16.mxu0 0
    %4631 = vmatmul.mubr.bf16.gmra.mrb[0].mxu0 %v4435
    %v4632 = vpop.f32.mrb[0].mxu0
    %v4633 = vadd.f32 0.0, %v4632
    %v4634 = vpop.f32.mrb[0].mxu0
    %v4635 = vpop.f32.mrb[0].mxu0
    %v4636 = vadd.f32 0.0, %v4635
    %v4637 = vpop.f32.mrb[0].mxu0
    %4638 = vmatprep.mubr.bf16.mxu0 0
    %4639 = vmatmul.mubr.bf16.gmra.mrb[0].mxu0 %v4438
    %v4640 = vpop.f32.mrb[0].mxu0
    %v4641 = vadd.f32 0.0, %v4640
    %v4642 = vpop.f32.mrb[0].mxu0
    %v4643 = vpop.f32.mrb[0].mxu0
    %v4644 = vadd.f32 0.0, %v4643
    %v4645 = vpop.f32.mrb[0].mxu0
    %4646 = vmatprep.mubr.bf16.mxu0 0
    %4647 = vmatmul.mubr.bf16.gmra.mrb[0].mxu0 %v4441
    %v4648 = vpop.f32.mrb[0].mxu0
    %v4649 = vadd.f32 0.0, %v4648
    %v4650 = vpop.f32.mrb[0].mxu0
    %v4651 = vpop.f32.mrb[0].mxu0
    %v4652 = vadd.f32 0.0, %v4651
    %v4653 = vpop.f32.mrb[0].mxu0
    %4654 = vmatprep.mubr.bf16.mxu0 0
    %4655 = vmatmul.mubr.bf16.gmra.mrb[0].mxu0 %v4444
    %v4656 = vpop.f32.mrb[0].mxu0
    %v4657 = vadd.f32 0.0, %v4656
    %v4658 = vpop.f32.mrb[0].mxu0
    %v4659 = vpop.f32.mrb[0].mxu0
    %v4660 = vadd.f32 0.0, %v4659
    %v4661 = vpop.f32.mrb[0].mxu0
    %4662 = vmatprep.mubr.bf16.mxu0 0
    %4663 = vmatmul.mubr.bf16.gmra.mrb[0].mxu0 %v4447
    %v4664 = vpop.f32.mrb[0].mxu0
    %v4665 = vadd.f32 0.0, %v4664
    %v4666 = vpop.f32.mrb[0].mxu0
    %v4667 = vpop.f32.mrb[0].mxu0
    %v4668 = vadd.f32 0.0, %v4667
    %v4669 = vpop.f32.mrb[0].mxu0
    %4670 = vmatprep.mubr.bf16.mxu0 0
    %4671 = vmatmul.mubr.bf16.gmra.mrb[0].mxu0 %v4450
    %v4672 = vpop.f32.mrb[0].mxu0
    %v4673 = vadd.f32 0.0, %v4672
    %v4674 = vpop.f32.mrb[0].mxu0
    %v4675 = vpop.f32.mrb[0].mxu0
    %v4676 = vadd.f32 0.0, %v4675
    %v4677 = vpop.f32.mrb[0].mxu0
    %4678 = vmatprep.mubr.bf16.mxu0 0
    %4679 = vmatmul.mubr.bf16.gmra.mrb[0].mxu0 %v4453
    %v4680 = vpop.f32.mrb[0].mxu0
    %v4681 = vadd.f32 0.0, %v4680
    %v4682 = vpop.f32.mrb[0].mxu0
    %v4683 = vpop.f32.mrb[0].mxu0
    %v4684 = vadd.f32 0.0, %v4683
    %v4685 = vpop.f32.mrb[0].mxu0
    %4686 = vmatprep.mubr.bf16.mxu0 0
    %4687 = vmatmul.mubr.bf16.gmra.mrb[0].mxu0 %v4456
    %v4688 = vpop.f32.mrb[0].mxu0
    %v4689 = vadd.f32 0.0, %v4688
    %v4690 = vpop.f32.mrb[0].mxu0
    %v4691 = vpop.f32.mrb[0].mxu0
    %v4692 = vadd.f32 0.0, %v4691
    %v4693 = vpop.f32.mrb[0].mxu0
    %4694 = vmatprep.mubr.bf16.mxu0 0
    %4695 = vmatmul.mubr.bf16.gmra.mrb[0].mxu0 %v4459
    %v4696 = vpop.f32.mrb[0].mxu0
    %v4697 = vadd.f32 0.0, %v4696
    %v4698 = vpop.f32.mrb[0].mxu0
    %v4699 = vpop.f32.mrb[0].mxu0
    %v4700 = vadd.f32 0.0, %v4699
    %v4701 = vpop.f32.mrb[0].mxu0
    %4702 = vmatprep.mubr.bf16.mxu0 0
    %4703 = vmatmul.mubr.bf16.gmra.mrb[0].mxu0 %v4462
    %v4704 = vpop.f32.mrb[0].mxu0
    %v4705 = vadd.f32 0.0, %v4704
    %v4706 = vpop.f32.mrb[0].mxu0
    %v4707 = vpop.f32.mrb[0].mxu0
    %v4708 = vadd.f32 0.0, %v4707
    %v4709 = vpop.f32.mrb[0].mxu0
    %4710 = vmatprep.mubr.bf16.mxu0 0
    %4711 = vmatmul.mubr.bf16.gmra.mrb[0].mxu0 %v4465
    %v4712 = vpop.f32.mrb[0].mxu0
    %v4713 = vadd.f32 0.0, %v4712
    %v4714 = vpop.f32.mrb[0].mxu0
    %v4715 = vpop.f32.mrb[0].mxu0
    %v4716 = vadd.f32 0.0, %v4715
    %v4717 = vpop.f32.mrb[0].mxu0
    %4718 = vmatprep.mubr.bf16.mxu0 0
    %4719 = vmatmul.mubr.bf16.gmra.mrb[0].mxu0 %v4468
    %v4720 = vpop.f32.mrb[0].mxu0
    %v4721 = vadd.f32 0.0, %v4720
    %v4722 = vpop.f32.mrb[0].mxu0
    %v4723 = vpop.f32.mrb[0].mxu0
    %v4724 = vadd.f32 0.0, %v4723
    %v4725 = vpop.f32.mrb[0].mxu0
    %4726 = vmatprep.mubr.bf16.mxu0 0
    %4727 = vmatmul.mubr.bf16.gmra.mrb[0].mxu0 %v4471
    %v4728 = vpop.f32.mrb[0].mxu0
    %v4729 = vadd.f32 0.0, %v4728
    %v4730 = vpop.f32.mrb[0].mxu0
    %v4731 = vpop.f32.mrb[0].mxu0
    %v4732 = vadd.f32 0.0, %v4731
    %v4733 = vpop.f32.mrb[0].mxu0
    %4734 = vmatprep.mubr.bf16.mxu0 0
    %4735 = vmatmul.mubr.bf16.gmra.mrb[0].mxu0 %v4474
    %v4736 = vpop.f32.mrb[0].mxu0
    %v4737 = vadd.f32 0.0, %v4736
    %v4738 = vpop.f32.mrb[0].mxu0
    %v4739 = vpop.f32.mrb[0].mxu0
    %v4740 = vadd.f32 0.0, %v4739
    %v4741 = vpop.f32.mrb[0].mxu0
    %4742 = vmatprep.mubr.bf16.mxu0 0
    %4743 = vmatmul.mubr.bf16.gmra.mrb[0].mxu0 %v4477
    %v4744 = vpop.f32.mrb[0].mxu0
    %v4745 = vadd.f32 0.0, %v4744
    %v4746 = vpop.f32.mrb[0].mxu0
    %v4747 = vpop.f32.mrb[0].mxu0
    %v4748 = vadd.f32 0.0, %v4747
    %v4749 = vpop.f32.mrb[0].mxu0
    %4750 = vmatprep.mubr.bf16.mxu0 0
    %4751 = vmatmul.mubr.bf16.gmra.mrb[0].mxu0 %v4480
    %v4752 = vpop.f32.mrb[0].mxu0
    %v4753 = vadd.f32 0.0, %v4752
    %v4754 = vpop.f32.mrb[0].mxu0
    %v4755 = vpop.f32.mrb[0].mxu0
    %v4756 = vadd.f32 0.0, %v4755
    %v4757 = vpop.f32.mrb[0].mxu0
    %4758 = vmatprep.mubr.bf16.mxu0 0
    %4759 = vmatmul.mubr.bf16.gmra.mrb[0].mxu0 %v4483
    %v4760 = vpop.f32.mrb[0].mxu0
    %v4761 = vadd.f32 0.0, %v4760
    %v4762 = vpop.f32.mrb[0].mxu0
    %v4763 = vpop.f32.mrb[0].mxu0
    %v4764 = vadd.f32 0.0, %v4763
    %v4765 = vpop.f32.mrb[0].mxu0
    %4766 = vmatprep.mubr.bf16.mxu0 0
    %4767 = vmatmul.mubr.bf16.gmra.mrb[0].mxu0 %v4486
    %v4768 = vpop.f32.mrb[0].mxu0
    %v4769 = vadd.f32 0.0, %v4768
    %v4770 = vpop.f32.mrb[0].mxu0
    %v4771 = vpop.f32.mrb[0].mxu0
    %v4772 = vadd.f32 0.0, %v4771
    %v4773 = vpop.f32.mrb[0].mxu0
    %4774 = vmatprep.mubr.bf16.mxu0 0
    %4775 = vmatmul.mubr.bf16.gmra.mrb[0].mxu0 %v4489
    %v4776 = vpop.f32.mrb[0].mxu0
    %v4777 = vadd.f32 0.0, %v4776
    %v4778 = vpop.f32.mrb[0].mxu0
    %v4779 = vpop.f32.mrb[0].mxu0
    %v4780 = vadd.f32 0.0, %v4779
    %v4781 = vpop.f32.mrb[0].mxu0
    %4782 = vdwg.mxu0
    %v4783 = vadd.f32 %v4233, %v4529
    %v4784 = vadd.f32 %v4234, %v4532
    %v4785 = vadd.f32 %v4235, %v4537
    %v4786 = vadd.f32 %v4236, %v4540
    %v4787 = vadd.f32 %v4237, %v4545
    %v4788 = vadd.f32 %v4238, %v4548
    %v4789 = vadd.f32 %v4239, %v4553
    %v4790 = vadd.f32 %v4240, %v4556
    %v4791 = vadd.f32 %v4241, %v4561
    %v4792 = vadd.f32 %v4242, %v4564
    %v4793 = vadd.f32 %v4243, %v4569
    %v4794 = vadd.f32 %v4244, %v4572
    %v4795 = vadd.f32 %v4245, %v4577
    %v4796 = vadd.f32 %v4246, %v4580
    %v4797 = vadd.f32 %v4247, %v4585
    %v4798 = vadd.f32 %v4248, %v4588
    %v4799 = vadd.f32 %v4249, %v4593
    %v4800 = vadd.f32 %v4250, %v4596
    %v4801 = vadd.f32 %v4251, %v4601
    %v4802 = vadd.f32 %v4252, %v4604
    %v4803 = vadd.f32 %v4253, %v4609
    %v4804 = vadd.f32 %v4254, %v4612
    %v4805 = vadd.f32 %v4255, %v4617
    %v4806 = vadd.f32 %v4256, %v4620
    %v4807 = vadd.f32 %v4257, %v4625
    %v4808 = vadd.f32 %v4258, %v4628
    %v4809 = vadd.f32 %v4259, %v4633
    %v4810 = vadd.f32 %v4260, %v4636
    %v4811 = vadd.f32 %v4261, %v4641
    %v4812 = vadd.f32 %v4262, %v4644
    %v4813 = vadd.f32 %v4263, %v4649
    %v4814 = vadd.f32 %v4264, %v4652
    %v4815 = vadd.f32 %v4265, %v4657
    %v4816 = vadd.f32 %v4266, %v4660
    %v4817 = vadd.f32 %v4267, %v4665
    %v4818 = vadd.f32 %v4268, %v4668
    %v4819 = vadd.f32 %v4269, %v4673
    %v4820 = vadd.f32 %v4270, %v4676
    %v4821 = vadd.f32 %v4271, %v4681
    %v4822 = vadd.f32 %v4272, %v4684
    %v4823 = vadd.f32 %v4273, %v4689
    %v4824 = vadd.f32 %v4274, %v4692
    %v4825 = vadd.f32 %v4275, %v4697
    %v4826 = vadd.f32 %v4276, %v4700
    %v4827 = vadd.f32 %v4277, %v4705
    %v4828 = vadd.f32 %v4278, %v4708
    %v4829 = vadd.f32 %v4279, %v4713
    %v4830 = vadd.f32 %v4280, %v4716
    %v4831 = vadd.f32 %v4281, %v4721
    %v4832 = vadd.f32 %v4282, %v4724
    %v4833 = vadd.f32 %v4283, %v4729
    %v4834 = vadd.f32 %v4284, %v4732
    %v4835 = vadd.f32 %v4285, %v4737
    %v4836 = vadd.f32 %v4286, %v4740
    %v4837 = vadd.f32 %v4287, %v4745
    %v4838 = vadd.f32 %v4288, %v4748
    %v4839 = vadd.f32 %v4289, %v4753
    %v4840 = vadd.f32 %v4290, %v4756
    %v4841 = vadd.f32 %v4291, %v4761
    %v4842 = vadd.f32 %v4292, %v4764
    %v4843 = vadd.f32 %v4293, %v4769
    %v4844 = vadd.f32 %v4294, %v4772
    %v4845 = vadd.f32 %v4295, %v4777
    %v4846 = vadd.f32 %v4296, %v4780
    %v4847 = vld [vmem:[%s2] sm:$0x1]
    %v4849 = vlaneseq
    %v4850 = vshrl.u32 %v4849, 7
    %v4851 = vsub.s32 0, %v4850
    %v4852 = vrot.slane %v4847, %v4851
    %v4854 = vadd.f32 %v4783, %v4852
    %v4855 = vadd.f32 %v4784, %v4852
    %v4856 = vadd.f32 %v4785, %v4852
    %v4857 = vadd.f32 %v4786, %v4852
    %v4858 = vadd.f32 %v4787, %v4852
    %v4859 = vadd.f32 %v4788, %v4852
    %v4860 = vadd.f32 %v4789, %v4852
    %v4861 = vadd.f32 %v4790, %v4852
    %v4862 = vadd.f32 %v4791, %v4852
    %v4863 = vadd.f32 %v4792, %v4852
    %v4864 = vadd.f32 %v4793, %v4852
    %v4865 = vadd.f32 %v4794, %v4852
    %v4866 = vadd.f32 %v4795, %v4852
    %v4867 = vadd.f32 %v4796, %v4852
    %v4868 = vadd.f32 %v4797, %v4852
    %v4869 = vadd.f32 %v4798, %v4852
    %v4870 = vadd.f32 %v4799, %v4852
    %v4871 = vadd.f32 %v4800, %v4852
    %v4872 = vadd.f32 %v4801, %v4852
    %v4873 = vadd.f32 %v4802, %v4852
    %v4874 = vadd.f32 %v4803, %v4852
    %v4875 = vadd.f32 %v4804, %v4852
    %v4876 = vadd.f32 %v4805, %v4852
    %v4877 = vadd.f32 %v4806, %v4852
    %v4878 = vadd.f32 %v4807, %v4852
    %v4879 = vadd.f32 %v4808, %v4852
    %v4880 = vadd.f32 %v4809, %v4852
    %v4881 = vadd.f32 %v4810, %v4852
    %v4882 = vadd.f32 %v4811, %v4852
    %v4883 = vadd.f32 %v4812, %v4852
    %v4884 = vadd.f32 %v4813, %v4852
    %v4885 = vadd.f32 %v4814, %v4852
    %v4886 = vadd.f32 %v4815, %v4852
    %v4887 = vadd.f32 %v4816, %v4852
    %v4888 = vadd.f32 %v4817, %v4852
    %v4889 = vadd.f32 %v4818, %v4852
    %v4890 = vadd.f32 %v4819, %v4852
    %v4891 = vadd.f32 %v4820, %v4852
    %v4892 = vadd.f32 %v4821, %v4852
    %v4893 = vadd.f32 %v4822, %v4852
    %v4894 = vadd.f32 %v4823, %v4852
    %v4895 = vadd.f32 %v4824, %v4852
    %v4896 = vadd.f32 %v4825, %v4852
    %v4897 = vadd.f32 %v4826, %v4852
    %v4898 = vadd.f32 %v4827, %v4852
    %v4899 = vadd.f32 %v4828, %v4852
    %v4900 = vadd.f32 %v4829, %v4852
    %v4901 = vadd.f32 %v4830, %v4852
    %v4902 = vadd.f32 %v4831, %v4852
    %v4903 = vadd.f32 %v4832, %v4852
    %v4904 = vadd.f32 %v4833, %v4852
    %v4905 = vadd.f32 %v4834, %v4852
    %v4906 = vadd.f32 %v4835, %v4852
    %v4907 = vadd.f32 %v4836, %v4852
    %v4908 = vadd.f32 %v4837, %v4852
    %v4909 = vadd.f32 %v4838, %v4852
    %v4910 = vadd.f32 %v4839, %v4852
    %v4911 = vadd.f32 %v4840, %v4852
    %v4912 = vadd.f32 %v4841, %v4852
    %v4913 = vadd.f32 %v4842, %v4852
    %v4914 = vadd.f32 %v4843, %v4852
    %v4915 = vadd.f32 %v4844, %v4852
    %v4916 = vadd.f32 %v4845, %v4852
    %v4917 = vadd.f32 %v4846, %v4852
    %v4918 = vmax.f32 %v4854, 0.0
    %v4919 = vmax.f32 %v4855, 0.0
    %v4920 = vmax.f32 %v4856, 0.0
    %v4921 = vmax.f32 %v4857, 0.0
    %v4922 = vmax.f32 %v4858, 0.0
    %v4923 = vmax.f32 %v4859, 0.0
    %v4924 = vmax.f32 %v4860, 0.0
    %v4925 = vmax.f32 %v4861, 0.0
    %v4926 = vmax.f32 %v4862, 0.0
    %v4927 = vmax.f32 %v4863, 0.0
    %v4928 = vmax.f32 %v4864, 0.0
    %v4929 = vmax.f32 %v4865, 0.0
    %v4930 = vmax.f32 %v4866, 0.0
    %v4931 = vmax.f32 %v4867, 0.0
    %v4932 = vmax.f32 %v4868, 0.0
    %v4933 = vmax.f32 %v4869, 0.0
    %v4934 = vmax.f32 %v4870, 0.0
    %v4935 = vmax.f32 %v4871, 0.0
    %v4936 = vmax.f32 %v4872, 0.0
    %v4937 = vmax.f32 %v4873, 0.0
    %v4938 = vmax.f32 %v4874, 0.0
    %v4939 = vmax.f32 %v4875, 0.0
    %v4940 = vmax.f32 %v4876, 0.0
    %v4941 = vmax.f32 %v4877, 0.0
    %v4942 = vmax.f32 %v4878, 0.0
    %v4943 = vmax.f32 %v4879, 0.0
    %v4944 = vmax.f32 %v4880, 0.0
    %v4945 = vmax.f32 %v4881, 0.0
    %v4946 = vmax.f32 %v4882, 0.0
    %v4947 = vmax.f32 %v4883, 0.0
    %v4948 = vmax.f32 %v4884, 0.0
    %v4949 = vmax.f32 %v4885, 0.0
    %v4950 = vmax.f32 %v4886, 0.0
    %v4951 = vmax.f32 %v4887, 0.0
    %v4952 = vmax.f32 %v4888, 0.0
    %v4953 = vmax.f32 %v4889, 0.0
    %v4954 = vmax.f32 %v4890, 0.0
    %v4955 = vmax.f32 %v4891, 0.0
    %v4956 = vmax.f32 %v4892, 0.0
    %v4957 = vmax.f32 %v4893, 0.0
    %v4958 = vmax.f32 %v4894, 0.0
    %v4959 = vmax.f32 %v4895, 0.0
    %v4960 = vmax.f32 %v4896, 0.0
    %v4961 = vmax.f32 %v4897, 0.0
    %v4962 = vmax.f32 %v4898, 0.0
    %v4963 = vmax.f32 %v4899, 0.0
    %v4964 = vmax.f32 %v4900, 0.0
    %v4965 = vmax.f32 %v4901, 0.0
    %v4966 = vmax.f32 %v4902, 0.0
    %v4967 = vmax.f32 %v4903, 0.0
    %v4968 = vmax.f32 %v4904, 0.0
    %v4969 = vmax.f32 %v4905, 0.0
    %v4970 = vmax.f32 %v4906, 0.0
    %v4971 = vmax.f32 %v4907, 0.0
    %v4972 = vmax.f32 %v4908, 0.0
    %v4973 = vmax.f32 %v4909, 0.0
    %v4974 = vmax.f32 %v4910, 0.0
    %v4975 = vmax.f32 %v4911, 0.0
    %v4976 = vmax.f32 %v4912, 0.0
    %v4977 = vmax.f32 %v4913, 0.0
    %v4978 = vmax.f32 %v4914, 0.0
    %v4979 = vmax.f32 %v4915, 0.0
    %v4980 = vmax.f32 %v4916, 0.0
    %v4981 = vmax.f32 %v4917, 0.0
    %vm4982 = vcmask 261120
    %v4983 = vsel %vm4982, %v4918, 0.0
    %v4984 = vsel %vm4982, %v4919, 0.0
    %v4985 = vadd.f32 %v4983, %v4984
    %v4986 = vsel %vm4982, %v4920, 0.0
    %v4987 = vadd.f32 %v4985, %v4986
    %v4988 = vsel %vm4982, %v4921, 0.0
    %v4989 = vadd.f32 %v4987, %v4988
    %v4990 = vsel %vm4982, %v4922, 0.0
    %v4991 = vadd.f32 %v4989, %v4990
    %v4992 = vsel %vm4982, %v4923, 0.0
    %v4993 = vadd.f32 %v4991, %v4992
    %v4994 = vsel %vm4982, %v4924, 0.0
    %v4995 = vadd.f32 %v4993, %v4994
    %v4996 = vsel %vm4982, %v4925, 0.0
    %v4997 = vadd.f32 %v4995, %v4996
    %v4998 = vsel %vm4982, %v4926, 0.0
    %v4999 = vadd.f32 %v4997, %v4998
    %v5000 = vsel %vm4982, %v4927, 0.0
    %v5001 = vadd.f32 %v4999, %v5000
    %v5002 = vsel %vm4982, %v4928, 0.0
    %v5003 = vadd.f32 %v5001, %v5002
    %v5004 = vsel %vm4982, %v4929, 0.0
    %v5005 = vadd.f32 %v5003, %v5004
    %v5006 = vsel %vm4982, %v4930, 0.0
    %v5007 = vadd.f32 %v5005, %v5006
    %v5008 = vsel %vm4982, %v4931, 0.0
    %v5009 = vadd.f32 %v5007, %v5008
    %v5010 = vsel %vm4982, %v4932, 0.0
    %v5011 = vadd.f32 %v5009, %v5010
    %v5012 = vsel %vm4982, %v4933, 0.0
    %v5013 = vadd.f32 %v5011, %v5012
    %v5014 = vsel %vm4982, %v4934, 0.0
    %v5015 = vadd.f32 %v5013, %v5014
    %v5016 = vsel %vm4982, %v4935, 0.0
    %v5017 = vadd.f32 %v5015, %v5016
    %v5018 = vsel %vm4982, %v4936, 0.0
    %v5019 = vadd.f32 %v5017, %v5018
    %v5020 = vsel %vm4982, %v4937, 0.0
    %v5021 = vadd.f32 %v5019, %v5020
    %v5022 = vsel %vm4982, %v4938, 0.0
    %v5023 = vadd.f32 %v5021, %v5022
    %v5024 = vsel %vm4982, %v4939, 0.0
    %v5025 = vadd.f32 %v5023, %v5024
    %v5026 = vsel %vm4982, %v4940, 0.0
    %v5027 = vadd.f32 %v5025, %v5026
    %v5028 = vsel %vm4982, %v4941, 0.0
    %v5029 = vadd.f32 %v5027, %v5028
    %v5030 = vsel %vm4982, %v4942, 0.0
    %v5031 = vadd.f32 %v5029, %v5030
    %v5032 = vsel %vm4982, %v4943, 0.0
    %v5033 = vadd.f32 %v5031, %v5032
    %v5034 = vsel %vm4982, %v4944, 0.0
    %v5035 = vadd.f32 %v5033, %v5034
    %v5036 = vsel %vm4982, %v4945, 0.0
    %v5037 = vadd.f32 %v5035, %v5036
    %v5038 = vsel %vm4982, %v4946, 0.0
    %v5039 = vadd.f32 %v5037, %v5038
    %v5040 = vsel %vm4982, %v4947, 0.0
    %v5041 = vadd.f32 %v5039, %v5040
    %v5042 = vsel %vm4982, %v4948, 0.0
    %v5043 = vadd.f32 %v5041, %v5042
    %v5044 = vsel %vm4982, %v4949, 0.0
    %v5045 = vadd.f32 %v5043, %v5044
    %v5046 = vrot.slane %v5045, 4
    %v5047 = vadd.f32 %v5045, %v5046
    %v5048 = vrot.slane %v5047, 2
    %v5049 = vadd.f32 %v5047, %v5048
    %v5050 = vrot.slane %v5049, 1
    %v5051 = vadd.f32 %v5049, %v5050
    %v5052 = vsel %vm4982, %v4950, 0.0
    %v5053 = vsel %vm4982, %v4951, 0.0
    %v5054 = vadd.f32 %v5052, %v5053
    %v5055 = vsel %vm4982, %v4952, 0.0
    %v5056 = vadd.f32 %v5054, %v5055
    %v5057 = vsel %vm4982, %v4953, 0.0
    %v5058 = vadd.f32 %v5056, %v5057
    %v5059 = vsel %vm4982, %v4954, 0.0
    %v5060 = vadd.f32 %v5058, %v5059
    %v5061 = vsel %vm4982, %v4955, 0.0
    %v5062 = vadd.f32 %v5060, %v5061
    %v5063 = vsel %vm4982, %v4956, 0.0
    %v5064 = vadd.f32 %v5062, %v5063
    %v5065 = vsel %vm4982, %v4957, 0.0
    %v5066 = vadd.f32 %v5064, %v5065
    %v5067 = vsel %vm4982, %v4958, 0.0
    %v5068 = vadd.f32 %v5066, %v5067
    %v5069 = vsel %vm4982, %v4959, 0.0
    %v5070 = vadd.f32 %v5068, %v5069
    %v5071 = vsel %vm4982, %v4960, 0.0
    %v5072 = vadd.f32 %v5070, %v5071
    %v5073 = vsel %vm4982, %v4961, 0.0
    %v5074 = vadd.f32 %v5072, %v5073
    %v5075 = vsel %vm4982, %v4962, 0.0
    %v5076 = vadd.f32 %v5074, %v5075
    %v5077 = vsel %vm4982, %v4963, 0.0
    %v5078 = vadd.f32 %v5076, %v5077
    %v5079 = vsel %vm4982, %v4964, 0.0
    %v5080 = vadd.f32 %v5078, %v5079
    %v5081 = vsel %vm4982, %v4965, 0.0
    %v5082 = vadd.f32 %v5080, %v5081
    %v5083 = vsel %vm4982, %v4966, 0.0
    %v5084 = vadd.f32 %v5082, %v5083
    %v5085 = vsel %vm4982, %v4967, 0.0
    %v5086 = vadd.f32 %v5084, %v5085
    %v5087 = vsel %vm4982, %v4968, 0.0
    %v5088 = vadd.f32 %v5086, %v5087
    %v5089 = vsel %vm4982, %v4969, 0.0
    %v5090 = vadd.f32 %v5088, %v5089
    %v5091 = vsel %vm4982, %v4970, 0.0
    %v5092 = vadd.f32 %v5090, %v5091
    %v5093 = vsel %vm4982, %v4971, 0.0
    %v5094 = vadd.f32 %v5092, %v5093
    %v5095 = vsel %vm4982, %v4972, 0.0
    %v5096 = vadd.f32 %v5094, %v5095
    %v5097 = vsel %vm4982, %v4973, 0.0
    %v5098 = vadd.f32 %v5096, %v5097
    %v5099 = vsel %vm4982, %v4974, 0.0
    %v5100 = vadd.f32 %v5098, %v5099
    %v5101 = vsel %vm4982, %v4975, 0.0
    %v5102 = vadd.f32 %v5100, %v5101
    %v5103 = vsel %vm4982, %v4976, 0.0
    %v5104 = vadd.f32 %v5102, %v5103
    %v5105 = vsel %vm4982, %v4977, 0.0
    %v5106 = vadd.f32 %v5104, %v5105
    %v5107 = vsel %vm4982, %v4978, 0.0
    %v5108 = vadd.f32 %v5106, %v5107
    %v5109 = vsel %vm4982, %v4979, 0.0
    %v5110 = vadd.f32 %v5108, %v5109
    %v5111 = vsel %vm4982, %v4980, 0.0
    %v5112 = vadd.f32 %v5110, %v5111
    %v5113 = vsel %vm4982, %v4981, 0.0
    %v5114 = vadd.f32 %v5112, %v5113
    %v5115 = vrot.slane %v5114, 4
    %v5116 = vadd.f32 %v5114, %v5115
    %v5117 = vrot.slane %v5116, 2
    %v5118 = vadd.f32 %v5116, %v5117
    %v5119 = vrot.slane %v5118, 1
    %v5120 = vadd.f32 %v5118, %v5119
    %v5121 = vpack.c.bf16 %v5051, %v5051
    %v5122 = vpack.c.bf16 %v5120, %v5120
    %v5123 = vld [vmem:[%s3] sm:$0xf]
    %v5124 = vld [vmem:[%s3 + $0x4] sm:$0xf]
    %v5125 = vld [vmem:[%s3 + $0x8] sm:$0xf]
    %v5126 = vld [vmem:[%s3 + $0xc] sm:$0xf]
    %v5127 = vld [vmem:[%s4] sm:$0x1]
    %v5129 = vlaneseq
    %v5130 = vshrl.u32 %v5129, 7
    %v5131 = vsub.s32 0, %v5130
    %v5132 = vrot.slane %v5127, %v5131
    %v5136 = vunpack.c.l.b16 %v5121
    %v5137 = vunpack.c.l.b16 %v5122
    %vm5138 = vcmask 1041409
    %v5139 = vsel %vm5138, %v5137, %v5136
    %v5140 = vpack.c.b16 %v5139, %v5139
    %v5145 = vunpack.c.l.b16 %v5123
    %v5146 = vunpack.c.l.b16 %v5124
    %v5147 = vunpack.c.l.b16 %v5125
    %v5148 = vunpack.c.l.b16 %v5126
    %v5149 = vpack.c.b16 %v5146, %v5145
    %v5150 = vpack.c.b16 %v5148, %v5147
    %v5154 = vsel %vm4982, %v5140, 0
    %5156 = vmatprep.subr.bf16.mxu0 0
    %5157 = vmatpush1.bf16.msra.mxu0 %v5149
    %5158 = vmatprep.subr.bf16.mxu0 0
    %5159 = vmatpush1.bf16.msra.mxu0 %v5150
    %5160 = vmatprep.subr.bf16.mxu0 0
    %5161 = vmatpush1.bf16.msra.mxu0 0
    %5162 = vmatprep.subr.bf16.mxu0 0
    %5163 = vmatpush1.bf16.msra.mxu0 0
    %5164 = vmatprep.subr.bf16.mxu0 0
    %5165 = vmatpush1.bf16.msra.mxu0 0
    %5166 = vmatprep.subr.bf16.mxu0 0
    %5167 = vmatpush1.bf16.msra.mxu0 0
    %5168 = vmatprep.subr.bf16.mxu0 0
    %5169 = vmatpush1.bf16.msra.mxu0 0
    %5170 = vmatprep.subr.bf16.mxu0 0
    %5171 = vmatpush1.bf16.msra.mxu0 0
    %5172 = vmatprep.subr.bf16.mxu0 0
    %5173 = vmatpush1.bf16.msra.mxu0 0
    %5174 = vmatprep.subr.bf16.mxu0 0
    %5175 = vmatpush1.bf16.msra.mxu0 0
    %5176 = vmatprep.subr.bf16.mxu0 0
    %5177 = vmatpush1.bf16.msra.mxu0 0
    %5178 = vmatprep.subr.bf16.mxu0 0
    %5179 = vmatpush1.bf16.msra.mxu0 0
    %5180 = vmatprep.subr.bf16.mxu0 0
    %5181 = vmatpush1.bf16.msra.mxu0 0
    %5182 = vmatprep.subr.bf16.mxu0 0
    %5183 = vmatpush1.bf16.msra.mxu0 0
    %5184 = vmatprep.subr.bf16.mxu0 0
    %5185 = vmatpush1.bf16.msra.mxu0 0
    %5186 = vmatprep.subr.bf16.mxu0 0
    %5187 = vmatpush1.bf16.msra.mxu0 0
    %5188 = vmatprep.mubr.bf16.mxu0 0
    %5189 = vmatmul.mubr.bf16.gmra.mrb[0].mxu0 %v5154
    %v5190 = vpop.f32.mrb[0].mxu0
    %v5191 = vadd.f32 %v5132, %v5190
    %v5192 = vpop.f32.mrb[0].mxu0
    %v5193 = vpop.f32.mrb[0].mxu0
    %v5194 = vpop.f32.mrb[0].mxu0
    %5195 = vdwg.mxu0
    %5196 = vst [vmem:[#allocation2] sm:$0x3] %v5191
    // Predicated region
    $region22: #{classifier_forward.1} parent=1 // pred_check
      _
    $region23: #{classifier_forward.1} parent=1 // pred_check_branch
      %5198 = sbr.rel (0) target = $region25
    $region24: #{classifier_forward.1} parent=1 // pred_region
      %s5200 = ssub.s32 32, 32
      %5201 = vsyncadd [#allocation3], %s5200
      %s5203 = sshll.u32 [#allocation2], 4
      %s5204 = int_to_ptr.vmem [resolvable:$true] %s5203
      %5206 = dma.vmem_to_hbm [thread:$0]  %s5204, 32, %s5, [#allocation3]
    $region25: #{classifier_forward.1} parent=1 // pred_fallthru
      _
    // Predicated region
    $region26: #{classifier_forward.1} parent=1 // pred_check
      _
    $region27: #{classifier_forward.1} parent=1 // pred_check_branch
      %5208 = sbr.rel (0) target = $region29
    $region28: #{classifier_forward.1} parent=1 // pred_region
      %5209 = dma.done [#allocation3], 32
    $region29: #{classifier_forward.1} parent=1 // pred_fallthru
      _
    %5210 = vsyncpa [#allocation3], 1

</llo_original>
